<compile_context>
chip_gen: v7x
topology: tpu7x:2x2x1
jax: 0.10.0
libtpu: 0.0.40
codegen_flags: <defaults>
</compile_context>

<pallas_src>
import functools

import jax
import jax.numpy as jnp
from jax.experimental import pallas as pl
from jax.experimental.pallas import tpu as pltpu

BN_EPS = 1e-5
LANES = 128
MB = 1024 * 1024


# ------------------------------ small helpers ------------------------------

def _round_up(x, m):
    return ((x + m - 1) // m) * m


def _pad_last(x, to):
    pad = to - x.shape[-1]
    if pad == 0:
        return x
    return jnp.pad(x, [(0, 0)] * (x.ndim - 1) + [(0, pad)])


def _vmem_limit_bytes():
    """Generation-aware scoped-VMEM budget (headroom under physical VMEM):
    v5e / v6e: 128 MiB physical -> 80 MiB scoped; v7x: 64 MiB -> 44 MiB."""
    try:
        phys = int(getattr(pltpu.get_tpu_info(), "vmem_capacity_bytes", 0))
    except Exception:
        phys = 0
    return 80 * MB if phys >= 100 * MB else 44 * MB


def _pick_tile(total, step, cap, align=16, prefer_blocks=2):
    """Largest tile dividing `total`, a multiple of `step`, 16-row aligned
    (bf16 sublane packing) unless it is the whole axis, and <= cap; when
    possible leave >= 2 grid steps so both v7x TensorCores are used."""
    cands = [c for c in range(step, total + 1, step)
             if total % c == 0 and (c % align == 0 or c == total)]
    if not cands:
        return total
    fitting = [c for c in cands if c <= cap] or [min(cands)]
    best = max(fitting)
    if total // best < prefer_blocks:
        two = [c for c in fitting if total // c >= prefer_blocks]
        if two:
            best = max(two)
    return best


# -------------------- kernel 1: patch-embed + first IF ---------------------

def _pe_if_kernel(T, p_ref, w_ref, b_ref, o_ref):
    # bf16 x bf16 MXU matmul, f32 accumulation (native MXU dtype).
    emb = jnp.dot(p_ref[...], w_ref[...],
                  preferred_element_type=jnp.float32) + b_ref[...]
    v = jnp.zeros_like(emb)
    for t in range(T):                   # T is small & static: unrolled
        v = v + emb                      # same input every step (the T-repeat)
        fire = v >= 1.0
        o_ref[t] = fire.astype(o_ref.dtype)
        v = jnp.where(fire, 0.0, v)      # hard reset (v_reset = 0)


def patch_embed_if(patches, w, b, T, vmem_limit):
    """patches:(M,K) bf16, w:(K,Cp) bf16, b:(1,Cp) f32 -> spikes (T,M,Cp) bf16."""
    M, K = patches.shape
    Cp = w.shape[1]
    per_row = K * 2 * 2 + T * Cp * 2 * 2 + Cp * 4   # in/out double buffers + emb/v
    tm = _pick_tile(M, 16, min(2048, max(16, int(vmem_limit * 0.5) // per_row)))
    return pl.pallas_call(
        functools.partial(_pe_if_kernel, T),
        out_shape=jax.ShapeDtypeStruct((T, M, Cp), jnp.bfloat16),
        grid=(M // tm,),
        in_specs=[
            pl.BlockSpec((tm, K), lambda m: (m, 0)),
            pl.BlockSpec((K, Cp), lambda m: (0, 0)),
            pl.BlockSpec((1, Cp), lambda m: (0, 0)),
        ],
        out_specs=pl.BlockSpec((T, tm, Cp), lambda m: (0, m, 0)),
        compiler_params=pltpu.CompilerParams(
            dimension_semantics=("parallel",),
            vmem_limit_bytes=vmem_limit),
    )(patches, w, b)


# ----- kernel 2: fused ConvMixer layer -------------------------------------
#   Residual( depthwise KxK conv + BN -> IF ) -> 1x1 conv + BN -> IF
# all in one kernel; membranes carried in VMEM scratch across the T axis.

def _mixer_layer_kernel(h, w, pad, p0,
                        x_ref, m_ref, dww_ref, dwb_ref, pww_ref, pwb_ref,
                        o_ref, xp_ref, v1_ref, v2_ref):
    t = pl.program_id(1)
    bm, cp = x_ref.shape[1], x_ref.shape[2]
    ksz = 2 * pad + 1

    @pl.when(t == 0)
    def _():
        xp_ref[...] = jnp.zeros_like(xp_ref)    # zero halo once per row block
        v1_ref[...] = jnp.zeros_like(v1_ref)    # depthwise-IF membrane
        v2_ref[...] = jnp.zeros_like(v2_ref)    # pointwise-IF membrane

    x = x_ref[0]                                        # (bm, Cp) bf16 spikes {0,1}
    xp_ref[p0:p0 + bm, :] = x.astype(xp_ref.dtype)      # aligned interior store

    # ---- depthwise KxK conv + folded BN + IF -------------------------------
    # accumulator seeded with membrane + bias (no separate zeros/add pass);
    # taps are bf16 multiplies, partial sums upcast into the f32 accumulator.
    acc = v1_ref[...] + dwb_ref[...]
    for dy in range(-pad, pad + 1):
        for dx in range(-pad, pad + 1):
            ki = (dy + pad) * ksz + (dx + pad)
            s = dy * w + dx
            sh = xp_ref[p0 + s:p0 + s + bm, :]             # shifted flat window
            term = sh * dww_ref[:, ki * cp:(ki + 1) * cp]  # bf16 tap multiply
            if dy != 0 or dx != 0:
                term = term * m_ref[ki]                    # boundary mask (bm,1)
            acc = acc + term.astype(jnp.float32)

    fire1 = acc >= 1.0
    v1_ref[...] = jnp.where(fire1, 0.0, acc)               # hard reset
    r = fire1.astype(jnp.bfloat16) + x                     # residual, values {0,1,2}

    # ---- pointwise 1x1 conv + folded BN + IF (bf16 MXU, f32 accumulate) ----
    z = jnp.dot(r, pww_ref[...], preferred_element_type=jnp.float32) + pwb_ref[...]
    v2 = v2_ref[...] + z
    fire2 = v2 >= 1.0
    v2_ref[...] = jnp.where(fire2, 0.0, v2)
    o_ref[0] = fire2.astype(o_ref.dtype)                   # lane/sublane-dense store


def mixer_layer(x, tap_mask, dw_w, dw_b, pw_w, pw_b, *, h, w, pad, vmem_limit,
                shift_dtype=jnp.bfloat16):
    """x:(T,M,Cp) bf16 spikes (M = N*h*w, whole images per row block)."""
    T, M, Cp = x.shape
    hw = h * w
    ksz = 2 * pad + 1
    p0 = _round_up(pad * (w + 1), 16)          # halo rows each end (aligned store)
    item = 2 if shift_dtype == jnp.bfloat16 else 4

    per_row = Cp * (2 * 2 + 2 * 2 + 4 + 4 + item) + 16      # x/out dbl-buf, v1, v2, halo
    resident = Cp * Cp * 2 + ksz * ksz * Cp * 4              # pw weights + taps/biases
    cap = max(hw, (int(vmem_limit * 0.5) - resident) // per_row)
    bm = _pick_tile(M, hw, cap)

    est = bm * per_row + 2 * p0 * Cp * item + resident
    if est > vmem_limit:
        raise ValueError(
            f"mixer_layer tile bm={bm} needs ~{est // MB} MiB VMEM (> limit "
            f"{vmem_limit // MB} MiB); no suitable divisor of M={M} fits.")

    kern = functools.partial(_mixer_layer_kernel, h, w, pad, p0)
    return pl.pallas_call(
        kern,
        out_shape=jax.ShapeDtypeStruct((T, M, Cp), jnp.bfloat16),
        grid=(M // bm, T),
        in_specs=[
            pl.BlockSpec((1, bm, Cp), lambda m, t: (t, m, 0)),
            pl.BlockSpec((ksz * ksz, bm, 1), lambda m, t: (0, m, 0)),
            pl.BlockSpec((1, ksz * ksz * Cp), lambda m, t: (0, 0)),
            pl.BlockSpec((1, Cp), lambda m, t: (0, 0)),
            pl.BlockSpec((Cp, Cp), lambda m, t: (0, 0)),
            pl.BlockSpec((1, Cp), lambda m, t: (0, 0)),
        ],
        out_specs=pl.BlockSpec((1, bm, Cp), lambda m, t: (t, m, 0)),
        scratch_shapes=[
            pltpu.VMEM((bm + 2 * p0, Cp), shift_dtype),   # halo'ed input copy
            pltpu.VMEM((bm, Cp), jnp.float32),            # dw-IF membrane
            pltpu.VMEM((bm, Cp), jnp.float32),            # pw-IF membrane
        ],
        compiler_params=pltpu.CompilerParams(
            dimension_semantics=("parallel", "arbitrary"),
            vmem_limit_bytes=vmem_limit),
    )(x, tap_mask, dw_w, dw_b, pw_w, pw_b)


# ------------- kernel 3: avg-pool + mean over T + Linear (fused) -----------

def _head_kernel(inv_count, x_ref, w_ref, b_ref, o_ref, acc_ref):
    t = pl.program_id(1)

    @pl.when(t == 0)
    def _():
        acc_ref[...] = jnp.zeros_like(acc_ref)

    acc_ref[...] += jnp.sum(x_ref[0].astype(jnp.float32), axis=1)  # sum over HW

    @pl.when(t == pl.num_programs(1) - 1)
    def _():
        xm = acc_ref[...] * inv_count                              # mean T & HW
        o_ref[...] = jnp.dot(xm, w_ref[...],
                             preferred_element_type=jnp.float32) + b_ref[...]


def head(x, w, b, vmem_limit):
    """x:(T,N,HW,Cp) bf16, w:(Cp,NP) f32, b:(1,NP) f32 -> (N,NP) f32 logits."""
    T, N, HW, Cp = x.shape
    NP = w.shape[1]
    bn = _pick_tile(N, 1, 64, align=8)
    kern = functools.partial(_head_kernel, 1.0 / float(T * HW))
    return pl.pallas_call(
        kern,
        out_shape=jax.ShapeDtypeStruct((N, NP), jnp.float32),
        grid=(N // bn, T),
        in_specs=[
            pl.BlockSpec((1, bn, HW, Cp), lambda nb, t: (t, nb, 0, 0)),
            pl.BlockSpec((Cp, NP), lambda nb, t: (0, 0)),
            pl.BlockSpec((1, NP), lambda nb, t: (0, 0)),
        ],
        out_specs=pl.BlockSpec((bn, NP), lambda nb, t: (nb, 0)),
        scratch_shapes=[pltpu.VMEM((bn, Cp), jnp.float32)],
        compiler_params=pltpu.CompilerParams(
            dimension_semantics=("parallel", "arbitrary"),
            vmem_limit_bytes=vmem_limit),
    )(x, w, b)


# ------------------------ parameters & forward (glue) -----------------------

def init_params(key, dim, depth, ksize, patch, n_classes):
    Cp = _round_up(dim, LANES)
    NP = _round_up(n_classes, LANES)
    keys = jax.random.split(key, 2 + 2 * depth)
    ki = iter(keys)
    # BatchNorm folded in eval mode: gamma=1, beta=0, mean=0, var=1.
    bn_scale = (1.0 + BN_EPS) ** -0.5
    p = {}

    # patch embedding: Conv2d(3, dim, patch, stride=patch) + BN (folded)
    kw, kb = jax.random.split(next(ki))
    w = jax.random.normal(kw, (dim, 3, patch, patch), jnp.float32) / jnp.sqrt(3.0 * patch * patch)
    b = 0.1 * jax.random.normal(kb, (dim,), jnp.float32)
    pe_w = jnp.transpose(w, (2, 3, 1, 0)).reshape(patch * patch * 3, dim) * bn_scale
    p['pe_w'] = _pad_last(pe_w, Cp).astype(jnp.bfloat16)      # (K, Cp)  bf16 (MXU)
    p['pe_b'] = _pad_last((b * bn_scale)[None, :], Cp)        # (1, Cp)  f32 (pad lanes = 0)

    p['dw_w'], p['dw_b'], p['pw_w'], p['pw_b'] = [], [], [], []
    for _ in range(depth):
        # depthwise Conv2d(dim, dim, k, groups=dim, padding) + BN (folded)
        k1, k2 = jax.random.split(next(ki))
        wd = jax.random.normal(k1, (dim, 1, ksize, ksize), jnp.float32) / float(ksize)
        bd = 0.1 * jax.random.normal(k2, (dim,), jnp.float32)
        w_eff = jnp.transpose(wd[:, 0], (1, 2, 0)).reshape(ksize * ksize, dim) * bn_scale
        w_eff = _pad_last(w_eff, Cp)                                       # (K*K, Cp)
        # stored as (1, K*K*Cp): taps are extracted with lane-aligned slices.
        p['dw_w'].append(w_eff.reshape(1, ksize * ksize * Cp).astype(jnp.bfloat16))
        p['dw_b'].append(_pad_last((bd * bn_scale)[None, :], Cp))          # (1, Cp) f32
        # pointwise Conv2d(dim, dim, 1) + BN (folded), bf16 for the MXU
        k3, k4 = jax.random.split(next(ki))
        wp = jax.random.normal(k3, (dim, dim), jnp.float32) / jnp.sqrt(float(dim))
        bp = 0.1 * jax.random.normal(k4, (dim,), jnp.float32)
        pw = jnp.zeros((Cp, Cp), jnp.float32).at[:dim, :dim].set(wp.T * bn_scale)
        p['pw_w'].append(pw.astype(jnp.bfloat16))                          # (Cp, Cp) bf16
        p['pw_b'].append(_pad_last((bp * bn_scale)[None, :], Cp))          # (1, Cp)  f32

    k5, k6 = jax.random.split(next(ki))
    wf = jax.random.normal(k5, (dim, n_classes), jnp.float32) / jnp.sqrt(float(dim))
    bf = 0.1 * jax.random.normal(k6, (n_classes,), jnp.float32)
    p['fc_w'] = jnp.zeros((Cp, NP), jnp.float32).at[:dim, :n_classes].set(wf)
    p['fc_b'] = _pad_last(bf[None, :], NP)
    return p


def spiking_convmixer_forward(x_nchw, params, *, T, depth, ksize, pad, patch,
                              n_classes, f32_shift=False):
    assert ksize == 2 * pad + 1, "residual branch requires a 'same' depthwise conv"
    N, Cin, H, W = x_nchw.shape
    h, w = H // patch, W // patch
    hw = h * w
    M = N * hw
    Cp = params['pe_w'].shape[1]
    vmem = _vmem_limit_bytes()

    # glue: NCHW -> non-overlapping patch rows (M, K), bf16 for the MXU.
    xc = jnp.transpose(x_nchw, (0, 2, 3, 1))
    patches = (xc.reshape(N, h, patch, w, patch, Cin)
                 .transpose(0, 1, 3, 2, 4, 5)
                 .reshape(M, patch * patch * Cin)).astype(jnp.bfloat16)

    # patch-embed (folded BN) fused with the first IF node (no T-fold broadcast)
    s = patch_embed_if(patches, params['pe_w'], params['pe_b'], T, vmem)   # (T,M,Cp)

    # per-position boundary masks for the in-kernel depthwise conv: replaces
    # the old wrapper jnp.pad (one full HBM pass per layer removed).
    q = jnp.arange(M, dtype=jnp.int32) % hw
    yy, xx = q // w, q % w
    rows = []
    for dy in range(-pad, pad + 1):
        for dx in range(-pad, pad + 1):
            ok = (yy + dy >= 0) & (yy + dy < h) & (xx + dx >= 0) & (xx + dx < w)
            rows.append(ok)
    tap_mask = jnp.stack(rows, 0).astype(jnp.bfloat16)[:, :, None]   # (K*K, M, 1)

    shift_dtype = jnp.float32 if f32_shift else jnp.bfloat16
    for d in range(depth):
        # Residual(DWConv+BN -> IF) + PWConv+BN -> IF fused in one kernel
        s = mixer_layer(s, tap_mask,
                        params['dw_w'][d], params['dw_b'][d],
                        params['pw_w'][d], params['pw_b'][d],
                        h=h, w=w, pad=pad, vmem_limit=vmem,
                        shift_dtype=shift_dtype)                      # (T,M,Cp)

    # adaptive-avg-pool + mean over T + fc (one pass); slice padded classes.
    logits_p = head(s.reshape(T, N, hw, Cp), params['fc_w'], params['fc_b'], vmem)
    return logits_p[:, :n_classes]


if __name__ == "__main__":
    T, dim, depth, ksize, pad, patch, ncls = 4, 32, 2, 3, 1, 4, 10
    key = jax.random.PRNGKey(0)
    kx, kp = jax.random.split(key)
    x = jax.random.normal(kx, (2, 3, 16, 16), dtype=jnp.float32)     # NCHW like PyTorch
    params = init_params(kp, dim, depth, ksize, patch, ncls)

    base = functools.partial(spiking_convmixer_forward, T=T, depth=depth,
                             ksize=ksize, pad=pad, patch=patch, n_classes=ncls)
    try:
        out = jax.block_until_ready(jax.jit(base)(x, params))
    except Exception:
        # TODO(synk): f32 halo/shift fallback (also the preferred path on v5e,
        # which has no bf16 VALU) for toolchains that cannot lower packed-bf16
        # sublane-shifted window loads.
        out = jax.block_until_ready(
            jax.jit(functools.partial(base, f32_shift=True))(x, params))

    assert out.shape == (2, ncls) and out.dtype == jnp.float32
    print("KERNEL_OK")
</pallas_src>

<mosaic_0001>
module attributes {stable_mosaic.version = 11 : i64} {
  func.func @_pe_if_kernel(%arg0: i32, %arg1: memref<16x48xbf16, #tpu.memory_space<vmem>>, %arg2: memref<48x128xbf16, #tpu.memory_space<vmem>>, %arg3: memref<1x128xf32, #tpu.memory_space<vmem>>, %arg4: memref<4x16x128xbf16, #tpu.memory_space<vmem>>) attributes {dimension_semantics = [#tpu.dimension_semantics<parallel>], iteration_bounds = array<i64: 2>, scalar_prefetch = 0 : i64, scratch_operands = 0 : i64, tpu.core_type = #tpu.core_type<tc>, window_params = [{transform_indices = @transform_0, window_bounds = array<i64: 16, 48>}, {pipeline_mode = #tpu.pipeline_mode<synchronous>, transform_indices = @transform_1, window_bounds = array<i64: 48, 128>}, {pipeline_mode = #tpu.pipeline_mode<synchronous>, transform_indices = @transform_2, window_bounds = array<i64: 1, 128>}, {transform_indices = @transform_3, window_bounds = array<i64: 4, 16, 128>}]} {
    %c0 = arith.constant 0 : index
    %c0_0 = arith.constant 0 : index
    %0 = vector.load %arg1[%c0, %c0_0] : memref<16x48xbf16, #tpu.memory_space<vmem>>, vector<16x48xbf16>
    %c0_1 = arith.constant 0 : index
    %c0_2 = arith.constant 0 : index
    %1 = vector.load %arg2[%c0_1, %c0_2] : memref<48x128xbf16, #tpu.memory_space<vmem>>, vector<48x128xbf16>
    %cst = arith.constant dense<0.000000e+00> : vector<16x128xf32>
    %2 = tpu.matmul %0, %1, %cst {dimension_numbers = #tpu.dot_dimension_numbers<[1], [0], [0], [1], [0, 0, 1, 1], [], []>} : vector<16x48xbf16>, vector<48x128xbf16>, vector<16x128xf32> -> vector<16x128xf32>
    %c0_3 = arith.constant 0 : index
    %c0_4 = arith.constant 0 : index
    %3 = vector.load %arg3[%c0_3, %c0_4] : memref<1x128xf32, #tpu.memory_space<vmem>>, vector<1x128xf32>
    %4 = vector.broadcast %3 : vector<1x128xf32> to vector<16x128xf32>
    %5 = arith.addf %2, %4 : vector<16x128xf32>
    %cst_5 = arith.constant 0.000000e+00 : f32
    %6 = vector.broadcast %cst_5 : f32 to vector<16x128xf32>
    %7 = arith.addf %6, %5 : vector<16x128xf32>
    %cst_6 = arith.constant 1.000000e+00 : f32
    %8 = vector.broadcast %cst_6 : f32 to vector<16x128xf32>
    %9 = arith.cmpf oge, %7, %8 : vector<16x128xf32>
    %10 = arith.extui %9 : vector<16x128xi1> to vector<16x128xi32>
    %11 = arith.sitofp %10 : vector<16x128xi32> to vector<16x128xf32>
    %12 = arith.truncf %11 : vector<16x128xf32> to vector<16x128xbf16>
    %c0_7 = arith.constant 0 : index
    %c0_8 = arith.constant 0 : index
    %c0_9 = arith.constant 0 : index
    %13 = vector.load %arg4[%c0_7, %c0_8, %c0_9] : memref<4x16x128xbf16, #tpu.memory_space<vmem>>, vector<1x16x128xbf16>
    %14 = vector.shape_cast %13 : vector<1x16x128xbf16> to vector<16x128xbf16>
    %15 = vector.shape_cast %12 : vector<16x128xbf16> to vector<1x16x128xbf16>
    tpu.vector_store %arg4[%c0_7, %c0_8, %c0_9], %15 {strides = array<i32>} : memref<4x16x128xbf16, #tpu.memory_space<vmem>>, vector<1x16x128xbf16>,
    %cst_10 = arith.constant 0.000000e+00 : f32
    %16 = vector.broadcast %cst_10 : f32 to vector<16x128xf32>
    %17 = arith.select %9, %16, %7 : vector<16x128xi1>, vector<16x128xf32>
    %18 = arith.addf %17, %5 : vector<16x128xf32>
    %cst_11 = arith.constant 1.000000e+00 : f32
    %19 = vector.broadcast %cst_11 : f32 to vector<16x128xf32>
    %20 = arith.cmpf oge, %18, %19 : vector<16x128xf32>
    %21 = arith.extui %20 : vector<16x128xi1> to vector<16x128xi32>
    %22 = arith.sitofp %21 : vector<16x128xi32> to vector<16x128xf32>
    %23 = arith.truncf %22 : vector<16x128xf32> to vector<16x128xbf16>
    %c1 = arith.constant 1 : index
    %c0_12 = arith.constant 0 : index
    %c0_13 = arith.constant 0 : index
    %24 = vector.load %arg4[%c1, %c0_12, %c0_13] : memref<4x16x128xbf16, #tpu.memory_space<vmem>>, vector<1x16x128xbf16>
    %25 = vector.shape_cast %24 : vector<1x16x128xbf16> to vector<16x128xbf16>
    %26 = vector.shape_cast %23 : vector<16x128xbf16> to vector<1x16x128xbf16>
    tpu.vector_store %arg4[%c1, %c0_12, %c0_13], %26 {strides = array<i32>} : memref<4x16x128xbf16, #tpu.memory_space<vmem>>, vector<1x16x128xbf16>,
    %cst_14 = arith.constant 0.000000e+00 : f32
    %27 = vector.broadcast %cst_14 : f32 to vector<16x128xf32>
    %28 = arith.select %20, %27, %18 : vector<16x128xi1>, vector<16x128xf32>
    %29 = arith.addf %28, %5 : vector<16x128xf32>
    %cst_15 = arith.constant 1.000000e+00 : f32
    %30 = vector.broadcast %cst_15 : f32 to vector<16x128xf32>
    %31 = arith.cmpf oge, %29, %30 : vector<16x128xf32>
    %32 = arith.extui %31 : vector<16x128xi1> to vector<16x128xi32>
    %33 = arith.sitofp %32 : vector<16x128xi32> to vector<16x128xf32>
    %34 = arith.truncf %33 : vector<16x128xf32> to vector<16x128xbf16>
    %c2 = arith.constant 2 : index
    %c0_16 = arith.constant 0 : index
    %c0_17 = arith.constant 0 : index
    %35 = vector.load %arg4[%c2, %c0_16, %c0_17] : memref<4x16x128xbf16, #tpu.memory_space<vmem>>, vector<1x16x128xbf16>
    %36 = vector.shape_cast %35 : vector<1x16x128xbf16> to vector<16x128xbf16>
    %37 = vector.shape_cast %34 : vector<16x128xbf16> to vector<1x16x128xbf16>
    tpu.vector_store %arg4[%c2, %c0_16, %c0_17], %37 {strides = array<i32>} : memref<4x16x128xbf16, #tpu.memory_space<vmem>>, vector<1x16x128xbf16>,
    %cst_18 = arith.constant 0.000000e+00 : f32
    %38 = vector.broadcast %cst_18 : f32 to vector<16x128xf32>
    %39 = arith.select %31, %38, %29 : vector<16x128xi1>, vector<16x128xf32>
    %40 = arith.addf %39, %5 : vector<16x128xf32>
    %cst_19 = arith.constant 1.000000e+00 : f32
    %41 = vector.broadcast %cst_19 : f32 to vector<16x128xf32>
    %42 = arith.cmpf oge, %40, %41 : vector<16x128xf32>
    %43 = arith.extui %42 : vector<16x128xi1> to vector<16x128xi32>
    %44 = arith.sitofp %43 : vector<16x128xi32> to vector<16x128xf32>
    %45 = arith.truncf %44 : vector<16x128xf32> to vector<16x128xbf16>
    %c3 = arith.constant 3 : index
    %c0_20 = arith.constant 0 : index
    %c0_21 = arith.constant 0 : index
    %46 = vector.load %arg4[%c3, %c0_20, %c0_21] : memref<4x16x128xbf16, #tpu.memory_space<vmem>>, vector<1x16x128xbf16>
    %47 = vector.shape_cast %46 : vector<1x16x128xbf16> to vector<16x128xbf16>
    %48 = vector.shape_cast %45 : vector<16x128xbf16> to vector<1x16x128xbf16>
    tpu.vector_store %arg4[%c3, %c0_20, %c0_21], %48 {strides = array<i32>} : memref<4x16x128xbf16, #tpu.memory_space<vmem>>, vector<1x16x128xbf16>,
    return
  }
  func.func @transform_0(%arg0: i32) -> (i32, i32) {
    %c0_i32 = arith.constant 0 : i32
    %c0_i32_0 = arith.constant 0 : i32
    return %arg0, %c0_i32 : i32, i32
  }
  func.func @transform_1(%arg0: i32) -> (i32, i32) {
    %c0_i32 = arith.constant 0 : i32
    %c0_i32_0 = arith.constant 0 : i32
    %c0_i32_1 = arith.constant 0 : i32
    return %c0_i32, %c0_i32_0 : i32, i32
  }
  func.func @transform_2(%arg0: i32) -> (i32, i32) {
    %c0_i32 = arith.constant 0 : i32
    %c0_i32_0 = arith.constant 0 : i32
    %c0_i32_1 = arith.constant 0 : i32
    return %c0_i32, %c0_i32_0 : i32, i32
  }
  func.func @transform_3(%arg0: i32) -> (i32, i32, i32) {
    %c0_i32 = arith.constant 0 : i32
    %c0_i32_0 = arith.constant 0 : i32
    %c0_i32_1 = arith.constant 0 : i32
    return %c0_i32, %arg0, %c0_i32_0 : i32, i32, i32
  }
}

module attributes {stable_mosaic.version = 11 : i64} {
  func.func @_head_kernel(%arg0: i32, %arg1: i32, %arg2: memref<1x2x16x128xbf16, #tpu.memory_space<vmem>>, %arg3: memref<128x128xf32, #tpu.memory_space<vmem>>, %arg4: memref<1x128xf32, #tpu.memory_space<vmem>>, %arg5: memref<2x128xf32, #tpu.memory_space<vmem>>, %arg6: memref<2x128xf32, #tpu.memory_space<vmem>>) attributes {dimension_semantics = [#tpu.dimension_semantics<parallel>, #tpu.dimension_semantics<arbitrary>], iteration_bounds = array<i64: 1, 4>, scalar_prefetch = 0 : i64, scratch_operands = 1 : i64, tpu.core_type = #tpu.core_type<tc>, window_params = [{transform_indices = @transform_0, window_bounds = array<i64: 1, 2, 16, 128>}, {pipeline_mode = #tpu.pipeline_mode<synchronous>, transform_indices = @transform_1, window_bounds = array<i64: 128, 128>}, {pipeline_mode = #tpu.pipeline_mode<synchronous>, transform_indices = @transform_2, window_bounds = array<i64: 1, 128>}, {transform_indices = @transform_3, window_bounds = array<i64: 2, 128>}]} {
    %c0_i32 = arith.constant 0 : i32
    %0 = arith.cmpi eq, %arg1, %c0_i32 : i32
    %1 = arith.extui %0 : i1 to i32
    %c0_i32_0 = arith.constant 0 : i32
    %2 = arith.cmpi ne, %1, %c0_i32_0 : i32
    scf.if %2 {
      %cst_9 = arith.constant 0.000000e+00 : f32
      %13 = vector.broadcast %cst_9 : f32 to vector<2x128xf32>
      %c0_10 = arith.constant 0 : index
      %c0_11 = arith.constant 0 : index
      %14 = vector.load %arg6[%c0_10, %c0_11] : memref<2x128xf32, #tpu.memory_space<vmem>>, vector<2x128xf32>
      tpu.vector_store %arg6[%c0_10, %c0_11], %13 {strides = array<i32>} : memref<2x128xf32, #tpu.memory_space<vmem>>, vector<2x128xf32>,
    } else {
    }
    %c0 = arith.constant 0 : index
    %c0_1 = arith.constant 0 : index
    %3 = vector.load %arg6[%c0, %c0_1] : memref<2x128xf32, #tpu.memory_space<vmem>>, vector<2x128xf32>
    %c0_2 = arith.constant 0 : index
    %c0_3 = arith.constant 0 : index
    %c0_4 = arith.constant 0 : index
    %c0_5 = arith.constant 0 : index
    %4 = vector.load %arg2[%c0_2, %c0_3, %c0_4, %c0_5] : memref<1x2x16x128xbf16, #tpu.memory_space<vmem>>, vector<1x2x16x128xbf16>
    %5 = vector.shape_cast %4 : vector<1x2x16x128xbf16> to vector<2x16x128xbf16>
    %6 = arith.extf %5 : vector<2x16x128xbf16> to vector<2x16x128xf32>
    %cst = arith.constant dense<0.000000e+00> : vector<2x128xf32>
    %7 = vector.multi_reduction <add>, %6, %cst [1] : vector<2x16x128xf32> to vector<2x128xf32>
    %8 = arith.addf %3, %7 : vector<2x128xf32>
    %c0_6 = arith.constant 0 : index
    %c0_7 = arith.constant 0 : index
    %9 = vector.load %arg6[%c0_6, %c0_7] : memref<2x128xf32, #tpu.memory_space<vmem>>, vector<2x128xf32>
    tpu.vector_store %arg6[%c0_6, %c0_7], %8 {strides = array<i32>} : memref<2x128xf32, #tpu.memory_space<vmem>>, vector<2x128xf32>,
    %c3_i32 = arith.constant 3 : i32
    %10 = arith.cmpi eq, %arg1, %c3_i32 : i32
    %11 = arith.extui %10 : i1 to i32
    %c0_i32_8 = arith.constant 0 : i32
    %12 = arith.cmpi ne, %11, %c0_i32_8 : i32
    scf.if %12 {
      %c0_9 = arith.constant 0 : index
      %c0_10 = arith.constant 0 : index
      %13 = vector.load %arg6[%c0_9, %c0_10] : memref<2x128xf32, #tpu.memory_space<vmem>>, vector<2x128xf32>
      %cst_11 = arith.constant 1.562500e-02 : f32
      %14 = vector.broadcast %cst_11 : f32 to vector<2x128xf32>
      %15 = arith.mulf %13, %14 : vector<2x128xf32>
      %c0_12 = arith.constant 0 : index
      %c0_13 = arith.constant 0 : index
      %16 = vector.load %arg3[%c0_12, %c0_13] : memref<128x128xf32, #tpu.memory_space<vmem>>, vector<128x128xf32>
      %cst_14 = arith.constant dense<0.000000e+00> : vector<2x128xf32>
      %17 = tpu.matmul %15, %16, %cst_14 {dimension_numbers = #tpu.dot_dimension_numbers<[1], [0], [0], [1], [0, 0, 1, 1], [], []>} : vector<2x128xf32>, vector<128x128xf32>, vector<2x128xf32> -> vector<2x128xf32>
      %c0_15 = arith.constant 0 : index
      %c0_16 = arith.constant 0 : index
      %18 = vector.load %arg4[%c0_15, %c0_16] : memref<1x128xf32, #tpu.memory_space<vmem>>, vector<1x128xf32>
      %19 = vector.broadcast %18 : vector<1x128xf32> to vector<2x128xf32>
      %20 = arith.addf %17, %19 : vector<2x128xf32>
      %c0_17 = arith.constant 0 : index
      %c0_18 = arith.constant 0 : index
      %21 = vector.load %arg5[%c0_17, %c0_18] : memref<2x128xf32, #tpu.memory_space<vmem>>, vector<2x128xf32>
      tpu.vector_store %arg5[%c0_17, %c0_18], %20 {strides = array<i32>} : memref<2x128xf32, #tpu.memory_space<vmem>>, vector<2x128xf32>,
    } else {
    }
    return
  }
  func.func @transform_0(%arg0: i32, %arg1: i32) -> (i32, i32, i32, i32) {
    %c0_i32 = arith.constant 0 : i32
    %c0_i32_0 = arith.constant 0 : i32
    %c0_i32_1 = arith.constant 0 : i32
    return %arg1, %arg0, %c0_i32, %c0_i32_0 : i32, i32, i32, i32
  }
  func.func @transform_1(%arg0: i32, %arg1: i32) -> (i32, i32) {
    %c0_i32 = arith.constant 0 : i32
    %c0_i32_0 = arith.constant 0 : i32
    %c0_i32_1 = arith.constant 0 : i32
    return %c0_i32, %c0_i32_0 : i32, i32
  }
  func.func @transform_2(%arg0: i32, %arg1: i32) -> (i32, i32) {
    %c0_i32 = arith.constant 0 : i32
    %c0_i32_0 = arith.constant 0 : i32
    %c0_i32_1 = arith.constant 0 : i32
    return %c0_i32, %c0_i32_0 : i32, i32
  }
  func.func @transform_3(%arg0: i32, %arg1: i32) -> (i32, i32) {
    %c0_i32 = arith.constant 0 : i32
    %c0_i32_0 = arith.constant 0 : i32
    return %arg0, %c0_i32 : i32, i32
  }
}

module attributes {stable_mosaic.version = 11 : i64} {
  func.func @_mixer_layer_kernel(%arg0: i32, %arg1: i32, %arg2: memref<1x16x128xbf16, #tpu.memory_space<vmem>>, %arg3: memref<9x16x1xbf16, #tpu.memory_space<vmem>>, %arg4: memref<1x1152xbf16, #tpu.memory_space<vmem>>, %arg5: memref<1x128xf32, #tpu.memory_space<vmem>>, %arg6: memref<128x128xbf16, #tpu.memory_space<vmem>>, %arg7: memref<1x128xf32, #tpu.memory_space<vmem>>, %arg8: memref<1x16x128xbf16, #tpu.memory_space<vmem>>, %arg9: memref<48x128xbf16, #tpu.memory_space<vmem>>, %arg10: memref<16x128xf32, #tpu.memory_space<vmem>>, %arg11: memref<16x128xf32, #tpu.memory_space<vmem>>) attributes {dimension_semantics = [#tpu.dimension_semantics<parallel>, #tpu.dimension_semantics<arbitrary>], iteration_bounds = array<i64: 2, 4>, scalar_prefetch = 0 : i64, scratch_operands = 3 : i64, tpu.core_type = #tpu.core_type<tc>, window_params = [{transform_indices = @transform_0, window_bounds = array<i64: 1, 16, 128>}, {transform_indices = @transform_1, window_bounds = array<i64: 9, 16, 1>}, {pipeline_mode = #tpu.pipeline_mode<synchronous>, transform_indices = @transform_2, window_bounds = array<i64: 1, 1152>}, {pipeline_mode = #tpu.pipeline_mode<synchronous>, transform_indices = @transform_3, window_bounds = array<i64: 1, 128>}, {pipeline_mode = #tpu.pipeline_mode<synchronous>, transform_indices = @transform_4, window_bounds = array<i64: 128, 128>}, {pipeline_mode = #tpu.pipeline_mode<synchronous>, transform_indices = @transform_5, window_bounds = array<i64: 1, 128>}, {transform_indices = @transform_6, window_bounds = array<i64: 1, 16, 128>}]} {
    %c0_i32 = arith.constant 0 : i32
    %0 = arith.cmpi eq, %arg1, %c0_i32 : i32
    %1 = arith.extui %0 : i1 to i32
    %c0_i32_0 = arith.constant 0 : i32
    %2 = arith.cmpi ne, %1, %c0_i32_0 : i32
    scf.if %2 {
      %cst_62 = arith.constant 0.000000e+00 : bf16
      %123 = vector.broadcast %cst_62 : bf16 to vector<48x128xbf16>
      %c0_63 = arith.constant 0 : index
      %c0_64 = arith.constant 0 : index
      %124 = vector.load %arg9[%c0_63, %c0_64] : memref<48x128xbf16, #tpu.memory_space<vmem>>, vector<48x128xbf16>
      tpu.vector_store %arg9[%c0_63, %c0_64], %123 {strides = array<i32>} : memref<48x128xbf16, #tpu.memory_space<vmem>>, vector<48x128xbf16>,
      %cst_65 = arith.constant 0.000000e+00 : f32
      %125 = vector.broadcast %cst_65 : f32 to vector<16x128xf32>
      %c0_66 = arith.constant 0 : index
      %c0_67 = arith.constant 0 : index
      %126 = vector.load %arg10[%c0_66, %c0_67] : memref<16x128xf32, #tpu.memory_space<vmem>>, vector<16x128xf32>
      tpu.vector_store %arg10[%c0_66, %c0_67], %125 {strides = array<i32>} : memref<16x128xf32, #tpu.memory_space<vmem>>, vector<16x128xf32>,
      %cst_68 = arith.constant 0.000000e+00 : f32
      %127 = vector.broadcast %cst_68 : f32 to vector<16x128xf32>
      %c0_69 = arith.constant 0 : index
      %c0_70 = arith.constant 0 : index
      %128 = vector.load %arg11[%c0_69, %c0_70] : memref<16x128xf32, #tpu.memory_space<vmem>>, vector<16x128xf32>
      tpu.vector_store %arg11[%c0_69, %c0_70], %127 {strides = array<i32>} : memref<16x128xf32, #tpu.memory_space<vmem>>, vector<16x128xf32>,
    } else {
    }
    %c0 = arith.constant 0 : index
    %c0_1 = arith.constant 0 : index
    %c0_2 = arith.constant 0 : index
    %3 = vector.load %arg2[%c0, %c0_1, %c0_2] : memref<1x16x128xbf16, #tpu.memory_space<vmem>>, vector<1x16x128xbf16>
    %4 = vector.shape_cast %3 : vector<1x16x128xbf16> to vector<16x128xbf16>
    %c16 = arith.constant 16 : index
    %c0_3 = arith.constant 0 : index
    %5 = vector.load %arg9[%c16, %c0_3] : memref<48x128xbf16, #tpu.memory_space<vmem>>, vector<16x128xbf16>
    tpu.vector_store %arg9[%c16, %c0_3], %4 {strides = array<i32>} : memref<48x128xbf16, #tpu.memory_space<vmem>>, vector<16x128xbf16>,
    %c0_4 = arith.constant 0 : index
    %c0_5 = arith.constant 0 : index
    %6 = vector.load %arg10[%c0_4, %c0_5] : memref<16x128xf32, #tpu.memory_space<vmem>>, vector<16x128xf32>
    %c0_6 = arith.constant 0 : index
    %c0_7 = arith.constant 0 : index
    %7 = vector.load %arg5[%c0_6, %c0_7] : memref<1x128xf32, #tpu.memory_space<vmem>>, vector<1x128xf32>
    %8 = vector.broadcast %7 : vector<1x128xf32> to vector<16x128xf32>
    %9 = arith.addf %6, %8 : vector<16x128xf32>
    %c11 = arith.constant 11 : index
    %c0_8 = arith.constant 0 : index
    %10 = vector.load %arg9[%c11, %c0_8] : memref<48x128xbf16, #tpu.memory_space<vmem>>, vector<16x128xbf16>
    %c0_9 = arith.constant 0 : index
    %c0_10 = arith.constant 0 : index
    %11 = vector.load %arg4[%c0_9, %c0_10] : memref<1x1152xbf16, #tpu.memory_space<vmem>>, vector<1x128xbf16>
    %12 = vector.broadcast %11 : vector<1x128xbf16> to vector<16x128xbf16>
    %13 = arith.mulf %10, %12 : vector<16x128xbf16>
    %c0_11 = arith.constant 0 : index
    %c0_12 = arith.constant 0 : index
    %c0_13 = arith.constant 0 : index
    %14 = vector.load %arg3[%c0_11, %c0_12, %c0_13] : memref<9x16x1xbf16, #tpu.memory_space<vmem>>, vector<1x16x1xbf16>
    %15 = vector.shape_cast %14 : vector<1x16x1xbf16> to vector<16x1xbf16>
    %16 = vector.broadcast %15 : vector<16x1xbf16> to vector<16x128xbf16>
    %17 = arith.mulf %13, %16 : vector<16x128xbf16>
    %18 = arith.extf %17 : vector<16x128xbf16> to vector<16x128xf32>
    %19 = arith.addf %9, %18 : vector<16x128xf32>
    %c12 = arith.constant 12 : index
    %c0_14 = arith.constant 0 : index
    %20 = vector.load %arg9[%c12, %c0_14] : memref<48x128xbf16, #tpu.memory_space<vmem>>, vector<16x128xbf16>
    %c0_15 = arith.constant 0 : index
    %c128 = arith.constant 128 : index
    %21 = vector.load %arg4[%c0_15, %c128] : memref<1x1152xbf16, #tpu.memory_space<vmem>>, vector<1x128xbf16>
    %22 = vector.broadcast %21 : vector<1x128xbf16> to vector<16x128xbf16>
    %23 = arith.mulf %20, %22 : vector<16x128xbf16>
    %c1 = arith.constant 1 : index
    %c0_16 = arith.constant 0 : index
    %c0_17 = arith.constant 0 : index
    %24 = vector.load %arg3[%c1, %c0_16, %c0_17] : memref<9x16x1xbf16, #tpu.memory_space<vmem>>, vector<1x16x1xbf16>
    %25 = vector.shape_cast %24 : vector<1x16x1xbf16> to vector<16x1xbf16>
    %26 = vector.broadcast %25 : vector<16x1xbf16> to vector<16x128xbf16>
    %27 = arith.mulf %23, %26 : vector<16x128xbf16>
    %28 = arith.extf %27 : vector<16x128xbf16> to vector<16x128xf32>
    %29 = arith.addf %19, %28 : vector<16x128xf32>
    %c13 = arith.constant 13 : index
    %c0_18 = arith.constant 0 : index
    %30 = vector.load %arg9[%c13, %c0_18] : memref<48x128xbf16, #tpu.memory_space<vmem>>, vector<16x128xbf16>
    %c0_19 = arith.constant 0 : index
    %c256 = arith.constant 256 : index
    %31 = vector.load %arg4[%c0_19, %c256] : memref<1x1152xbf16, #tpu.memory_space<vmem>>, vector<1x128xbf16>
    %32 = vector.broadcast %31 : vector<1x128xbf16> to vector<16x128xbf16>
    %33 = arith.mulf %30, %32 : vector<16x128xbf16>
    %c2 = arith.constant 2 : index
    %c0_20 = arith.constant 0 : index
    %c0_21 = arith.constant 0 : index
    %34 = vector.load %arg3[%c2, %c0_20, %c0_21] : memref<9x16x1xbf16, #tpu.memory_space<vmem>>, vector<1x16x1xbf16>
    %35 = vector.shape_cast %34 : vector<1x16x1xbf16> to vector<16x1xbf16>
    %36 = vector.broadcast %35 : vector<16x1xbf16> to vector<16x128xbf16>
    %37 = arith.mulf %33, %36 : vector<16x128xbf16>
    %38 = arith.extf %37 : vector<16x128xbf16> to vector<16x128xf32>
    %39 = arith.addf %29, %38 : vector<16x128xf32>
    %c15 = arith.constant 15 : index
    %c0_22 = arith.constant 0 : index
    %40 = vector.load %arg9[%c15, %c0_22] : memref<48x128xbf16, #tpu.memory_space<vmem>>, vector<16x128xbf16>
    %c0_23 = arith.constant 0 : index
    %c384 = arith.constant 384 : index
    %41 = vector.load %arg4[%c0_23, %c384] : memref<1x1152xbf16, #tpu.memory_space<vmem>>, vector<1x128xbf16>
    %42 = vector.broadcast %41 : vector<1x128xbf16> to vector<16x128xbf16>
    %43 = arith.mulf %40, %42 : vector<16x128xbf16>
    %c3 = arith.constant 3 : index
    %c0_24 = arith.constant 0 : index
    %c0_25 = arith.constant 0 : index
    %44 = vector.load %arg3[%c3, %c0_24, %c0_25] : memref<9x16x1xbf16, #tpu.memory_space<vmem>>, vector<1x16x1xbf16>
    %45 = vector.shape_cast %44 : vector<1x16x1xbf16> to vector<16x1xbf16>
    %46 = vector.broadcast %45 : vector<16x1xbf16> to vector<16x128xbf16>
    %47 = arith.mulf %43, %46 : vector<16x128xbf16>
    %48 = arith.extf %47 : vector<16x128xbf16> to vector<16x128xf32>
    %49 = arith.addf %39, %48 : vector<16x128xf32>
    %c16_26 = arith.constant 16 : index
    %c0_27 = arith.constant 0 : index
    %50 = vector.load %arg9[%c16_26, %c0_27] : memref<48x128xbf16, #tpu.memory_space<vmem>>, vector<16x128xbf16>
    %c0_28 = arith.constant 0 : index
    %c512 = arith.constant 512 : index
    %51 = vector.load %arg4[%c0_28, %c512] : memref<1x1152xbf16, #tpu.memory_space<vmem>>, vector<1x128xbf16>
    %52 = vector.broadcast %51 : vector<1x128xbf16> to vector<16x128xbf16>
    %53 = arith.mulf %50, %52 : vector<16x128xbf16>
    %54 = arith.extf %53 : vector<16x128xbf16> to vector<16x128xf32>
    %55 = arith.addf %49, %54 : vector<16x128xf32>
    %c17 = arith.constant 17 : index
    %c0_29 = arith.constant 0 : index
    %56 = vector.load %arg9[%c17, %c0_29] : memref<48x128xbf16, #tpu.memory_space<vmem>>, vector<16x128xbf16>
    %c0_30 = arith.constant 0 : index
    %c640 = arith.constant 640 : index
    %57 = vector.load %arg4[%c0_30, %c640] : memref<1x1152xbf16, #tpu.memory_space<vmem>>, vector<1x128xbf16>
    %58 = vector.broadcast %57 : vector<1x128xbf16> to vector<16x128xbf16>
    %59 = arith.mulf %56, %58 : vector<16x128xbf16>
    %c5 = arith.constant 5 : index
    %c0_31 = arith.constant 0 : index
    %c0_32 = arith.constant 0 : index
    %60 = vector.load %arg3[%c5, %c0_31, %c0_32] : memref<9x16x1xbf16, #tpu.memory_space<vmem>>, vector<1x16x1xbf16>
    %61 = vector.shape_cast %60 : vector<1x16x1xbf16> to vector<16x1xbf16>
    %62 = vector.broadcast %61 : vector<16x1xbf16> to vector<16x128xbf16>
    %63 = arith.mulf %59, %62 : vector<16x128xbf16>
    %64 = arith.extf %63 : vector<16x128xbf16> to vector<16x128xf32>
    %65 = arith.addf %55, %64 : vector<16x128xf32>
    %c19 = arith.constant 19 : index
    %c0_33 = arith.constant 0 : index
    %66 = vector.load %arg9[%c19, %c0_33] : memref<48x128xbf16, #tpu.memory_space<vmem>>, vector<16x128xbf16>
    %c0_34 = arith.constant 0 : index
    %c768 = arith.constant 768 : index
    %67 = vector.load %arg4[%c0_34, %c768] : memref<1x1152xbf16, #tpu.memory_space<vmem>>, vector<1x128xbf16>
    %68 = vector.broadcast %67 : vector<1x128xbf16> to vector<16x128xbf16>
    %69 = arith.mulf %66, %68 : vector<16x128xbf16>
    %c6 = arith.constant 6 : index
    %c0_35 = arith.constant 0 : index
    %c0_36 = arith.constant 0 : index
    %70 = vector.load %arg3[%c6, %c0_35, %c0_36] : memref<9x16x1xbf16, #tpu.memory_space<vmem>>, vector<1x16x1xbf16>
    %71 = vector.shape_cast %70 : vector<1x16x1xbf16> to vector<16x1xbf16>
    %72 = vector.broadcast %71 : vector<16x1xbf16> to vector<16x128xbf16>
    %73 = arith.mulf %69, %72 : vector<16x128xbf16>
    %74 = arith.extf %73 : vector<16x128xbf16> to vector<16x128xf32>
    %75 = arith.addf %65, %74 : vector<16x128xf32>
    %c20 = arith.constant 20 : index
    %c0_37 = arith.constant 0 : index
    %76 = vector.load %arg9[%c20, %c0_37] : memref<48x128xbf16, #tpu.memory_space<vmem>>, vector<16x128xbf16>
    %c0_38 = arith.constant 0 : index
    %c896 = arith.constant 896 : index
    %77 = vector.load %arg4[%c0_38, %c896] : memref<1x1152xbf16, #tpu.memory_space<vmem>>, vector<1x128xbf16>
    %78 = vector.broadcast %77 : vector<1x128xbf16> to vector<16x128xbf16>
    %79 = arith.mulf %76, %78 : vector<16x128xbf16>
    %c7 = arith.constant 7 : index
    %c0_39 = arith.constant 0 : index
    %c0_40 = arith.constant 0 : index
    %80 = vector.load %arg3[%c7, %c0_39, %c0_40] : memref<9x16x1xbf16, #tpu.memory_space<vmem>>, vector<1x16x1xbf16>
    %81 = vector.shape_cast %80 : vector<1x16x1xbf16> to vector<16x1xbf16>
    %82 = vector.broadcast %81 : vector<16x1xbf16> to vector<16x128xbf16>
    %83 = arith.mulf %79, %82 : vector<16x128xbf16>
    %84 = arith.extf %83 : vector<16x128xbf16> to vector<16x128xf32>
    %85 = arith.addf %75, %84 : vector<16x128xf32>
    %c21 = arith.constant 21 : index
    %c0_41 = arith.constant 0 : index
    %86 = vector.load %arg9[%c21, %c0_41] : memref<48x128xbf16, #tpu.memory_space<vmem>>, vector<16x128xbf16>
    %c0_42 = arith.constant 0 : index
    %c1024 = arith.constant 1024 : index
    %87 = vector.load %arg4[%c0_42, %c1024] : memref<1x1152xbf16, #tpu.memory_space<vmem>>, vector<1x128xbf16>
    %88 = vector.broadcast %87 : vector<1x128xbf16> to vector<16x128xbf16>
    %89 = arith.mulf %86, %88 : vector<16x128xbf16>
    %c8 = arith.constant 8 : index
    %c0_43 = arith.constant 0 : index
    %c0_44 = arith.constant 0 : index
    %90 = vector.load %arg3[%c8, %c0_43, %c0_44] : memref<9x16x1xbf16, #tpu.memory_space<vmem>>, vector<1x16x1xbf16>
    %91 = vector.shape_cast %90 : vector<1x16x1xbf16> to vector<16x1xbf16>
    %92 = vector.broadcast %91 : vector<16x1xbf16> to vector<16x128xbf16>
    %93 = arith.mulf %89, %92 : vector<16x128xbf16>
    %94 = arith.extf %93 : vector<16x128xbf16> to vector<16x128xf32>
    %95 = arith.addf %85, %94 : vector<16x128xf32>
    %cst = arith.constant 1.000000e+00 : f32
    %96 = vector.broadcast %cst : f32 to vector<16x128xf32>
    %97 = arith.cmpf oge, %95, %96 : vector<16x128xf32>
    %cst_45 = arith.constant 0.000000e+00 : f32
    %98 = vector.broadcast %cst_45 : f32 to vector<16x128xf32>
    %99 = arith.select %97, %98, %95 : vector<16x128xi1>, vector<16x128xf32>
    %c0_46 = arith.constant 0 : index
    %c0_47 = arith.constant 0 : index
    %100 = vector.load %arg10[%c0_46, %c0_47] : memref<16x128xf32, #tpu.memory_space<vmem>>, vector<16x128xf32>
    tpu.vector_store %arg10[%c0_46, %c0_47], %99 {strides = array<i32>} : memref<16x128xf32, #tpu.memory_space<vmem>>, vector<16x128xf32>,
    %101 = arith.extui %97 : vector<16x128xi1> to vector<16x128xi32>
    %102 = arith.sitofp %101 : vector<16x128xi32> to vector<16x128xf32>
    %103 = arith.truncf %102 : vector<16x128xf32> to vector<16x128xbf16>
    %104 = arith.addf %103, %4 : vector<16x128xbf16>
    %c0_48 = arith.constant 0 : index
    %c0_49 = arith.constant 0 : index
    %105 = vector.load %arg6[%c0_48, %c0_49] : memref<128x128xbf16, #tpu.memory_space<vmem>>, vector<128x128xbf16>
    %cst_50 = arith.constant dense<0.000000e+00> : vector<16x128xf32>
    %106 = tpu.matmul %104, %105, %cst_50 {dimension_numbers = #tpu.dot_dimension_numbers<[1], [0], [0], [1], [0, 0, 1, 1], [], []>} : vector<16x128xbf16>, vector<128x128xbf16>, vector<16x128xf32> -> vector<16x128xf32>
    %c0_51 = arith.constant 0 : index
    %c0_52 = arith.constant 0 : index
    %107 = vector.load %arg7[%c0_51, %c0_52] : memref<1x128xf32, #tpu.memory_space<vmem>>, vector<1x128xf32>
    %108 = vector.broadcast %107 : vector<1x128xf32> to vector<16x128xf32>
    %109 = arith.addf %106, %108 : vector<16x128xf32>
    %c0_53 = arith.constant 0 : index
    %c0_54 = arith.constant 0 : index
    %110 = vector.load %arg11[%c0_53, %c0_54] : memref<16x128xf32, #tpu.memory_space<vmem>>, vector<16x128xf32>
    %111 = arith.addf %110, %109 : vector<16x128xf32>
    %cst_55 = arith.constant 1.000000e+00 : f32
    %112 = vector.broadcast %cst_55 : f32 to vector<16x128xf32>
    %113 = arith.cmpf oge, %111, %112 : vector<16x128xf32>
    %cst_56 = arith.constant 0.000000e+00 : f32
    %114 = vector.broadcast %cst_56 : f32 to vector<16x128xf32>
    %115 = arith.select %113, %114, %111 : vector<16x128xi1>, vector<16x128xf32>
    %c0_57 = arith.constant 0 : index
    %c0_58 = arith.constant 0 : index
    %116 = vector.load %arg11[%c0_57, %c0_58] : memref<16x128xf32, #tpu.memory_space<vmem>>, vector<16x128xf32>
    tpu.vector_store %arg11[%c0_57, %c0_58], %115 {strides = array<i32>} : memref<16x128xf32, #tpu.memory_space<vmem>>, vector<16x128xf32>,
    %117 = arith.extui %113 : vector<16x128xi1> to vector<16x128xi32>
    %118 = arith.sitofp %117 : vector<16x128xi32> to vector<16x128xf32>
    %119 = arith.truncf %118 : vector<16x128xf32> to vector<16x128xbf16>
    %c0_59 = arith.constant 0 : index
    %c0_60 = arith.constant 0 : index
    %c0_61 = arith.constant 0 : index
    %120 = vector.load %arg8[%c0_59, %c0_60, %c0_61] : memref<1x16x128xbf16, #tpu.memory_space<vmem>>, vector<1x16x128xbf16>
    %121 = vector.shape_cast %120 : vector<1x16x128xbf16> to vector<16x128xbf16>
    %122 = vector.shape_cast %119 : vector<16x128xbf16> to vector<1x16x128xbf16>
    tpu.vector_store %arg8[%c0_59, %c0_60, %c0_61], %122 {strides = array<i32>} : memref<1x16x128xbf16, #tpu.memory_space<vmem>>, vector<1x16x128xbf16>,
    return
  }
  func.func @transform_0(%arg0: i32, %arg1: i32) -> (i32, i32, i32) {
    %c0_i32 = arith.constant 0 : i32
    %c0_i32_0 = arith.constant 0 : i32
    return %arg1, %arg0, %c0_i32 : i32, i32, i32
  }
  func.func @transform_1(%arg0: i32, %arg1: i32) -> (i32, i32, i32) {
    %c0_i32 = arith.constant 0 : i32
    %c0_i32_0 = arith.constant 0 : i32
    %c0_i32_1 = arith.constant 0 : i32
    return %c0_i32, %arg0, %c0_i32_0 : i32, i32, i32
  }
  func.func @transform_2(%arg0: i32, %arg1: i32) -> (i32, i32) {
    %c0_i32 = arith.constant 0 : i32
    %c0_i32_0 = arith.constant 0 : i32
    %c0_i32_1 = arith.constant 0 : i32
    return %c0_i32, %c0_i32_0 : i32, i32
  }
  func.func @transform_3(%arg0: i32, %arg1: i32) -> (i32, i32) {
    %c0_i32 = arith.constant 0 : i32
    %c0_i32_0 = arith.constant 0 : i32
    %c0_i32_1 = arith.constant 0 : i32
    return %c0_i32, %c0_i32_0 : i32, i32
  }
  func.func @transform_4(%arg0: i32, %arg1: i32) -> (i32, i32) {
    %c0_i32 = arith.constant 0 : i32
    %c0_i32_0 = arith.constant 0 : i32
    %c0_i32_1 = arith.constant 0 : i32
    return %c0_i32, %c0_i32_0 : i32, i32
  }
  func.func @transform_5(%arg0: i32, %arg1: i32) -> (i32, i32) {
    %c0_i32 = arith.constant 0 : i32
    %c0_i32_0 = arith.constant 0 : i32
    %c0_i32_1 = arith.constant 0 : i32
    return %c0_i32, %c0_i32_0 : i32, i32
  }
  func.func @transform_6(%arg0: i32, %arg1: i32) -> (i32, i32, i32) {
    %c0_i32 = arith.constant 0 : i32
    %c0_i32_0 = arith.constant 0 : i32
    return %arg1, %arg0, %c0_i32 : i32, i32, i32
  }
}

module attributes {stable_mosaic.version = 11 : i64} {
  func.func @_pe_if_kernel(%arg0: i32, %arg1: memref<16x48xbf16, #tpu.memory_space<vmem>>, %arg2: memref<48x128xbf16, #tpu.memory_space<vmem>>, %arg3: memref<1x128xf32, #tpu.memory_space<vmem>>, %arg4: memref<4x16x128xbf16, #tpu.memory_space<vmem>>) attributes {dimension_semantics = [#tpu.dimension_semantics<parallel>], iteration_bounds = array<i64: 2>, scalar_prefetch = 0 : i64, scratch_operands = 0 : i64, tpu.core_type = #tpu.core_type<tc>, window_params = [{transform_indices = @transform_0, window_bounds = array<i64: 16, 48>}, {pipeline_mode = #tpu.pipeline_mode<synchronous>, transform_indices = @transform_1, window_bounds = array<i64: 48, 128>}, {pipeline_mode = #tpu.pipeline_mode<synchronous>, transform_indices = @transform_2, window_bounds = array<i64: 1, 128>}, {transform_indices = @transform_3, window_bounds = array<i64: 4, 16, 128>}]} {
    %c0 = arith.constant 0 : index
    %c0_0 = arith.constant 0 : index
    %0 = vector.load %arg1[%c0, %c0_0] : memref<16x48xbf16, #tpu.memory_space<vmem>>, vector<16x48xbf16>
    %c0_1 = arith.constant 0 : index
    %c0_2 = arith.constant 0 : index
    %1 = vector.load %arg2[%c0_1, %c0_2] : memref<48x128xbf16, #tpu.memory_space<vmem>>, vector<48x128xbf16>
    %cst = arith.constant dense<0.000000e+00> : vector<16x128xf32>
    %2 = tpu.matmul %0, %1, %cst {dimension_numbers = #tpu.dot_dimension_numbers<[1], [0], [0], [1], [0, 0, 1, 1], [], []>} : vector<16x48xbf16>, vector<48x128xbf16>, vector<16x128xf32> -> vector<16x128xf32>
    %c0_3 = arith.constant 0 : index
    %c0_4 = arith.constant 0 : index
    %3 = vector.load %arg3[%c0_3, %c0_4] : memref<1x128xf32, #tpu.memory_space<vmem>>, vector<1x128xf32>
    %4 = vector.broadcast %3 : vector<1x128xf32> to vector<16x128xf32>
    %5 = arith.addf %2, %4 : vector<16x128xf32>
    %cst_5 = arith.constant 0.000000e+00 : f32
    %6 = vector.broadcast %cst_5 : f32 to vector<16x128xf32>
    %7 = arith.addf %6, %5 : vector<16x128xf32>
    %cst_6 = arith.constant 1.000000e+00 : f32
    %8 = vector.broadcast %cst_6 : f32 to vector<16x128xf32>
    %9 = arith.cmpf oge, %7, %8 : vector<16x128xf32>
    %10 = arith.extui %9 : vector<16x128xi1> to vector<16x128xi32>
    %11 = arith.sitofp %10 : vector<16x128xi32> to vector<16x128xf32>
    %12 = arith.truncf %11 : vector<16x128xf32> to vector<16x128xbf16>
    %c0_7 = arith.constant 0 : index
    %c0_8 = arith.constant 0 : index
    %c0_9 = arith.constant 0 : index
    %13 = vector.load %arg4[%c0_7, %c0_8, %c0_9] : memref<4x16x128xbf16, #tpu.memory_space<vmem>>, vector<1x16x128xbf16>
    %14 = vector.shape_cast %13 : vector<1x16x128xbf16> to vector<16x128xbf16>
    %15 = vector.shape_cast %12 : vector<16x128xbf16> to vector<1x16x128xbf16>
    tpu.vector_store %arg4[%c0_7, %c0_8, %c0_9], %15 {strides = array<i32>} : memref<4x16x128xbf16, #tpu.memory_space<vmem>>, vector<1x16x128xbf16>,
    %cst_10 = arith.constant 0.000000e+00 : f32
    %16 = vector.broadcast %cst_10 : f32 to vector<16x128xf32>
    %17 = arith.select %9, %16, %7 : vector<16x128xi1>, vector<16x128xf32>
    %18 = arith.addf %17, %5 : vector<16x128xf32>
    %cst_11 = arith.constant 1.000000e+00 : f32
    %19 = vector.broadcast %cst_11 : f32 to vector<16x128xf32>
    %20 = arith.cmpf oge, %18, %19 : vector<16x128xf32>
    %21 = arith.extui %20 : vector<16x128xi1> to vector<16x128xi32>
    %22 = arith.sitofp %21 : vector<16x128xi32> to vector<16x128xf32>
    %23 = arith.truncf %22 : vector<16x128xf32> to vector<16x128xbf16>
    %c1 = arith.constant 1 : index
    %c0_12 = arith.constant 0 : index
    %c0_13 = arith.constant 0 : index
    %24 = vector.load %arg4[%c1, %c0_12, %c0_13] : memref<4x16x128xbf16, #tpu.memory_space<vmem>>, vector<1x16x128xbf16>
    %25 = vector.shape_cast %24 : vector<1x16x128xbf16> to vector<16x128xbf16>
    %26 = vector.shape_cast %23 : vector<16x128xbf16> to vector<1x16x128xbf16>
    tpu.vector_store %arg4[%c1, %c0_12, %c0_13], %26 {strides = array<i32>} : memref<4x16x128xbf16, #tpu.memory_space<vmem>>, vector<1x16x128xbf16>,
    %cst_14 = arith.constant 0.000000e+00 : f32
    %27 = vector.broadcast %cst_14 : f32 to vector<16x128xf32>
    %28 = arith.select %20, %27, %18 : vector<16x128xi1>, vector<16x128xf32>
    %29 = arith.addf %28, %5 : vector<16x128xf32>
    %cst_15 = arith.constant 1.000000e+00 : f32
    %30 = vector.broadcast %cst_15 : f32 to vector<16x128xf32>
    %31 = arith.cmpf oge, %29, %30 : vector<16x128xf32>
    %32 = arith.extui %31 : vector<16x128xi1> to vector<16x128xi32>
    %33 = arith.sitofp %32 : vector<16x128xi32> to vector<16x128xf32>
    %34 = arith.truncf %33 : vector<16x128xf32> to vector<16x128xbf16>
    %c2 = arith.constant 2 : index
    %c0_16 = arith.constant 0 : index
    %c0_17 = arith.constant 0 : index
    %35 = vector.load %arg4[%c2, %c0_16, %c0_17] : memref<4x16x128xbf16, #tpu.memory_space<vmem>>, vector<1x16x128xbf16>
    %36 = vector.shape_cast %35 : vector<1x16x128xbf16> to vector<16x128xbf16>
    %37 = vector.shape_cast %34 : vector<16x128xbf16> to vector<1x16x128xbf16>
    tpu.vector_store %arg4[%c2, %c0_16, %c0_17], %37 {strides = array<i32>} : memref<4x16x128xbf16, #tpu.memory_space<vmem>>, vector<1x16x128xbf16>,
    %cst_18 = arith.constant 0.000000e+00 : f32
    %38 = vector.broadcast %cst_18 : f32 to vector<16x128xf32>
    %39 = arith.select %31, %38, %29 : vector<16x128xi1>, vector<16x128xf32>
    %40 = arith.addf %39, %5 : vector<16x128xf32>
    %cst_19 = arith.constant 1.000000e+00 : f32
    %41 = vector.broadcast %cst_19 : f32 to vector<16x128xf32>
    %42 = arith.cmpf oge, %40, %41 : vector<16x128xf32>
    %43 = arith.extui %42 : vector<16x128xi1> to vector<16x128xi32>
    %44 = arith.sitofp %43 : vector<16x128xi32> to vector<16x128xf32>
    %45 = arith.truncf %44 : vector<16x128xf32> to vector<16x128xbf16>
    %c3 = arith.constant 3 : index
    %c0_20 = arith.constant 0 : index
    %c0_21 = arith.constant 0 : index
    %46 = vector.load %arg4[%c3, %c0_20, %c0_21] : memref<4x16x128xbf16, #tpu.memory_space<vmem>>, vector<1x16x128xbf16>
    %47 = vector.shape_cast %46 : vector<1x16x128xbf16> to vector<16x128xbf16>
    %48 = vector.shape_cast %45 : vector<16x128xbf16> to vector<1x16x128xbf16>
    tpu.vector_store %arg4[%c3, %c0_20, %c0_21], %48 {strides = array<i32>} : memref<4x16x128xbf16, #tpu.memory_space<vmem>>, vector<1x16x128xbf16>,
    return
  }
  func.func @transform_0(%arg0: i32) -> (i32, i32) {
    %c0_i32 = arith.constant 0 : i32
    %c0_i32_0 = arith.constant 0 : i32
    return %arg0, %c0_i32 : i32, i32
  }
  func.func @transform_1(%arg0: i32) -> (i32, i32) {
    %c0_i32 = arith.constant 0 : i32
    %c0_i32_0 = arith.constant 0 : i32
    %c0_i32_1 = arith.constant 0 : i32
    return %c0_i32, %c0_i32_0 : i32, i32
  }
  func.func @transform_2(%arg0: i32) -> (i32, i32) {
    %c0_i32 = arith.constant 0 : i32
    %c0_i32_0 = arith.constant 0 : i32
    %c0_i32_1 = arith.constant 0 : i32
    return %c0_i32, %c0_i32_0 : i32, i32
  }
  func.func @transform_3(%arg0: i32) -> (i32, i32, i32) {
    %c0_i32 = arith.constant 0 : i32
    %c0_i32_0 = arith.constant 0 : i32
    %c0_i32_1 = arith.constant 0 : i32
    return %c0_i32, %arg0, %c0_i32_0 : i32, i32, i32
  }
}

module attributes {stable_mosaic.version = 11 : i64} {
  func.func @_head_kernel(%arg0: i32, %arg1: i32, %arg2: memref<1x2x16x128xbf16, #tpu.memory_space<vmem>>, %arg3: memref<128x128xf32, #tpu.memory_space<vmem>>, %arg4: memref<1x128xf32, #tpu.memory_space<vmem>>, %arg5: memref<2x128xf32, #tpu.memory_space<vmem>>, %arg6: memref<2x128xf32, #tpu.memory_space<vmem>>) attributes {dimension_semantics = [#tpu.dimension_semantics<parallel>, #tpu.dimension_semantics<arbitrary>], iteration_bounds = array<i64: 1, 4>, scalar_prefetch = 0 : i64, scratch_operands = 1 : i64, tpu.core_type = #tpu.core_type<tc>, window_params = [{transform_indices = @transform_0, window_bounds = array<i64: 1, 2, 16, 128>}, {pipeline_mode = #tpu.pipeline_mode<synchronous>, transform_indices = @transform_1, window_bounds = array<i64: 128, 128>}, {pipeline_mode = #tpu.pipeline_mode<synchronous>, transform_indices = @transform_2, window_bounds = array<i64: 1, 128>}, {transform_indices = @transform_3, window_bounds = array<i64: 2, 128>}]} {
    %c0_i32 = arith.constant 0 : i32
    %0 = arith.cmpi eq, %arg1, %c0_i32 : i32
    %1 = arith.extui %0 : i1 to i32
    %c0_i32_0 = arith.constant 0 : i32
    %2 = arith.cmpi ne, %1, %c0_i32_0 : i32
    scf.if %2 {
      %cst_9 = arith.constant 0.000000e+00 : f32
      %13 = vector.broadcast %cst_9 : f32 to vector<2x128xf32>
      %c0_10 = arith.constant 0 : index
      %c0_11 = arith.constant 0 : index
      %14 = vector.load %arg6[%c0_10, %c0_11] : memref<2x128xf32, #tpu.memory_space<vmem>>, vector<2x128xf32>
      tpu.vector_store %arg6[%c0_10, %c0_11], %13 {strides = array<i32>} : memref<2x128xf32, #tpu.memory_space<vmem>>, vector<2x128xf32>,
    } else {
    }
    %c0 = arith.constant 0 : index
    %c0_1 = arith.constant 0 : index
    %3 = vector.load %arg6[%c0, %c0_1] : memref<2x128xf32, #tpu.memory_space<vmem>>, vector<2x128xf32>
    %c0_2 = arith.constant 0 : index
    %c0_3 = arith.constant 0 : index
    %c0_4 = arith.constant 0 : index
    %c0_5 = arith.constant 0 : index
    %4 = vector.load %arg2[%c0_2, %c0_3, %c0_4, %c0_5] : memref<1x2x16x128xbf16, #tpu.memory_space<vmem>>, vector<1x2x16x128xbf16>
    %5 = vector.shape_cast %4 : vector<1x2x16x128xbf16> to vector<2x16x128xbf16>
    %6 = arith.extf %5 : vector<2x16x128xbf16> to vector<2x16x128xf32>
    %cst = arith.constant dense<0.000000e+00> : vector<2x128xf32>
    %7 = vector.multi_reduction <add>, %6, %cst [1] : vector<2x16x128xf32> to vector<2x128xf32>
    %8 = arith.addf %3, %7 : vector<2x128xf32>
    %c0_6 = arith.constant 0 : index
    %c0_7 = arith.constant 0 : index
    %9 = vector.load %arg6[%c0_6, %c0_7] : memref<2x128xf32, #tpu.memory_space<vmem>>, vector<2x128xf32>
    tpu.vector_store %arg6[%c0_6, %c0_7], %8 {strides = array<i32>} : memref<2x128xf32, #tpu.memory_space<vmem>>, vector<2x128xf32>,
    %c3_i32 = arith.constant 3 : i32
    %10 = arith.cmpi eq, %arg1, %c3_i32 : i32
    %11 = arith.extui %10 : i1 to i32
    %c0_i32_8 = arith.constant 0 : i32
    %12 = arith.cmpi ne, %11, %c0_i32_8 : i32
    scf.if %12 {
      %c0_9 = arith.constant 0 : index
      %c0_10 = arith.constant 0 : index
      %13 = vector.load %arg6[%c0_9, %c0_10] : memref<2x128xf32, #tpu.memory_space<vmem>>, vector<2x128xf32>
      %cst_11 = arith.constant 1.562500e-02 : f32
      %14 = vector.broadcast %cst_11 : f32 to vector<2x128xf32>
      %15 = arith.mulf %13, %14 : vector<2x128xf32>
      %c0_12 = arith.constant 0 : index
      %c0_13 = arith.constant 0 : index
      %16 = vector.load %arg3[%c0_12, %c0_13] : memref<128x128xf32, #tpu.memory_space<vmem>>, vector<128x128xf32>
      %cst_14 = arith.constant dense<0.000000e+00> : vector<2x128xf32>
      %17 = tpu.matmul %15, %16, %cst_14 {dimension_numbers = #tpu.dot_dimension_numbers<[1], [0], [0], [1], [0, 0, 1, 1], [], []>} : vector<2x128xf32>, vector<128x128xf32>, vector<2x128xf32> -> vector<2x128xf32>
      %c0_15 = arith.constant 0 : index
      %c0_16 = arith.constant 0 : index
      %18 = vector.load %arg4[%c0_15, %c0_16] : memref<1x128xf32, #tpu.memory_space<vmem>>, vector<1x128xf32>
      %19 = vector.broadcast %18 : vector<1x128xf32> to vector<2x128xf32>
      %20 = arith.addf %17, %19 : vector<2x128xf32>
      %c0_17 = arith.constant 0 : index
      %c0_18 = arith.constant 0 : index
      %21 = vector.load %arg5[%c0_17, %c0_18] : memref<2x128xf32, #tpu.memory_space<vmem>>, vector<2x128xf32>
      tpu.vector_store %arg5[%c0_17, %c0_18], %20 {strides = array<i32>} : memref<2x128xf32, #tpu.memory_space<vmem>>, vector<2x128xf32>,
    } else {
    }
    return
  }
  func.func @transform_0(%arg0: i32, %arg1: i32) -> (i32, i32, i32, i32) {
    %c0_i32 = arith.constant 0 : i32
    %c0_i32_0 = arith.constant 0 : i32
    %c0_i32_1 = arith.constant 0 : i32
    return %arg1, %arg0, %c0_i32, %c0_i32_0 : i32, i32, i32, i32
  }
  func.func @transform_1(%arg0: i32, %arg1: i32) -> (i32, i32) {
    %c0_i32 = arith.constant 0 : i32
    %c0_i32_0 = arith.constant 0 : i32
    %c0_i32_1 = arith.constant 0 : i32
    return %c0_i32, %c0_i32_0 : i32, i32
  }
  func.func @transform_2(%arg0: i32, %arg1: i32) -> (i32, i32) {
    %c0_i32 = arith.constant 0 : i32
    %c0_i32_0 = arith.constant 0 : i32
    %c0_i32_1 = arith.constant 0 : i32
    return %c0_i32, %c0_i32_0 : i32, i32
  }
  func.func @transform_3(%arg0: i32, %arg1: i32) -> (i32, i32) {
    %c0_i32 = arith.constant 0 : i32
    %c0_i32_0 = arith.constant 0 : i32
    return %arg0, %c0_i32 : i32, i32
  }
}

module attributes {stable_mosaic.version = 11 : i64} {
  func.func @_mixer_layer_kernel(%arg0: i32, %arg1: i32, %arg2: memref<1x16x128xbf16, #tpu.memory_space<vmem>>, %arg3: memref<9x16x1xbf16, #tpu.memory_space<vmem>>, %arg4: memref<1x1152xbf16, #tpu.memory_space<vmem>>, %arg5: memref<1x128xf32, #tpu.memory_space<vmem>>, %arg6: memref<128x128xbf16, #tpu.memory_space<vmem>>, %arg7: memref<1x128xf32, #tpu.memory_space<vmem>>, %arg8: memref<1x16x128xbf16, #tpu.memory_space<vmem>>, %arg9: memref<48x128xf32, #tpu.memory_space<vmem>>, %arg10: memref<16x128xf32, #tpu.memory_space<vmem>>, %arg11: memref<16x128xf32, #tpu.memory_space<vmem>>) attributes {dimension_semantics = [#tpu.dimension_semantics<parallel>, #tpu.dimension_semantics<arbitrary>], iteration_bounds = array<i64: 2, 4>, scalar_prefetch = 0 : i64, scratch_operands = 3 : i64, tpu.core_type = #tpu.core_type<tc>, window_params = [{transform_indices = @transform_0, window_bounds = array<i64: 1, 16, 128>}, {transform_indices = @transform_1, window_bounds = array<i64: 9, 16, 1>}, {pipeline_mode = #tpu.pipeline_mode<synchronous>, transform_indices = @transform_2, window_bounds = array<i64: 1, 1152>}, {pipeline_mode = #tpu.pipeline_mode<synchronous>, transform_indices = @transform_3, window_bounds = array<i64: 1, 128>}, {pipeline_mode = #tpu.pipeline_mode<synchronous>, transform_indices = @transform_4, window_bounds = array<i64: 128, 128>}, {pipeline_mode = #tpu.pipeline_mode<synchronous>, transform_indices = @transform_5, window_bounds = array<i64: 1, 128>}, {transform_indices = @transform_6, window_bounds = array<i64: 1, 16, 128>}]} {
    %c0_i32 = arith.constant 0 : i32
    %0 = arith.cmpi eq, %arg1, %c0_i32 : i32
    %1 = arith.extui %0 : i1 to i32
    %c0_i32_0 = arith.constant 0 : i32
    %2 = arith.cmpi ne, %1, %c0_i32_0 : i32
    scf.if %2 {
      %cst_62 = arith.constant 0.000000e+00 : f32
      %132 = vector.broadcast %cst_62 : f32 to vector<48x128xf32>
      %c0_63 = arith.constant 0 : index
      %c0_64 = arith.constant 0 : index
      %133 = vector.load %arg9[%c0_63, %c0_64] : memref<48x128xf32, #tpu.memory_space<vmem>>, vector<48x128xf32>
      tpu.vector_store %arg9[%c0_63, %c0_64], %132 {strides = array<i32>} : memref<48x128xf32, #tpu.memory_space<vmem>>, vector<48x128xf32>,
      %cst_65 = arith.constant 0.000000e+00 : f32
      %134 = vector.broadcast %cst_65 : f32 to vector<16x128xf32>
      %c0_66 = arith.constant 0 : index
      %c0_67 = arith.constant 0 : index
      %135 = vector.load %arg10[%c0_66, %c0_67] : memref<16x128xf32, #tpu.memory_space<vmem>>, vector<16x128xf32>
      tpu.vector_store %arg10[%c0_66, %c0_67], %134 {strides = array<i32>} : memref<16x128xf32, #tpu.memory_space<vmem>>, vector<16x128xf32>,
      %cst_68 = arith.constant 0.000000e+00 : f32
      %136 = vector.broadcast %cst_68 : f32 to vector<16x128xf32>
      %c0_69 = arith.constant 0 : index
      %c0_70 = arith.constant 0 : index
      %137 = vector.load %arg11[%c0_69, %c0_70] : memref<16x128xf32, #tpu.memory_space<vmem>>, vector<16x128xf32>
      tpu.vector_store %arg11[%c0_69, %c0_70], %136 {strides = array<i32>} : memref<16x128xf32, #tpu.memory_space<vmem>>, vector<16x128xf32>,
    } else {
    }
    %c0 = arith.constant 0 : index
    %c0_1 = arith.constant 0 : index
    %c0_2 = arith.constant 0 : index
    %3 = vector.load %arg2[%c0, %c0_1, %c0_2] : memref<1x16x128xbf16, #tpu.memory_space<vmem>>, vector<1x16x128xbf16>
    %4 = vector.shape_cast %3 : vector<1x16x128xbf16> to vector<16x128xbf16>
    %5 = arith.extf %4 : vector<16x128xbf16> to vector<16x128xf32>
    %c16 = arith.constant 16 : index
    %c0_3 = arith.constant 0 : index
    %6 = vector.load %arg9[%c16, %c0_3] : memref<48x128xf32, #tpu.memory_space<vmem>>, vector<16x128xf32>
    tpu.vector_store %arg9[%c16, %c0_3], %5 {strides = array<i32>} : memref<48x128xf32, #tpu.memory_space<vmem>>, vector<16x128xf32>,
    %c0_4 = arith.constant 0 : index
    %c0_5 = arith.constant 0 : index
    %7 = vector.load %arg10[%c0_4, %c0_5] : memref<16x128xf32, #tpu.memory_space<vmem>>, vector<16x128xf32>
    %c0_6 = arith.constant 0 : index
    %c0_7 = arith.constant 0 : index
    %8 = vector.load %arg5[%c0_6, %c0_7] : memref<1x128xf32, #tpu.memory_space<vmem>>, vector<1x128xf32>
    %9 = vector.broadcast %8 : vector<1x128xf32> to vector<16x128xf32>
    %10 = arith.addf %7, %9 : vector<16x128xf32>
    %c11 = arith.constant 11 : index
    %c0_8 = arith.constant 0 : index
    %11 = vector.load %arg9[%c11, %c0_8] : memref<48x128xf32, #tpu.memory_space<vmem>>, vector<16x128xf32>
    %c0_9 = arith.constant 0 : index
    %c0_10 = arith.constant 0 : index
    %12 = vector.load %arg4[%c0_9, %c0_10] : memref<1x1152xbf16, #tpu.memory_space<vmem>>, vector<1x128xbf16>
    %13 = arith.extf %12 : vector<1x128xbf16> to vector<1x128xf32>
    %14 = vector.broadcast %13 : vector<1x128xf32> to vector<16x128xf32>
    %15 = arith.mulf %11, %14 : vector<16x128xf32>
    %c0_11 = arith.constant 0 : index
    %c0_12 = arith.constant 0 : index
    %c0_13 = arith.constant 0 : index
    %16 = vector.load %arg3[%c0_11, %c0_12, %c0_13] : memref<9x16x1xbf16, #tpu.memory_space<vmem>>, vector<1x16x1xbf16>
    %17 = vector.shape_cast %16 : vector<1x16x1xbf16> to vector<16x1xbf16>
    %18 = arith.extf %17 : vector<16x1xbf16> to vector<16x1xf32>
    %19 = vector.broadcast %18 : vector<16x1xf32> to vector<16x128xf32>
    %20 = arith.mulf %15, %19 : vector<16x128xf32>
    %21 = arith.addf %10, %20 : vector<16x128xf32>
    %c12 = arith.constant 12 : index
    %c0_14 = arith.constant 0 : index
    %22 = vector.load %arg9[%c12, %c0_14] : memref<48x128xf32, #tpu.memory_space<vmem>>, vector<16x128xf32>
    %c0_15 = arith.constant 0 : index
    %c128 = arith.constant 128 : index
    %23 = vector.load %arg4[%c0_15, %c128] : memref<1x1152xbf16, #tpu.memory_space<vmem>>, vector<1x128xbf16>
    %24 = arith.extf %23 : vector<1x128xbf16> to vector<1x128xf32>
    %25 = vector.broadcast %24 : vector<1x128xf32> to vector<16x128xf32>
    %26 = arith.mulf %22, %25 : vector<16x128xf32>
    %c1 = arith.constant 1 : index
    %c0_16 = arith.constant 0 : index
    %c0_17 = arith.constant 0 : index
    %27 = vector.load %arg3[%c1, %c0_16, %c0_17] : memref<9x16x1xbf16, #tpu.memory_space<vmem>>, vector<1x16x1xbf16>
    %28 = vector.shape_cast %27 : vector<1x16x1xbf16> to vector<16x1xbf16>
    %29 = arith.extf %28 : vector<16x1xbf16> to vector<16x1xf32>
    %30 = vector.broadcast %29 : vector<16x1xf32> to vector<16x128xf32>
    %31 = arith.mulf %26, %30 : vector<16x128xf32>
    %32 = arith.addf %21, %31 : vector<16x128xf32>
    %c13 = arith.constant 13 : index
    %c0_18 = arith.constant 0 : index
    %33 = vector.load %arg9[%c13, %c0_18] : memref<48x128xf32, #tpu.memory_space<vmem>>, vector<16x128xf32>
    %c0_19 = arith.constant 0 : index
    %c256 = arith.constant 256 : index
    %34 = vector.load %arg4[%c0_19, %c256] : memref<1x1152xbf16, #tpu.memory_space<vmem>>, vector<1x128xbf16>
    %35 = arith.extf %34 : vector<1x128xbf16> to vector<1x128xf32>
    %36 = vector.broadcast %35 : vector<1x128xf32> to vector<16x128xf32>
    %37 = arith.mulf %33, %36 : vector<16x128xf32>
    %c2 = arith.constant 2 : index
    %c0_20 = arith.constant 0 : index
    %c0_21 = arith.constant 0 : index
    %38 = vector.load %arg3[%c2, %c0_20, %c0_21] : memref<9x16x1xbf16, #tpu.memory_space<vmem>>, vector<1x16x1xbf16>
    %39 = vector.shape_cast %38 : vector<1x16x1xbf16> to vector<16x1xbf16>
    %40 = arith.extf %39 : vector<16x1xbf16> to vector<16x1xf32>
    %41 = vector.broadcast %40 : vector<16x1xf32> to vector<16x128xf32>
    %42 = arith.mulf %37, %41 : vector<16x128xf32>
    %43 = arith.addf %32, %42 : vector<16x128xf32>
    %c15 = arith.constant 15 : index
    %c0_22 = arith.constant 0 : index
    %44 = vector.load %arg9[%c15, %c0_22] : memref<48x128xf32, #tpu.memory_space<vmem>>, vector<16x128xf32>
    %c0_23 = arith.constant 0 : index
    %c384 = arith.constant 384 : index
    %45 = vector.load %arg4[%c0_23, %c384] : memref<1x1152xbf16, #tpu.memory_space<vmem>>, vector<1x128xbf16>
    %46 = arith.extf %45 : vector<1x128xbf16> to vector<1x128xf32>
    %47 = vector.broadcast %46 : vector<1x128xf32> to vector<16x128xf32>
    %48 = arith.mulf %44, %47 : vector<16x128xf32>
    %c3 = arith.constant 3 : index
    %c0_24 = arith.constant 0 : index
    %c0_25 = arith.constant 0 : index
    %49 = vector.load %arg3[%c3, %c0_24, %c0_25] : memref<9x16x1xbf16, #tpu.memory_space<vmem>>, vector<1x16x1xbf16>
    %50 = vector.shape_cast %49 : vector<1x16x1xbf16> to vector<16x1xbf16>
    %51 = arith.extf %50 : vector<16x1xbf16> to vector<16x1xf32>
    %52 = vector.broadcast %51 : vector<16x1xf32> to vector<16x128xf32>
    %53 = arith.mulf %48, %52 : vector<16x128xf32>
    %54 = arith.addf %43, %53 : vector<16x128xf32>
    %c16_26 = arith.constant 16 : index
    %c0_27 = arith.constant 0 : index
    %55 = vector.load %arg9[%c16_26, %c0_27] : memref<48x128xf32, #tpu.memory_space<vmem>>, vector<16x128xf32>
    %c0_28 = arith.constant 0 : index
    %c512 = arith.constant 512 : index
    %56 = vector.load %arg4[%c0_28, %c512] : memref<1x1152xbf16, #tpu.memory_space<vmem>>, vector<1x128xbf16>
    %57 = arith.extf %56 : vector<1x128xbf16> to vector<1x128xf32>
    %58 = vector.broadcast %57 : vector<1x128xf32> to vector<16x128xf32>
    %59 = arith.mulf %55, %58 : vector<16x128xf32>
    %60 = arith.addf %54, %59 : vector<16x128xf32>
    %c17 = arith.constant 17 : index
    %c0_29 = arith.constant 0 : index
    %61 = vector.load %arg9[%c17, %c0_29] : memref<48x128xf32, #tpu.memory_space<vmem>>, vector<16x128xf32>
    %c0_30 = arith.constant 0 : index
    %c640 = arith.constant 640 : index
    %62 = vector.load %arg4[%c0_30, %c640] : memref<1x1152xbf16, #tpu.memory_space<vmem>>, vector<1x128xbf16>
    %63 = arith.extf %62 : vector<1x128xbf16> to vector<1x128xf32>
    %64 = vector.broadcast %63 : vector<1x128xf32> to vector<16x128xf32>
    %65 = arith.mulf %61, %64 : vector<16x128xf32>
    %c5 = arith.constant 5 : index
    %c0_31 = arith.constant 0 : index
    %c0_32 = arith.constant 0 : index
    %66 = vector.load %arg3[%c5, %c0_31, %c0_32] : memref<9x16x1xbf16, #tpu.memory_space<vmem>>, vector<1x16x1xbf16>
    %67 = vector.shape_cast %66 : vector<1x16x1xbf16> to vector<16x1xbf16>
    %68 = arith.extf %67 : vector<16x1xbf16> to vector<16x1xf32>
    %69 = vector.broadcast %68 : vector<16x1xf32> to vector<16x128xf32>
    %70 = arith.mulf %65, %69 : vector<16x128xf32>
    %71 = arith.addf %60, %70 : vector<16x128xf32>
    %c19 = arith.constant 19 : index
    %c0_33 = arith.constant 0 : index
    %72 = vector.load %arg9[%c19, %c0_33] : memref<48x128xf32, #tpu.memory_space<vmem>>, vector<16x128xf32>
    %c0_34 = arith.constant 0 : index
    %c768 = arith.constant 768 : index
    %73 = vector.load %arg4[%c0_34, %c768] : memref<1x1152xbf16, #tpu.memory_space<vmem>>, vector<1x128xbf16>
    %74 = arith.extf %73 : vector<1x128xbf16> to vector<1x128xf32>
    %75 = vector.broadcast %74 : vector<1x128xf32> to vector<16x128xf32>
    %76 = arith.mulf %72, %75 : vector<16x128xf32>
    %c6 = arith.constant 6 : index
    %c0_35 = arith.constant 0 : index
    %c0_36 = arith.constant 0 : index
    %77 = vector.load %arg3[%c6, %c0_35, %c0_36] : memref<9x16x1xbf16, #tpu.memory_space<vmem>>, vector<1x16x1xbf16>
    %78 = vector.shape_cast %77 : vector<1x16x1xbf16> to vector<16x1xbf16>
    %79 = arith.extf %78 : vector<16x1xbf16> to vector<16x1xf32>
    %80 = vector.broadcast %79 : vector<16x1xf32> to vector<16x128xf32>
    %81 = arith.mulf %76, %80 : vector<16x128xf32>
    %82 = arith.addf %71, %81 : vector<16x128xf32>
    %c20 = arith.constant 20 : index
    %c0_37 = arith.constant 0 : index
    %83 = vector.load %arg9[%c20, %c0_37] : memref<48x128xf32, #tpu.memory_space<vmem>>, vector<16x128xf32>
    %c0_38 = arith.constant 0 : index
    %c896 = arith.constant 896 : index
    %84 = vector.load %arg4[%c0_38, %c896] : memref<1x1152xbf16, #tpu.memory_space<vmem>>, vector<1x128xbf16>
    %85 = arith.extf %84 : vector<1x128xbf16> to vector<1x128xf32>
    %86 = vector.broadcast %85 : vector<1x128xf32> to vector<16x128xf32>
    %87 = arith.mulf %83, %86 : vector<16x128xf32>
    %c7 = arith.constant 7 : index
    %c0_39 = arith.constant 0 : index
    %c0_40 = arith.constant 0 : index
    %88 = vector.load %arg3[%c7, %c0_39, %c0_40] : memref<9x16x1xbf16, #tpu.memory_space<vmem>>, vector<1x16x1xbf16>
    %89 = vector.shape_cast %88 : vector<1x16x1xbf16> to vector<16x1xbf16>
    %90 = arith.extf %89 : vector<16x1xbf16> to vector<16x1xf32>
    %91 = vector.broadcast %90 : vector<16x1xf32> to vector<16x128xf32>
    %92 = arith.mulf %87, %91 : vector<16x128xf32>
    %93 = arith.addf %82, %92 : vector<16x128xf32>
    %c21 = arith.constant 21 : index
    %c0_41 = arith.constant 0 : index
    %94 = vector.load %arg9[%c21, %c0_41] : memref<48x128xf32, #tpu.memory_space<vmem>>, vector<16x128xf32>
    %c0_42 = arith.constant 0 : index
    %c1024 = arith.constant 1024 : index
    %95 = vector.load %arg4[%c0_42, %c1024] : memref<1x1152xbf16, #tpu.memory_space<vmem>>, vector<1x128xbf16>
    %96 = arith.extf %95 : vector<1x128xbf16> to vector<1x128xf32>
    %97 = vector.broadcast %96 : vector<1x128xf32> to vector<16x128xf32>
    %98 = arith.mulf %94, %97 : vector<16x128xf32>
    %c8 = arith.constant 8 : index
    %c0_43 = arith.constant 0 : index
    %c0_44 = arith.constant 0 : index
    %99 = vector.load %arg3[%c8, %c0_43, %c0_44] : memref<9x16x1xbf16, #tpu.memory_space<vmem>>, vector<1x16x1xbf16>
    %100 = vector.shape_cast %99 : vector<1x16x1xbf16> to vector<16x1xbf16>
    %101 = arith.extf %100 : vector<16x1xbf16> to vector<16x1xf32>
    %102 = vector.broadcast %101 : vector<16x1xf32> to vector<16x128xf32>
    %103 = arith.mulf %98, %102 : vector<16x128xf32>
    %104 = arith.addf %93, %103 : vector<16x128xf32>
    %cst = arith.constant 1.000000e+00 : f32
    %105 = vector.broadcast %cst : f32 to vector<16x128xf32>
    %106 = arith.cmpf oge, %104, %105 : vector<16x128xf32>
    %cst_45 = arith.constant 0.000000e+00 : f32
    %107 = vector.broadcast %cst_45 : f32 to vector<16x128xf32>
    %108 = arith.select %106, %107, %104 : vector<16x128xi1>, vector<16x128xf32>
    %c0_46 = arith.constant 0 : index
    %c0_47 = arith.constant 0 : index
    %109 = vector.load %arg10[%c0_46, %c0_47] : memref<16x128xf32, #tpu.memory_space<vmem>>, vector<16x128xf32>
    tpu.vector_store %arg10[%c0_46, %c0_47], %108 {strides = array<i32>} : memref<16x128xf32, #tpu.memory_space<vmem>>, vector<16x128xf32>,
    %110 = arith.extui %106 : vector<16x128xi1> to vector<16x128xi32>
    %111 = arith.sitofp %110 : vector<16x128xi32> to vector<16x128xf32>
    %112 = arith.truncf %111 : vector<16x128xf32> to vector<16x128xbf16>
    %113 = arith.addf %112, %4 : vector<16x128xbf16>
    %c0_48 = arith.constant 0 : index
    %c0_49 = arith.constant 0 : index
    %114 = vector.load %arg6[%c0_48, %c0_49] : memref<128x128xbf16, #tpu.memory_space<vmem>>, vector<128x128xbf16>
    %cst_50 = arith.constant dense<0.000000e+00> : vector<16x128xf32>
    %115 = tpu.matmul %113, %114, %cst_50 {dimension_numbers = #tpu.dot_dimension_numbers<[1], [0], [0], [1], [0, 0, 1, 1], [], []>} : vector<16x128xbf16>, vector<128x128xbf16>, vector<16x128xf32> -> vector<16x128xf32>
    %c0_51 = arith.constant 0 : index
    %c0_52 = arith.constant 0 : index
    %116 = vector.load %arg7[%c0_51, %c0_52] : memref<1x128xf32, #tpu.memory_space<vmem>>, vector<1x128xf32>
    %117 = vector.broadcast %116 : vector<1x128xf32> to vector<16x128xf32>
    %118 = arith.addf %115, %117 : vector<16x128xf32>
    %c0_53 = arith.constant 0 : index
    %c0_54 = arith.constant 0 : index
    %119 = vector.load %arg11[%c0_53, %c0_54] : memref<16x128xf32, #tpu.memory_space<vmem>>, vector<16x128xf32>
    %120 = arith.addf %119, %118 : vector<16x128xf32>
    %cst_55 = arith.constant 1.000000e+00 : f32
    %121 = vector.broadcast %cst_55 : f32 to vector<16x128xf32>
    %122 = arith.cmpf oge, %120, %121 : vector<16x128xf32>
    %cst_56 = arith.constant 0.000000e+00 : f32
    %123 = vector.broadcast %cst_56 : f32 to vector<16x128xf32>
    %124 = arith.select %122, %123, %120 : vector<16x128xi1>, vector<16x128xf32>
    %c0_57 = arith.constant 0 : index
    %c0_58 = arith.constant 0 : index
    %125 = vector.load %arg11[%c0_57, %c0_58] : memref<16x128xf32, #tpu.memory_space<vmem>>, vector<16x128xf32>
    tpu.vector_store %arg11[%c0_57, %c0_58], %124 {strides = array<i32>} : memref<16x128xf32, #tpu.memory_space<vmem>>, vector<16x128xf32>,
    %126 = arith.extui %122 : vector<16x128xi1> to vector<16x128xi32>
    %127 = arith.sitofp %126 : vector<16x128xi32> to vector<16x128xf32>
    %128 = arith.truncf %127 : vector<16x128xf32> to vector<16x128xbf16>
    %c0_59 = arith.constant 0 : index
    %c0_60 = arith.constant 0 : index
    %c0_61 = arith.constant 0 : index
    %129 = vector.load %arg8[%c0_59, %c0_60, %c0_61] : memref<1x16x128xbf16, #tpu.memory_space<vmem>>, vector<1x16x128xbf16>
    %130 = vector.shape_cast %129 : vector<1x16x128xbf16> to vector<16x128xbf16>
    %131 = vector.shape_cast %128 : vector<16x128xbf16> to vector<1x16x128xbf16>
    tpu.vector_store %arg8[%c0_59, %c0_60, %c0_61], %131 {strides = array<i32>} : memref<1x16x128xbf16, #tpu.memory_space<vmem>>, vector<1x16x128xbf16>,
    return
  }
  func.func @transform_0(%arg0: i32, %arg1: i32) -> (i32, i32, i32) {
    %c0_i32 = arith.constant 0 : i32
    %c0_i32_0 = arith.constant 0 : i32
    return %arg1, %arg0, %c0_i32 : i32, i32, i32
  }
  func.func @transform_1(%arg0: i32, %arg1: i32) -> (i32, i32, i32) {
    %c0_i32 = arith.constant 0 : i32
    %c0_i32_0 = arith.constant 0 : i32
    %c0_i32_1 = arith.constant 0 : i32
    return %c0_i32, %arg0, %c0_i32_0 : i32, i32, i32
  }
  func.func @transform_2(%arg0: i32, %arg1: i32) -> (i32, i32) {
    %c0_i32 = arith.constant 0 : i32
    %c0_i32_0 = arith.constant 0 : i32
    %c0_i32_1 = arith.constant 0 : i32
    return %c0_i32, %c0_i32_0 : i32, i32
  }
  func.func @transform_3(%arg0: i32, %arg1: i32) -> (i32, i32) {
    %c0_i32 = arith.constant 0 : i32
    %c0_i32_0 = arith.constant 0 : i32
    %c0_i32_1 = arith.constant 0 : i32
    return %c0_i32, %c0_i32_0 : i32, i32
  }
  func.func @transform_4(%arg0: i32, %arg1: i32) -> (i32, i32) {
    %c0_i32 = arith.constant 0 : i32
    %c0_i32_0 = arith.constant 0 : i32
    %c0_i32_1 = arith.constant 0 : i32
    return %c0_i32, %c0_i32_0 : i32, i32
  }
  func.func @transform_5(%arg0: i32, %arg1: i32) -> (i32, i32) {
    %c0_i32 = arith.constant 0 : i32
    %c0_i32_0 = arith.constant 0 : i32
    %c0_i32_1 = arith.constant 0 : i32
    return %c0_i32, %c0_i32_0 : i32, i32
  }
  func.func @transform_6(%arg0: i32, %arg1: i32) -> (i32, i32, i32) {
    %c0_i32 = arith.constant 0 : i32
    %c0_i32_0 = arith.constant 0 : i32
    return %arg1, %arg0, %c0_i32 : i32, i32, i32
  }
}

</mosaic_0001>

<llo_original>
// kernel: spiking_convmixer_forward.4
$region0: #{spiking_convmixer_forward.4}
  #allocation0 [shape = 'u32[]', space=smem, size = 0x4, offset = 0x4, fixed_abs, tag = 'smem constant byte address 0x4 - core index']
  #allocation1 [shape = 'u32[144,128]{1,0:T(1,128)}', space=vmem, size = 0x12000, scoped, tag = 'internal scratch']
  %s0 = inlined_call_operand.vmem [shape: bf16[32,48], index: 0, kind: input, shape index: {}]
  %s1 = inlined_call_operand.vmem [shape: bf16[48,128], index: 1, kind: input, shape index: {}]
  %s2 = inlined_call_operand.vmem [shape: f32[1,128], index: 2, kind: input, shape index: {}]
  %s3 = inlined_call_operand.vmem [shape: bf16[4,32,128], index: 3, kind: output, shape index: {}]
  %s4 = sld [smem:[#allocation0]]
  $region82: #{spiking_convmixer_forward.4} parent=0
    _
  %s6 = ssub.s32 1, %s4
  %s7 = scalar_select 0, %s6, %s4
  $region1: #{spiking_convmixer_forward.4} parent=0
    #allocation2 [shape = 'u8[32768]{0}', space=vmem, size = 0x8000, scoped, tag = 'output window, operand 0']
    loop: start=0, step=1, limit=4
    $region2: #{spiking_convmixer_forward.4} parent=1 // loop_pre_header
      _
    $region3: #{spiking_convmixer_forward.4} parent=1 // loop_header
      %s9 = sphi 0, %s13
      %p10 = scmp.ge.s32.totalorder %s9, 4
      %s19 = sphi 0, %s21
      %s22 = sphi 0, %s19
      %s23 = sphi 0, %s22
      %s39 = sphi 0, %s23
      %s43 = sphi 0, %s43
      %s45 = sphi 0, %s43
      %s46 = sphi 0, %s45
      %s60 = sphi 0, %s46
      %s64 = sphi 0, %s64
      %s66 = sphi 0, %s64
      %s67 = sphi 0, %s66
      %s81 = sphi 0, %s67
      %s87 = sphi 0, %s89
      %s90 = sphi 0, %s87
      %s91 = sphi 0, %s90
      %s107 = sphi 0, %s91
    $region4: #{spiking_convmixer_forward.4} parent=1 // loop_header_branch
      %12 = sbr.rel (%p10) target = $region8
    $region5: #{spiking_convmixer_forward.4} parent=1 // loop_body
      %s14 = ssub.s32 %s9, 1
      %s15 = ssub.s32 %s9, 2
      %s16 = sadd.s32 %s9, 1
      %s17 = ssub.s32 %s9, %s16
      %p18 = scmp.eq.s32.totalorder %s17, 0
      %s20 = sadd.s32 %s19, 1
      %s21 = scalar_select %p18, %s19, %s20
      %p24 = pneg %p18
      %p25 = scmp.eq.s32.totalorder %s9, 1
      %p26 = por %p24, %p25
      %p27 = scmp.ne.s32.totalorder %s19, %s22
      %p28 = scmp.eq.s32.totalorder %s9, 0
      %p29 = por %p27, %p28
      %p30 = scmp.ne.s32.totalorder %s19, %s22
      %p31 = scmp.eq.s32.totalorder %s14, 1
      %p32 = por %p30, %p31
      %p33 = scmp.ne.s32.totalorder %s22, %s23
      %p34 = scmp.eq.s32.totalorder %s14, 0
      %p35 = por %p33, %p34
      %p36 = scmp.ne.s32.totalorder %s22, %s23
      %p37 = scmp.eq.s32.totalorder %s15, 1
      %p38 = por %p36, %p37
      %p40 = scmp.ne.s32.totalorder %s23, %s39
      %p41 = scmp.eq.s32.totalorder %s15, 0
      %p42 = por %p40, %p41
      %s44 = sadd.s32 %s43, 1
      %p47 = scmp.eq.s32.totalorder %s9, 1
      %p48 = scmp.ne.s32.totalorder %s43, %s45
      %p49 = scmp.eq.s32.totalorder %s9, 0
      %p50 = por %p48, %p49
      %p51 = scmp.ne.s32.totalorder %s43, %s45
      %p52 = scmp.eq.s32.totalorder %s14, 1
      %p53 = por %p51, %p52
      %p54 = scmp.ne.s32.totalorder %s45, %s46
      %p55 = scmp.eq.s32.totalorder %s14, 0
      %p56 = por %p54, %p55
      %p57 = scmp.ne.s32.totalorder %s45, %s46
      %p58 = scmp.eq.s32.totalorder %s15, 1
      %p59 = por %p57, %p58
      %p61 = scmp.ne.s32.totalorder %s46, %s60
      %p62 = scmp.eq.s32.totalorder %s15, 0
      %p63 = por %p61, %p62
      %s65 = sadd.s32 %s64, 1
      %p68 = scmp.eq.s32.totalorder %s9, 1
      %p69 = scmp.ne.s32.totalorder %s64, %s66
      %p70 = scmp.eq.s32.totalorder %s9, 0
      %p71 = por %p69, %p70
      %p72 = scmp.ne.s32.totalorder %s64, %s66
      %p73 = scmp.eq.s32.totalorder %s14, 1
      %p74 = por %p72, %p73
      %p75 = scmp.ne.s32.totalorder %s66, %s67
      %p76 = scmp.eq.s32.totalorder %s14, 0
      %p77 = por %p75, %p76
      %p78 = scmp.ne.s32.totalorder %s66, %s67
      %p79 = scmp.eq.s32.totalorder %s15, 1
      %p80 = por %p78, %p79
      %p82 = scmp.ne.s32.totalorder %s67, %s81
      %p83 = scmp.eq.s32.totalorder %s15, 0
      %p84 = por %p82, %p83
      %s85 = ssub.s32 %s9, %s16
      %p86 = scmp.eq.s32.totalorder %s85, 0
      %s88 = sadd.s32 %s87, 1
      %s89 = scalar_select %p86, %s87, %s88
      %p92 = pneg %p86
      %p93 = scmp.eq.s32.totalorder %s9, 1
      %p94 = por %p92, %p93
      %p95 = scmp.ne.s32.totalorder %s87, %s90
      %p96 = scmp.eq.s32.totalorder %s9, 0
      %p97 = por %p95, %p96
      %p98 = scmp.ne.s32.totalorder %s87, %s90
      %p99 = scmp.eq.s32.totalorder %s14, 1
      %p100 = por %p98, %p99
      %p101 = scmp.ne.s32.totalorder %s90, %s91
      %p102 = scmp.eq.s32.totalorder %s14, 0
      %p103 = por %p101, %p102
      %p104 = scmp.ne.s32.totalorder %s90, %s91
      %p105 = scmp.eq.s32.totalorder %s15, 1
      %p106 = por %p104, %p105
      %p108 = scmp.ne.s32.totalorder %s91, %s107
      %p109 = scmp.eq.s32.totalorder %s15, 0
      %p110 = por %p108, %p109
      %p111 = scmp.le.s32.totalorder 1, %s9
      %p112 = scmp.lt.s32.totalorder %s9, 3
      %p113 = pnand %p111, %p112
      %p114 = pneg %p113
      // Predicated region
      $region9: #{spiking_convmixer_forward.4} parent=5 // pred_check
        _
      $region10: #{spiking_convmixer_forward.4} parent=5 // pred_check_branch
        %116 = sbr.rel (%p113) target = $region12
      $region11: #{spiking_convmixer_forward.4} parent=5 // pred_region
        %s117 = ssub.s32 %s9, 1
        // Predicated region
        $region13: #{spiking_convmixer_forward.4} parent=11 // pred_check
          %p118 = pneg %p56
        $region14: #{spiking_convmixer_forward.4} parent=11 // pred_check_branch
          %120 = sbr.rel (%p118) target = $region16
        $region15: #{spiking_convmixer_forward.4} parent=11 // pred_region
          _
        $region16: #{spiking_convmixer_forward.4} parent=11 // pred_fallthru
          _
        // Predicated region
        $region17: #{spiking_convmixer_forward.4} parent=11 // pred_check
          %p121 = pneg %p77
        $region18: #{spiking_convmixer_forward.4} parent=11 // pred_check_branch
          %123 = sbr.rel (%p121) target = $region20
        $region19: #{spiking_convmixer_forward.4} parent=11 // pred_region
          _
        $region20: #{spiking_convmixer_forward.4} parent=11 // pred_fallthru
          _
      $region12: #{spiking_convmixer_forward.4} parent=5 // pred_fallthru
        _
      %p124 = scmp.lt.s32.totalorder %s9, 2
      // Predicated region
      $region21: #{spiking_convmixer_forward.4} parent=5 // pred_check
        %p125 = pneg %p124
      $region22: #{spiking_convmixer_forward.4} parent=5 // pred_check_branch
        %127 = sbr.rel (%p125) target = $region24
      $region23: #{spiking_convmixer_forward.4} parent=5 // pred_region
        // Predicated region
        $region25: #{spiking_convmixer_forward.4} parent=23 // pred_check
          %p128 = pneg %p29
        $region26: #{spiking_convmixer_forward.4} parent=23 // pred_check_branch
          %130 = sbr.rel (%p128) target = $region28
        $region27: #{spiking_convmixer_forward.4} parent=23 // pred_region
          %s131 = smul.u32 2, %s9
          %p132 = scmp.lt.s32.totalorder %s131, 3
          %s133 = scalar_select %p132, %s131, 3
          %s134 = smul.addr %s133, 4
          %s135 = scalar_lea.vmem %s0, %s134
          %s136 = smul.u32 2, %s9
        $region28: #{spiking_convmixer_forward.4} parent=23 // pred_fallthru
          _
      $region24: #{spiking_convmixer_forward.4} parent=5 // pred_fallthru
        _
      %p137 = scmp.le.s32.totalorder 1, %s9
      %p138 = scmp.lt.s32.totalorder %s9, 3
      %p139 = pnand %p137, %p138
      %p140 = pneg %p139
      // Predicated region
      $region29: #{spiking_convmixer_forward.4} parent=5 // pred_check
        _
      $region30: #{spiking_convmixer_forward.4} parent=5 // pred_check_branch
        %142 = sbr.rel (%p139) target = $region32
      $region31: #{spiking_convmixer_forward.4} parent=5 // pred_region
        %s143 = ssub.s32 %s9, 1
        %s144 = smul.u32 2, %s14
        %p145 = scmp.lt.s32.totalorder %s144, 3
        %s146 = scalar_select %p145, %s144, 3
        %s147 = smul.addr %s146, 4
        %s148 = scalar_lea.vmem %s0, %s147
        %p149 = pneg %p35
        %p150 = pneg %p32
        %p151 = pneg %p56
        %p152 = pneg %p53
        %p153 = pneg %p77
        %p154 = pneg %p74
        %p155 = pneg %p103
        %p156 = pneg %p100
        %s157 = sand.u32 %s90, 1
        %s158 = sand.u32 %s90, 1
        %s159 = smul.addr %s158, 32
        %s160 = scalar_lea.vmem [#allocation2], %s159
        %s161 = smul.u32 2, %s14
        %p162 = scmp.lt.s32.totalorder %s161, 3
        %s163 = scalar_select %p162, %s161, 3
        %s164 = smul.addr %s163, 4
        %s165 = scalar_lea.vmem %s0, %s164
        %s166 = smul.u32 2, %s14
        %s167 = smul.u32 2, %s14
        %v169 = vld [vmem:[%s165] sm:$0xf]
        %v170 = vld [vmem:[%s165 + $0x4] sm:$0xf]
        %v171 = vld [vmem:[%s1] sm:$0xf]
        %v172 = vld [vmem:[%s1 + $0x4] sm:$0xf]
        %v173 = vld [vmem:[%s1 + $0x8] sm:$0xf]
        %v174 = vld [vmem:[%s1 + $0xc] sm:$0xf]
        %v175 = vld [vmem:[%s1 + $0x10] sm:$0xf]
        %v176 = vld [vmem:[%s1 + $0x14] sm:$0xf]
        %v177 = vld [vmem:[%s2] sm:$0x1]
        %v179 = vlaneseq
        %v180 = vshrl.u32 %v179, 7
        %v181 = vsub.s32 0, %v180
        %v182 = vrot.slane %v177, %v181
        %v186 = vunpack.c.l.b16 %v169
        %v187 = vunpack.c.l.b16 %v170
        %v188 = vpack.c.b16 %v187, %v186
        %v195 = vunpack.c.l.b16 %v171
        %v196 = vunpack.c.l.b16 %v172
        %v197 = vunpack.c.l.b16 %v173
        %v198 = vunpack.c.l.b16 %v174
        %v199 = vunpack.c.l.b16 %v175
        %v200 = vunpack.c.l.b16 %v176
        %v201 = vpack.c.b16 %v196, %v195
        %v202 = vpack.c.b16 %v198, %v197
        %v203 = vpack.c.b16 %v200, %v199
        %vm207 = vcmask 392192
        %v209 = vsel %vm207, %v188, 0
        %211 = vmatprep.subr.bf16.mxu0 0
        %212 = vmatpush1.bf16.msra.mxu0 %v201
        %213 = vmatprep.subr.bf16.mxu0 0
        %214 = vmatpush1.bf16.msra.mxu0 %v202
        %215 = vmatprep.subr.bf16.mxu0 0
        %216 = vmatpush1.bf16.msra.mxu0 %v203
        %217 = vmatprep.subr.bf16.mxu0 0
        %218 = vmatpush1.bf16.msra.mxu0 0
        %219 = vmatprep.subr.bf16.mxu0 0
        %220 = vmatpush1.bf16.msra.mxu0 0
        %221 = vmatprep.subr.bf16.mxu0 0
        %222 = vmatpush1.bf16.msra.mxu0 0
        %223 = vmatprep.subr.bf16.mxu0 0
        %224 = vmatpush1.bf16.msra.mxu0 0
        %225 = vmatprep.subr.bf16.mxu0 0
        %226 = vmatpush1.bf16.msra.mxu0 0
        %227 = vmatprep.subr.bf16.mxu0 0
        %228 = vmatpush1.bf16.msra.mxu0 0
        %229 = vmatprep.subr.bf16.mxu0 0
        %230 = vmatpush1.bf16.msra.mxu0 0
        %231 = vmatprep.subr.bf16.mxu0 0
        %232 = vmatpush1.bf16.msra.mxu0 0
        %233 = vmatprep.subr.bf16.mxu0 0
        %234 = vmatpush1.bf16.msra.mxu0 0
        %235 = vmatprep.subr.bf16.mxu0 0
        %236 = vmatpush1.bf16.msra.mxu0 0
        %237 = vmatprep.subr.bf16.mxu0 0
        %238 = vmatpush1.bf16.msra.mxu0 0
        %239 = vmatprep.subr.bf16.mxu0 0
        %240 = vmatpush1.bf16.msra.mxu0 0
        %241 = vmatprep.subr.bf16.mxu0 0
        %242 = vmatpush1.bf16.msra.mxu0 0
        %243 = vmatprep.mubr.bf16.mxu0 0
        %244 = vmatmul.mubr.bf16.gmra.mrb[0].mxu0 %v209
        %v245 = vpop.f32.mrb[0].mxu0
        %v246 = vadd.f32 %v182, %v245
        %v247 = vpop.f32.mrb[0].mxu0
        %v248 = vpop.f32.mrb[0].mxu0
        %v249 = vadd.f32 %v182, %v248
        %v250 = vpop.f32.mrb[0].mxu0
        %251 = vdwg.mxu0
        %v252 = vadd.f32 %v246, 0.0
        %v253 = vadd.f32 %v249, 0.0
        %vm254 = vcmp.ge.f32.partialorder %v252, 1.0
        %vm255 = vcmp.ge.f32.partialorder %v253, 1.0
        %v256 = vsel %vm254, 1, 0
        %v257 = vsel %vm255, 1, 0
        %v258 = vcvt.s32.f32 %v256
        %v259 = vcvt.s32.f32 %v257
        %v260 = vpack.c.bf16 %v259, %v258
        %v262 = vunpack.c.l.b16 %v260
        %v263 = vunpack.c.h.b16 %v260
        %v264 = vpack.c.b16 %v262, %v262
        %v265 = vpack.c.b16 %v263, %v263
        %268 = vst [vmem:[%s160] sm:$0xf] %v264
        %269 = vst [vmem:[%s160 + $0x4] sm:$0xf] %v265
        %v270 = vsel %vm254, 0.0, %v252
        %v271 = vsel %vm255, 0.0, %v253
        %v272 = vadd.f32 %v270, %v246
        %v273 = vadd.f32 %v271, %v249
        %vm274 = vcmp.ge.f32.partialorder %v272, 1.0
        %vm275 = vcmp.ge.f32.partialorder %v273, 1.0
        %v276 = vsel %vm274, 1, 0
        %v277 = vsel %vm275, 1, 0
        %v278 = vcvt.s32.f32 %v276
        %v279 = vcvt.s32.f32 %v277
        %v280 = vpack.c.bf16 %v279, %v278
        %v282 = vunpack.c.l.b16 %v280
        %v283 = vunpack.c.h.b16 %v280
        %v284 = vpack.c.b16 %v282, %v282
        %v285 = vpack.c.b16 %v283, %v283
        %s288 = scalar_lea.vmem %s160, 8 [#allocation2]
        %289 = vst [vmem:[%s288] sm:$0xf] %v284
        %290 = vst [vmem:[%s288 + $0x4] sm:$0xf] %v285
        %v291 = vsel %vm274, 0.0, %v272
        %v292 = vsel %vm275, 0.0, %v273
        %v293 = vadd.f32 %v291, %v246
        %v294 = vadd.f32 %v292, %v249
        %vm295 = vcmp.ge.f32.partialorder %v293, 1.0
        %vm296 = vcmp.ge.f32.partialorder %v294, 1.0
        %v297 = vsel %vm295, 1, 0
        %v298 = vsel %vm296, 1, 0
        %v299 = vcvt.s32.f32 %v297
        %v300 = vcvt.s32.f32 %v298
        %v301 = vpack.c.bf16 %v300, %v299
        %v303 = vunpack.c.l.b16 %v301
        %v304 = vunpack.c.h.b16 %v301
        %v305 = vpack.c.b16 %v303, %v303
        %v306 = vpack.c.b16 %v304, %v304
        %s309 = scalar_lea.vmem %s160, 16 [#allocation2]
        %310 = vst [vmem:[%s309] sm:$0xf] %v305
        %311 = vst [vmem:[%s309 + $0x4] sm:$0xf] %v306
        %v312 = vsel %vm295, 0.0, %v293
        %v313 = vsel %vm296, 0.0, %v294
        %v314 = vadd.f32 %v312, %v246
        %v315 = vadd.f32 %v313, %v249
        %vm316 = vcmp.ge.f32.partialorder %v314, 1.0
        %vm317 = vcmp.ge.f32.partialorder %v315, 1.0
        %v318 = vsel %vm316, 1, 0
        %v319 = vsel %vm317, 1, 0
        %v320 = vcvt.s32.f32 %v318
        %v321 = vcvt.s32.f32 %v319
        %v322 = vpack.c.bf16 %v321, %v320
        %v324 = vunpack.c.l.b16 %v322
        %v325 = vunpack.c.h.b16 %v322
        %v326 = vpack.c.b16 %v324, %v324
        %v327 = vpack.c.b16 %v325, %v325
        %s330 = scalar_lea.vmem %s160, 24 [#allocation2]
        %331 = vst [vmem:[%s330] sm:$0xf] %v326
        %332 = vst [vmem:[%s330 + $0x4] sm:$0xf] %v327
        %s333 = sand.u32 %s90, 1
        %s334 = sand.u32 %s90, 1
        %s335 = smul.addr %s334, 32
        %s336 = scalar_lea.vmem [#allocation2], %s335
        // Predicated region
        $region33: #{spiking_convmixer_forward.4} parent=31 // pred_check
          %p337 = pneg %p100
        $region34: #{spiking_convmixer_forward.4} parent=31 // pred_check_branch
          %339 = sbr.rel (%p337) target = $region36
        $region35: #{spiking_convmixer_forward.4} parent=31 // pred_region
          %s340 = smul.u32 2, %s14
          %s341 = smul.addr %s340, 4
          %s342 = scalar_lea.vmem %s3, %s341
          // Predicated region
          $region37: #{spiking_convmixer_forward.4} parent=35 // pred_check
            _
          $region38: #{spiking_convmixer_forward.4} parent=35 // pred_check_branch
            %344 = sbr.rel (0) target = $region40
          $region39: #{spiking_convmixer_forward.4} parent=35 // pred_region
            // Predicated region
            $region41: #{spiking_convmixer_forward.4} parent=39 // pred_check
              _
            $region42: #{spiking_convmixer_forward.4} parent=39 // pred_check_branch
              %346 = sbr.rel target = $region44
            $region43: #{spiking_convmixer_forward.4} parent=39 // pred_region
              // Predicated region
              $region56: #{spiking_convmixer_forward.4} parent=43 // pred_check
                _
              $region57: #{spiking_convmixer_forward.4} parent=43 // pred_check_branch
                %375 = sbr.rel (0) target = $region59
              $region58: #{spiking_convmixer_forward.4} parent=43 // pred_region
                loop: start=0, step=1, limit=1
                $region60: #{spiking_convmixer_forward.4} parent=58 // loop_pre_header
                  _
                $region61: #{spiking_convmixer_forward.4} parent=58 // loop_header
                  %s377 = sphi 0, %s381
                  %p378 = scmp.ge.s32.totalorder %s377, 1
                  %s382 = sphi %s336, %s336
                  %s383 = sphi %s342, %s342
                $region62: #{spiking_convmixer_forward.4} parent=58 // loop_header_branch
                  %380 = sbr.rel (%p378) target = $region66
                $region63: #{spiking_convmixer_forward.4} parent=58 // loop_body
                  _
                $region64: #{spiking_convmixer_forward.4} parent=58 // loop_footer
                  %s381 = sadd.s32 1, %s377
                $region65: #{spiking_convmixer_forward.4} parent=58 // loop_footer_branch
                  %376 = sbr.rel target = $region61
                $region66: #{spiking_convmixer_forward.4} parent=58 // loop_exit
                  _
                loop: start=0, step=1, limit=1
                $region67: #{spiking_convmixer_forward.4} parent=58 // loop_pre_header
                  _
                $region68: #{spiking_convmixer_forward.4} parent=58 // loop_header
                  %s386 = sphi 0, %s390
                  %p387 = scmp.ge.s32.totalorder %s386, 1
                  %s391 = sphi %s336, %s336
                  %s392 = sphi %s342, %s342
                $region69: #{spiking_convmixer_forward.4} parent=58 // loop_header_branch
                  %389 = sbr.rel (%p387) target = $region73
                $region70: #{spiking_convmixer_forward.4} parent=58 // loop_body
                  %v393 = vld [vmem:[%s391] sm:$0xf]
                  %394 = vst [vmem:[%s392] sm:$0xf] %v393
                  %v395 = vld [vmem:[%s391 + $0x4] sm:$0xf]
                  %396 = vst [vmem:[%s392 + $0x4] sm:$0xf] %v395
                  %v397 = vld [vmem:[%s391 + $0x8] sm:$0xf]
                  %398 = vst [vmem:[%s392 + $0x10] sm:$0xf] %v397
                  %v399 = vld [vmem:[%s391 + $0xc] sm:$0xf]
                  %400 = vst [vmem:[%s392 + $0x14] sm:$0xf] %v399
                  %v401 = vld [vmem:[%s391 + $0x10] sm:$0xf]
                  %402 = vst [vmem:[%s392 + $0x20] sm:$0xf] %v401
                  %v403 = vld [vmem:[%s391 + $0x14] sm:$0xf]
                  %404 = vst [vmem:[%s392 + $0x24] sm:$0xf] %v403
                  %v405 = vld [vmem:[%s391 + $0x18] sm:$0xf]
                  %406 = vst [vmem:[%s392 + $0x30] sm:$0xf] %v405
                  %v407 = vld [vmem:[%s391 + $0x1c] sm:$0xf]
                  %408 = vst [vmem:[%s392 + $0x34] sm:$0xf] %v407
                $region71: #{spiking_convmixer_forward.4} parent=58 // loop_footer
                  %s390 = sadd.s32 1, %s386
                $region72: #{spiking_convmixer_forward.4} parent=58 // loop_footer_branch
                  %385 = sbr.rel target = $region68
                $region73: #{spiking_convmixer_forward.4} parent=58 // loop_exit
                  _
              $region59: #{spiking_convmixer_forward.4} parent=43 // pred_fallthru
                _
            $region44: #{spiking_convmixer_forward.4} parent=39 // pred_fallthru
              _
            // Predicated region
            $region45: #{spiking_convmixer_forward.4} parent=39 // pred_check
              _
            $region46: #{spiking_convmixer_forward.4} parent=39 // pred_check_branch
              %348 = sbr.rel (0) target = $region48
            $region47: #{spiking_convmixer_forward.4} parent=39 // pred_region
              loop: start=0, step=1, limit=1
              $region49: #{spiking_convmixer_forward.4} parent=47 // loop_pre_header
                _
              $region50: #{spiking_convmixer_forward.4} parent=47 // loop_header
                %s351 = sphi 0, %s355
                %p352 = scmp.ge.s32.totalorder %s351, 1
                %s356 = sphi %s336, %s336
                %s357 = sphi %s342, %s342
              $region51: #{spiking_convmixer_forward.4} parent=47 // loop_header_branch
                %354 = sbr.rel (%p352) target = $region55
              $region52: #{spiking_convmixer_forward.4} parent=47 // loop_body
                %v358 = vld [vmem:[%s356] sm:$0xf]
                %359 = vst [vmem:[%s357] sm:$0xf] %v358
                %v360 = vld [vmem:[%s356 + $0x4] sm:$0xf]
                %361 = vst [vmem:[%s357 + $0x4] sm:$0xf] %v360
                %v362 = vld [vmem:[%s356 + $0x8] sm:$0xf]
                %363 = vst [vmem:[%s357 + $0x10] sm:$0xf] %v362
                %v364 = vld [vmem:[%s356 + $0xc] sm:$0xf]
                %365 = vst [vmem:[%s357 + $0x14] sm:$0xf] %v364
                %v366 = vld [vmem:[%s356 + $0x10] sm:$0xf]
                %367 = vst [vmem:[%s357 + $0x20] sm:$0xf] %v366
                %v368 = vld [vmem:[%s356 + $0x14] sm:$0xf]
                %369 = vst [vmem:[%s357 + $0x24] sm:$0xf] %v368
                %v370 = vld [vmem:[%s356 + $0x18] sm:$0xf]
                %371 = vst [vmem:[%s357 + $0x30] sm:$0xf] %v370
                %v372 = vld [vmem:[%s356 + $0x1c] sm:$0xf]
                %373 = vst [vmem:[%s357 + $0x34] sm:$0xf] %v372
              $region53: #{spiking_convmixer_forward.4} parent=47 // loop_footer
                %s355 = sadd.s32 1, %s351
              $region54: #{spiking_convmixer_forward.4} parent=47 // loop_footer_branch
                %350 = sbr.rel target = $region50
              $region55: #{spiking_convmixer_forward.4} parent=47 // loop_exit
                _
            $region48: #{spiking_convmixer_forward.4} parent=39 // pred_fallthru
              _
          $region40: #{spiking_convmixer_forward.4} parent=35 // pred_fallthru
            _
          %409 = vnop
        $region36: #{spiking_convmixer_forward.4} parent=31 // pred_fallthru
          _
      $region32: #{spiking_convmixer_forward.4} parent=5 // pred_fallthru
        _
      %p410 = scmp.le.s32.totalorder 2, %s9
      // Predicated region
      $region74: #{spiking_convmixer_forward.4} parent=5 // pred_check
        %p411 = pneg %p410
      $region75: #{spiking_convmixer_forward.4} parent=5 // pred_check_branch
        %413 = sbr.rel (%p411) target = $region77
      $region76: #{spiking_convmixer_forward.4} parent=5 // pred_region
        %s414 = ssub.s32 %s9, 2
        // Predicated region
        $region78: #{spiking_convmixer_forward.4} parent=76 // pred_check
          %p415 = pneg %p106
        $region79: #{spiking_convmixer_forward.4} parent=76 // pred_check_branch
          %417 = sbr.rel (%p415) target = $region81
        $region80: #{spiking_convmixer_forward.4} parent=76 // pred_region
          %s418 = sand.u32 %s91, 1
          %s419 = sand.u32 %s91, 1
          %s420 = smul.addr %s419, 32
          %s421 = scalar_lea.vmem [#allocation2], %s420
        $region81: #{spiking_convmixer_forward.4} parent=76 // pred_fallthru
          _
      $region77: #{spiking_convmixer_forward.4} parent=5 // pred_fallthru
        _
    $region6: #{spiking_convmixer_forward.4} parent=1 // loop_footer
      %s13 = sadd.s32 1, %s9
    $region7: #{spiking_convmixer_forward.4} parent=1 // loop_footer_branch
      %8 = sbr.rel target = $region3
    $region8: #{spiking_convmixer_forward.4} parent=1 // loop_exit
      _

// kernel: spiking_convmixer_forward.7
$region0: #{spiking_convmixer_forward.7}
  #allocation0 [shape = 'u32[]', space=smem, size = 0x4, offset = 0x4, fixed_abs, tag = 'smem constant byte address 0x4 - core index']
  #allocation1 [shape = 'u32[144,128]{1,0:T(1,128)}', space=vmem, size = 0x12000, scoped, tag = 'internal scratch']
  #allocation2 [shape = 'f32[2,128]{1,0:T(2,128)}', space=vmem, size = 0x400, scoped, tag = 'scratch operand']
  %s0 = inlined_call_operand.vmem [shape: bf16[4,2,16,128], index: 0, kind: input, shape index: {}]
  %s1 = inlined_call_operand.vmem [shape: f32[128,128], index: 1, kind: input, shape index: {}]
  %s2 = inlined_call_operand.vmem [shape: f32[1,128], index: 2, kind: input, shape index: {}]
  %s3 = inlined_call_operand.hbm [shape: f32[2,128], index: 3, kind: output, shape index: {}]
  %s4 = sld [smem:[#allocation0]]
  $region53: #{spiking_convmixer_forward.7} parent=0
    _
  %s6 = ssub.s32 1, %s4
  %s7 = scalar_select 0, %s6, %s4
  $region1: #{spiking_convmixer_forward.7} parent=0
    #allocation3 [shape = 'u8[1024]{0}', space=vmem, size = 0x400, scoped, tag = 'output window, operand 0, single buffered']
    #allocation4 [shape = 's32[2]{0}', space=sflag, size = 0x8, scoped, tag = 'scoped memory for spiking_convmixer_forward.7']
    %8 = vsyncpa [#allocation4], 0
    loop: start=0, step=1, limit=6
    $region2: #{spiking_convmixer_forward.7} parent=1 // loop_pre_header
      _
    $region3: #{spiking_convmixer_forward.7} parent=1 // loop_header
      %s10 = sphi 0, %s14
      %p11 = scmp.ge.s32.totalorder %s10, 6
      %s17 = sphi 0, %s29
      %s18 = sphi 0, %s25
      %s19 = sphi 0, %s17
      %s20 = sphi 0, %s18
      %s21 = sphi 0, %s19
      %s22 = sphi 0, %s20
      %s34 = sphi 0, %s36
      %s37 = sphi 0, %s34
      %s38 = sphi 0, %s37
      %s54 = sphi 0, %s38
      %s58 = sphi 0, %s58
      %s60 = sphi 0, %s58
      %s61 = sphi 0, %s60
      %s75 = sphi 0, %s61
      %s79 = sphi 0, %s79
      %s81 = sphi 0, %s79
      %s82 = sphi 0, %s81
      %s96 = sphi 0, %s82
      %s102 = sphi 0, %s104
      %s105 = sphi 0, %s102
      %s106 = sphi 0, %s105
      %s122 = sphi 0, %s106
    $region4: #{spiking_convmixer_forward.7} parent=1 // loop_header_branch
      %13 = sbr.rel (%p11) target = $region8
    $region5: #{spiking_convmixer_forward.7} parent=1 // loop_body
      %s15 = ssub.s32 %s10, 1
      %s16 = ssub.s32 %s10, 2
      %s23 = sadd.s32 1, %s18
      %p24 = scmp.ge.s32.totalorder %s23, 4
      %s25 = scalar_select %p24, 0, %s23
      %s26 = sadd.s32 1, %s17
      %s27 = scalar_select %p24, %s26, %s17
      %p28 = scmp.ge.s32.totalorder %s27, 1
      %s29 = scalar_select %p28, 0, %s27
      %s30 = ssub.s32 %s18, %s25
      %s31 = ssub.s32 %s17, %s29
      %s32 = sor.u32 %s30, %s31
      %p33 = scmp.eq.s32.totalorder %s32, 0
      %s35 = sadd.s32 %s34, 1
      %s36 = scalar_select %p33, %s34, %s35
      %p39 = pneg %p33
      %p40 = scmp.eq.s32.totalorder %s10, 3
      %p41 = por %p39, %p40
      %p42 = scmp.ne.s32.totalorder %s34, %s37
      %p43 = scmp.eq.s32.totalorder %s10, 0
      %p44 = por %p42, %p43
      %p45 = scmp.ne.s32.totalorder %s34, %s37
      %p46 = scmp.eq.s32.totalorder %s15, 3
      %p47 = por %p45, %p46
      %p48 = scmp.ne.s32.totalorder %s37, %s38
      %p49 = scmp.eq.s32.totalorder %s15, 0
      %p50 = por %p48, %p49
      %p51 = scmp.ne.s32.totalorder %s37, %s38
      %p52 = scmp.eq.s32.totalorder %s16, 3
      %p53 = por %p51, %p52
      %p55 = scmp.ne.s32.totalorder %s38, %s54
      %p56 = scmp.eq.s32.totalorder %s16, 0
      %p57 = por %p55, %p56
      %s59 = sadd.s32 %s58, 1
      %p62 = scmp.eq.s32.totalorder %s10, 3
      %p63 = scmp.ne.s32.totalorder %s58, %s60
      %p64 = scmp.eq.s32.totalorder %s10, 0
      %p65 = por %p63, %p64
      %p66 = scmp.ne.s32.totalorder %s58, %s60
      %p67 = scmp.eq.s32.totalorder %s15, 3
      %p68 = por %p66, %p67
      %p69 = scmp.ne.s32.totalorder %s60, %s61
      %p70 = scmp.eq.s32.totalorder %s15, 0
      %p71 = por %p69, %p70
      %p72 = scmp.ne.s32.totalorder %s60, %s61
      %p73 = scmp.eq.s32.totalorder %s16, 3
      %p74 = por %p72, %p73
      %p76 = scmp.ne.s32.totalorder %s61, %s75
      %p77 = scmp.eq.s32.totalorder %s16, 0
      %p78 = por %p76, %p77
      %s80 = sadd.s32 %s79, 1
      %p83 = scmp.eq.s32.totalorder %s10, 3
      %p84 = scmp.ne.s32.totalorder %s79, %s81
      %p85 = scmp.eq.s32.totalorder %s10, 0
      %p86 = por %p84, %p85
      %p87 = scmp.ne.s32.totalorder %s79, %s81
      %p88 = scmp.eq.s32.totalorder %s15, 3
      %p89 = por %p87, %p88
      %p90 = scmp.ne.s32.totalorder %s81, %s82
      %p91 = scmp.eq.s32.totalorder %s15, 0
      %p92 = por %p90, %p91
      %p93 = scmp.ne.s32.totalorder %s81, %s82
      %p94 = scmp.eq.s32.totalorder %s16, 3
      %p95 = por %p93, %p94
      %p97 = scmp.ne.s32.totalorder %s82, %s96
      %p98 = scmp.eq.s32.totalorder %s16, 0
      %p99 = por %p97, %p98
      %s100 = ssub.s32 %s17, %s29
      %p101 = scmp.eq.s32.totalorder %s100, 0
      %s103 = sadd.s32 %s102, 1
      %s104 = scalar_select %p101, %s102, %s103
      %p107 = pneg %p101
      %p108 = scmp.eq.s32.totalorder %s10, 3
      %p109 = por %p107, %p108
      %p110 = scmp.ne.s32.totalorder %s102, %s105
      %p111 = scmp.eq.s32.totalorder %s10, 0
      %p112 = por %p110, %p111
      %p113 = scmp.ne.s32.totalorder %s102, %s105
      %p114 = scmp.eq.s32.totalorder %s15, 3
      %p115 = por %p113, %p114
      %p116 = scmp.ne.s32.totalorder %s105, %s106
      %p117 = scmp.eq.s32.totalorder %s15, 0
      %p118 = por %p116, %p117
      %p119 = scmp.ne.s32.totalorder %s105, %s106
      %p120 = scmp.eq.s32.totalorder %s16, 3
      %p121 = por %p119, %p120
      %p123 = scmp.ne.s32.totalorder %s106, %s122
      %p124 = scmp.eq.s32.totalorder %s16, 0
      %p125 = por %p123, %p124
      %p126 = scmp.le.s32.totalorder 1, %s10
      %p127 = scmp.lt.s32.totalorder %s10, 5
      %p128 = pnand %p126, %p127
      %p129 = pneg %p128
      // Predicated region
      $region9: #{spiking_convmixer_forward.7} parent=5 // pred_check
        _
      $region10: #{spiking_convmixer_forward.7} parent=5 // pred_check_branch
        %131 = sbr.rel (%p128) target = $region12
      $region11: #{spiking_convmixer_forward.7} parent=5 // pred_region
        %s132 = ssub.s32 %s10, 1
        // Predicated region
        $region13: #{spiking_convmixer_forward.7} parent=11 // pred_check
          %p133 = pneg %p71
        $region14: #{spiking_convmixer_forward.7} parent=11 // pred_check_branch
          %135 = sbr.rel (%p133) target = $region16
        $region15: #{spiking_convmixer_forward.7} parent=11 // pred_region
          _
        $region16: #{spiking_convmixer_forward.7} parent=11 // pred_fallthru
          _
        // Predicated region
        $region17: #{spiking_convmixer_forward.7} parent=11 // pred_check
          %p136 = pneg %p92
        $region18: #{spiking_convmixer_forward.7} parent=11 // pred_check_branch
          %138 = sbr.rel (%p136) target = $region20
        $region19: #{spiking_convmixer_forward.7} parent=11 // pred_region
          _
        $region20: #{spiking_convmixer_forward.7} parent=11 // pred_fallthru
          _
      $region12: #{spiking_convmixer_forward.7} parent=5 // pred_fallthru
        _
      %p139 = scmp.lt.s32.totalorder %s10, 4
      // Predicated region
      $region21: #{spiking_convmixer_forward.7} parent=5 // pred_check
        %p140 = pneg %p139
      $region22: #{spiking_convmixer_forward.7} parent=5 // pred_check_branch
        %142 = sbr.rel (%p140) target = $region24
      $region23: #{spiking_convmixer_forward.7} parent=5 // pred_region
        // Predicated region
        $region25: #{spiking_convmixer_forward.7} parent=23 // pred_check
          %p143 = pneg %p44
        $region26: #{spiking_convmixer_forward.7} parent=23 // pred_check_branch
          %145 = sbr.rel (%p143) target = $region28
        $region27: #{spiking_convmixer_forward.7} parent=23 // pred_region
          %s146 = smul.u32 2, %s17
          %p147 = scmp.lt.s32.totalorder %s18, 3
          %s148 = scalar_select %p147, %s18, 3
          %p149 = scmp.lt.s32.totalorder %s146, 1
          %s150 = scalar_select %p149, %s146, 1
          %s151 = smul.addr %s150, 2
          %s152 = smul.addr %s148, 4
          %s153 = sadd.s32 %s151, %s152
          %s154 = smul.addr %s153, 4
          %s155 = scalar_lea.vmem %s0, %s154
          %s156 = smul.u32 2, %s17
        $region28: #{spiking_convmixer_forward.7} parent=23 // pred_fallthru
          _
      $region24: #{spiking_convmixer_forward.7} parent=5 // pred_fallthru
        _
      %p157 = scmp.le.s32.totalorder 1, %s10
      %p158 = scmp.lt.s32.totalorder %s10, 5
      %p159 = pnand %p157, %p158
      %p160 = pneg %p159
      // Predicated region
      $region29: #{spiking_convmixer_forward.7} parent=5 // pred_check
        _
      $region30: #{spiking_convmixer_forward.7} parent=5 // pred_check_branch
        %162 = sbr.rel (%p159) target = $region32
      $region31: #{spiking_convmixer_forward.7} parent=5 // pred_region
        %s163 = ssub.s32 %s10, 1
        %s164 = smul.u32 2, %s19
        %p165 = scmp.lt.s32.totalorder %s20, 3
        %s166 = scalar_select %p165, %s20, 3
        %p167 = scmp.lt.s32.totalorder %s164, 1
        %s168 = scalar_select %p167, %s164, 1
        %s169 = smul.addr %s168, 2
        %s170 = smul.addr %s166, 4
        %s171 = sadd.s32 %s169, %s170
        %s172 = smul.addr %s171, 4
        %s173 = scalar_lea.vmem %s0, %s172
        %p174 = pneg %p50
        %p175 = pneg %p47
        %p176 = pneg %p71
        %p177 = pneg %p68
        %p178 = pneg %p92
        %p179 = pneg %p89
        %p180 = pneg %p118
        %p181 = pneg %p115
        %s182 = smul.u32 2, %s19
        %p183 = scmp.lt.s32.totalorder %s20, 3
        %s184 = scalar_select %p183, %s20, 3
        %p185 = scmp.lt.s32.totalorder %s182, 1
        %s186 = scalar_select %p185, %s182, 1
        %s187 = smul.addr %s186, 2
        %s188 = smul.addr %s184, 4
        %s189 = sadd.s32 %s187, %s188
        %s190 = smul.addr %s189, 4
        %s191 = scalar_lea.vmem %s0, %s190
        %s192 = smul.u32 2, %s19
        %p193 = scmp.eq.s32.totalorder %s20, 0
        // Predicated region
        $region33: #{spiking_convmixer_forward.7} parent=31 // pred_check
          %p194 = pneg %p193
        $region34: #{spiking_convmixer_forward.7} parent=31 // pred_check_branch
          %196 = sbr.rel (%p194) target = $region36
        $region35: #{spiking_convmixer_forward.7} parent=31 // pred_region
          %197 = vst [vmem:[#allocation2] sm:$0x3] 0.0
        $region36: #{spiking_convmixer_forward.7} parent=31 // pred_fallthru
          _
        %v198 = vld [vmem:[#allocation2] sm:$0x3]
        %v199 = vld [vmem:[%s191] sm:$0xf]
        %v200 = vld [vmem:[%s191 + $0x4] sm:$0xf]
        %v201 = vld [vmem:[%s191 + $0x8] sm:$0xf]
        %v202 = vld [vmem:[%s191 + $0xc] sm:$0xf]
        %v203 = vunpack.c.l.bf16 %v199
        %v204 = vunpack.c.l.bf16 %v200
        %v205 = vunpack.c.l.bf16 %v201
        %v206 = vunpack.c.l.bf16 %v202
        %v207 = vadd.f32 %v203, %v204
        %v208 = vrot.slane %v207, 4
        %v209 = vadd.f32 %v207, %v208
        %v210 = vrot.slane %v209, 2
        %v211 = vadd.f32 %v209, %v210
        %v212 = vrot.slane %v211, 1
        %v213 = vadd.f32 %v211, %v212
        %v214 = vadd.f32 %v205, %v206
        %v215 = vrot.slane %v214, 4
        %v216 = vadd.f32 %v214, %v215
        %v217 = vrot.slane %v216, 2
        %v218 = vadd.f32 %v216, %v217
        %v219 = vrot.slane %v218, 1
        %v220 = vadd.f32 %v218, %v219
        %vm223 = vcmask 1041409
        %v224 = vsel %vm223, %v220, %v213
        %v226 = vadd.f32 %v198, %v224
        %227 = vst [vmem:[#allocation2] sm:$0x3] %v226
        %p228 = scmp.eq.s32.totalorder %s20, 3
        // Predicated region
        $region37: #{spiking_convmixer_forward.7} parent=31 // pred_check
          %p229 = pneg %p228
        $region38: #{spiking_convmixer_forward.7} parent=31 // pred_check_branch
          %231 = sbr.rel (%p229) target = $region40
        $region39: #{spiking_convmixer_forward.7} parent=31 // pred_region
          %v232 = vld [vmem:[#allocation2] sm:$0x3]
          %v233 = vmul.f32 %v232, 0.015625
          %v234 = vld [vmem:[%s1] sm:$0xff]
          %v235 = vld [vmem:[%s1 + $0x8] sm:$0xff]
          %v236 = vld [vmem:[%s1 + $0x10] sm:$0xff]
          %v237 = vld [vmem:[%s1 + $0x18] sm:$0xff]
          %v238 = vld [vmem:[%s1 + $0x20] sm:$0xff]
          %v239 = vld [vmem:[%s1 + $0x28] sm:$0xff]
          %v240 = vld [vmem:[%s1 + $0x30] sm:$0xff]
          %v241 = vld [vmem:[%s1 + $0x38] sm:$0xff]
          %v242 = vld [vmem:[%s1 + $0x40] sm:$0xff]
          %v243 = vld [vmem:[%s1 + $0x48] sm:$0xff]
          %v244 = vld [vmem:[%s1 + $0x50] sm:$0xff]
          %v245 = vld [vmem:[%s1 + $0x58] sm:$0xff]
          %v246 = vld [vmem:[%s1 + $0x60] sm:$0xff]
          %v247 = vld [vmem:[%s1 + $0x68] sm:$0xff]
          %v248 = vld [vmem:[%s1 + $0x70] sm:$0xff]
          %v249 = vld [vmem:[%s1 + $0x78] sm:$0xff]
          %v250 = vld [vmem:[%s2] sm:$0x1]
          %v252 = vlaneseq
          %v253 = vshrl.u32 %v252, 7
          %v254 = vsub.s32 0, %v253
          %v255 = vrot.slane %v250, %v254
          %257 = vmatprep.subr.mxu0 0.0
          %258 = vmatpush1.msra.mxu0 %v234
          %259 = vmatprep.subr.mxu0 0.0
          %260 = vmatpush1.msra.mxu0 %v235
          %261 = vmatprep.subr.mxu0 0.0
          %262 = vmatpush1.msra.mxu0 %v236
          %263 = vmatprep.subr.mxu0 0.0
          %264 = vmatpush1.msra.mxu0 %v237
          %265 = vmatprep.subr.mxu0 0.0
          %266 = vmatpush1.msra.mxu0 %v238
          %267 = vmatprep.subr.mxu0 0.0
          %268 = vmatpush1.msra.mxu0 %v239
          %269 = vmatprep.subr.mxu0 0.0
          %270 = vmatpush1.msra.mxu0 %v240
          %271 = vmatprep.subr.mxu0 0.0
          %272 = vmatpush1.msra.mxu0 %v241
          %273 = vmatprep.subr.mxu0 0.0
          %274 = vmatpush1.msra.mxu0 %v242
          %275 = vmatprep.subr.mxu0 0.0
          %276 = vmatpush1.msra.mxu0 %v243
          %277 = vmatprep.subr.mxu0 0.0
          %278 = vmatpush1.msra.mxu0 %v244
          %279 = vmatprep.subr.mxu0 0.0
          %280 = vmatpush1.msra.mxu0 %v245
          %281 = vmatprep.subr.mxu0 0.0
          %282 = vmatpush1.msra.mxu0 %v246
          %283 = vmatprep.subr.mxu0 0.0
          %284 = vmatpush1.msra.mxu0 %v247
          %285 = vmatprep.subr.mxu0 0.0
          %286 = vmatpush1.msra.mxu0 %v248
          %287 = vmatprep.subr.mxu0 0.0
          %288 = vmatpush1.msra.mxu0 %v249
          %289 = vmatprep.subr.mxu0 0.0
          %290 = vmatpush1.msra.mxu0 0.0
          %291 = vmatprep.subr.mxu0 0.0
          %292 = vmatpush1.msra.mxu0 0.0
          %293 = vmatprep.subr.mxu0 0.0
          %294 = vmatpush1.msra.mxu0 0.0
          %295 = vmatprep.subr.mxu0 0.0
          %296 = vmatpush1.msra.mxu0 0.0
          %297 = vmatprep.subr.mxu0 0.0
          %298 = vmatpush1.msra.mxu0 0.0
          %299 = vmatprep.subr.mxu0 0.0
          %300 = vmatpush1.msra.mxu0 0.0
          %301 = vmatprep.subr.mxu0 0.0
          %302 = vmatpush1.msra.mxu0 0.0
          %303 = vmatprep.subr.mxu0 0.0
          %304 = vmatpush1.msra.mxu0 0.0
          %305 = vmatprep.subr.mxu0 0.0
          %306 = vmatpush1.msra.mxu0 0.0
          %307 = vmatprep.subr.mxu0 0.0
          %308 = vmatpush1.msra.mxu0 0.0
          %309 = vmatprep.subr.mxu0 0.0
          %310 = vmatpush1.msra.mxu0 0.0
          %311 = vmatprep.subr.mxu0 0.0
          %312 = vmatpush1.msra.mxu0 0.0
          %313 = vmatprep.subr.mxu0 0.0
          %314 = vmatpush1.msra.mxu0 0.0
          %315 = vmatprep.subr.mxu0 0.0
          %316 = vmatpush1.msra.mxu0 0.0
          %317 = vmatprep.subr.mxu0 0.0
          %318 = vmatpush1.msra.mxu0 0.0
          %319 = vmatprep.subr.mxu0 0.0
          %320 = vmatpush1.msra.mxu0 0.0
          %321 = vmatprep.mubr.f32.mxu0 0.0
          %322 = vmatmul.mubr.f32.gmra.mrb[0].mxu0 %v233
          %v323 = vpop.f32.mrb[0].mxu0
          %v324 = vadd.f32 %v255, %v323
          %v325 = vpop.f32.mrb[0].mxu0
          %326 = vdwg.mxu0
          %327 = vst [vmem:[#allocation3] sm:$0x3] %v324
        $region40: #{spiking_convmixer_forward.7} parent=31 // pred_fallthru
          _
        // Predicated region
        $region41: #{spiking_convmixer_forward.7} parent=31 // pred_check
          %p328 = pneg %p115
        $region42: #{spiking_convmixer_forward.7} parent=31 // pred_check_branch
          %330 = sbr.rel (%p328) target = $region44
        $region43: #{spiking_convmixer_forward.7} parent=31 // pred_region
          %s332 = ssub.s32 32, 32
          %333 = vsyncadd [#allocation4], %s332
          %s334 = smul.addr %s19, 32
          %s335 = scalar_lea.hbm %s3, %s334
          %s337 = sshll.u32 [#allocation3], 4
          %s338 = int_to_ptr.vmem [resolvable:$true] %s337
          %340 = dma.vmem_to_hbm [thread:$0]  %s338, 32, %s335, [#allocation4]
        $region44: #{spiking_convmixer_forward.7} parent=31 // pred_fallthru
          _
        // Predicated region
        $region45: #{spiking_convmixer_forward.7} parent=31 // pred_check
          %p341 = pneg %p115
        $region46: #{spiking_convmixer_forward.7} parent=31 // pred_check_branch
          %343 = sbr.rel (%p341) target = $region48
        $region47: #{spiking_convmixer_forward.7} parent=31 // pred_region
          %344 = dma.done [#allocation4], 32
        $region48: #{spiking_convmixer_forward.7} parent=31 // pred_fallthru
          _
      $region32: #{spiking_convmixer_forward.7} parent=5 // pred_fallthru
        _
      %p345 = scmp.le.s32.totalorder 2, %s10
      // Predicated region
      $region49: #{spiking_convmixer_forward.7} parent=5 // pred_check
        %p346 = pneg %p345
      $region50: #{spiking_convmixer_forward.7} parent=5 // pred_check_branch
        %348 = sbr.rel (%p346) target = $region52
      $region51: #{spiking_convmixer_forward.7} parent=5 // pred_region
        %s349 = ssub.s32 %s10, 2
      $region52: #{spiking_convmixer_forward.7} parent=5 // pred_fallthru
        _
    $region6: #{spiking_convmixer_forward.7} parent=1 // loop_footer
      %s14 = sadd.s32 1, %s10
    $region7: #{spiking_convmixer_forward.7} parent=1 // loop_footer_branch
      %9 = sbr.rel target = $region3
    $region8: #{spiking_convmixer_forward.7} parent=1 // loop_exit
      _
    %350 = vsyncpa [#allocation4], 1
    %s351 = scalar_lea.sflag [#allocation4], 1
    %352 = vsyncpa %s351, 1

// kernel: spiking_convmixer_forward.5
$region0: #{spiking_convmixer_forward.5}
  #allocation0 [shape = 'u32[]', space=smem, size = 0x4, offset = 0x4, fixed_abs, tag = 'smem constant byte address 0x4 - core index']
  #allocation1 [shape = 'u32[144,128]{1,0:T(1,128)}', space=vmem, size = 0x12000, scoped, tag = 'internal scratch']
  #allocation2 [shape = 'bf16[48,128]{1,0:T(16,128)(2,1)}', space=vmem, size = 0x3000, scoped, tag = 'scratch operand']
  #allocation3 [shape = 'f32[16,128]{1,0:T(8,128)}', space=vmem, size = 0x2000, scoped, tag = 'scratch operand']
  #allocation4 [shape = 'f32[16,128]{1,0:T(8,128)}', space=vmem, size = 0x2000, scoped, tag = 'scratch operand']
  %s0 = inlined_call_operand.vmem [shape: bf16[4,32,128], index: 0, kind: input, shape index: {}]
  %s1 = inlined_call_operand.vmem [shape: bf16[9,32,1], index: 1, kind: input, shape index: {}]
  %s2 = inlined_call_operand.vmem [shape: bf16[1,1152], index: 2, kind: input, shape index: {}]
  %s3 = inlined_call_operand.vmem [shape: f32[1,128], index: 3, kind: input, shape index: {}]
  %s4 = inlined_call_operand.vmem [shape: bf16[128,128], index: 4, kind: input, shape index: {}]
  %s5 = inlined_call_operand.vmem [shape: f32[1,128], index: 5, kind: input, shape index: {}]
  %s6 = inlined_call_operand.vmem [shape: bf16[4,32,128], index: 6, kind: output, shape index: {}]
  %s7 = sld [smem:[#allocation0]]
  $region102: #{spiking_convmixer_forward.5} parent=0
    _
  %s9 = ssub.s32 1, %s7
  %s10 = scalar_select 0, %s9, %s7
  $region1: #{spiking_convmixer_forward.5} parent=0
    #allocation5 [shape = 'u8[73728]{0}', space=vmem, size = 0x12000, scoped, tag = 'input window, operand 1']
    loop: start=0, step=1, limit=10
    $region2: #{spiking_convmixer_forward.5} parent=1 // loop_pre_header
      _
    $region3: #{spiking_convmixer_forward.5} parent=1 // loop_header
      %s12 = sphi 0, %s16
      %p13 = scmp.ge.s32.totalorder %s12, 10
      %s19 = sphi 0, %s31
      %s20 = sphi 0, %s27
      %s21 = sphi 0, %s19
      %s22 = sphi 0, %s20
      %s23 = sphi 0, %s21
      %s24 = sphi 0, %s22
      %s36 = sphi 0, %s38
      %s39 = sphi 0, %s36
      %s40 = sphi 0, %s39
      %s56 = sphi 0, %s40
      %s62 = sphi 0, %s64
      %s65 = sphi 0, %s62
      %s66 = sphi 0, %s65
      %s82 = sphi 0, %s66
      %s86 = sphi 0, %s86
      %s88 = sphi 0, %s86
      %s89 = sphi 0, %s88
      %s103 = sphi 0, %s89
      %s107 = sphi 0, %s107
      %s109 = sphi 0, %s107
      %s110 = sphi 0, %s109
      %s124 = sphi 0, %s110
      %s128 = sphi 0, %s128
      %s130 = sphi 0, %s128
      %s131 = sphi 0, %s130
      %s145 = sphi 0, %s131
      %s149 = sphi 0, %s149
      %s151 = sphi 0, %s149
      %s152 = sphi 0, %s151
      %s166 = sphi 0, %s152
      %s174 = sphi 0, %s176
      %s177 = sphi 0, %s174
      %s178 = sphi 0, %s177
      %s194 = sphi 0, %s178
    $region4: #{spiking_convmixer_forward.5} parent=1 // loop_header_branch
      %15 = sbr.rel (%p13) target = $region8
    $region5: #{spiking_convmixer_forward.5} parent=1 // loop_body
      %s17 = ssub.s32 %s12, 1
      %s18 = ssub.s32 %s12, 2
      %s25 = sadd.s32 1, %s20
      %p26 = scmp.ge.s32.totalorder %s25, 4
      %s27 = scalar_select %p26, 0, %s25
      %s28 = sadd.s32 1, %s19
      %s29 = scalar_select %p26, %s28, %s19
      %p30 = scmp.ge.s32.totalorder %s29, 2
      %s31 = scalar_select %p30, 0, %s29
      %s32 = ssub.s32 %s20, %s27
      %s33 = ssub.s32 %s19, %s31
      %s34 = sor.u32 %s32, %s33
      %p35 = scmp.eq.s32.totalorder %s34, 0
      %s37 = sadd.s32 %s36, 1
      %s38 = scalar_select %p35, %s36, %s37
      %p41 = pneg %p35
      %p42 = scmp.eq.s32.totalorder %s12, 7
      %p43 = por %p41, %p42
      %p44 = scmp.ne.s32.totalorder %s36, %s39
      %p45 = scmp.eq.s32.totalorder %s12, 0
      %p46 = por %p44, %p45
      %p47 = scmp.ne.s32.totalorder %s36, %s39
      %p48 = scmp.eq.s32.totalorder %s17, 7
      %p49 = por %p47, %p48
      %p50 = scmp.ne.s32.totalorder %s39, %s40
      %p51 = scmp.eq.s32.totalorder %s17, 0
      %p52 = por %p50, %p51
      %p53 = scmp.ne.s32.totalorder %s39, %s40
      %p54 = scmp.eq.s32.totalorder %s18, 7
      %p55 = por %p53, %p54
      %p57 = scmp.ne.s32.totalorder %s40, %s56
      %p58 = scmp.eq.s32.totalorder %s18, 0
      %p59 = por %p57, %p58
      %s60 = ssub.s32 %s19, %s31
      %p61 = scmp.eq.s32.totalorder %s60, 0
      %s63 = sadd.s32 %s62, 1
      %s64 = scalar_select %p61, %s62, %s63
      %p67 = pneg %p61
      %p68 = scmp.eq.s32.totalorder %s12, 7
      %p69 = por %p67, %p68
      %p70 = scmp.ne.s32.totalorder %s62, %s65
      %p71 = scmp.eq.s32.totalorder %s12, 0
      %p72 = por %p70, %p71
      %p73 = scmp.ne.s32.totalorder %s62, %s65
      %p74 = scmp.eq.s32.totalorder %s17, 7
      %p75 = por %p73, %p74
      %p76 = scmp.ne.s32.totalorder %s65, %s66
      %p77 = scmp.eq.s32.totalorder %s17, 0
      %p78 = por %p76, %p77
      %p79 = scmp.ne.s32.totalorder %s65, %s66
      %p80 = scmp.eq.s32.totalorder %s18, 7
      %p81 = por %p79, %p80
      %p83 = scmp.ne.s32.totalorder %s66, %s82
      %p84 = scmp.eq.s32.totalorder %s18, 0
      %p85 = por %p83, %p84
      %s87 = sadd.s32 %s86, 1
      %p90 = scmp.eq.s32.totalorder %s12, 7
      %p91 = scmp.ne.s32.totalorder %s86, %s88
      %p92 = scmp.eq.s32.totalorder %s12, 0
      %p93 = por %p91, %p92
      %p94 = scmp.ne.s32.totalorder %s86, %s88
      %p95 = scmp.eq.s32.totalorder %s17, 7
      %p96 = por %p94, %p95
      %p97 = scmp.ne.s32.totalorder %s88, %s89
      %p98 = scmp.eq.s32.totalorder %s17, 0
      %p99 = por %p97, %p98
      %p100 = scmp.ne.s32.totalorder %s88, %s89
      %p101 = scmp.eq.s32.totalorder %s18, 7
      %p102 = por %p100, %p101
      %p104 = scmp.ne.s32.totalorder %s89, %s103
      %p105 = scmp.eq.s32.totalorder %s18, 0
      %p106 = por %p104, %p105
      %s108 = sadd.s32 %s107, 1
      %p111 = scmp.eq.s32.totalorder %s12, 7
      %p112 = scmp.ne.s32.totalorder %s107, %s109
      %p113 = scmp.eq.s32.totalorder %s12, 0
      %p114 = por %p112, %p113
      %p115 = scmp.ne.s32.totalorder %s107, %s109
      %p116 = scmp.eq.s32.totalorder %s17, 7
      %p117 = por %p115, %p116
      %p118 = scmp.ne.s32.totalorder %s109, %s110
      %p119 = scmp.eq.s32.totalorder %s17, 0
      %p120 = por %p118, %p119
      %p121 = scmp.ne.s32.totalorder %s109, %s110
      %p122 = scmp.eq.s32.totalorder %s18, 7
      %p123 = por %p121, %p122
      %p125 = scmp.ne.s32.totalorder %s110, %s124
      %p126 = scmp.eq.s32.totalorder %s18, 0
      %p127 = por %p125, %p126
      %s129 = sadd.s32 %s128, 1
      %p132 = scmp.eq.s32.totalorder %s12, 7
      %p133 = scmp.ne.s32.totalorder %s128, %s130
      %p134 = scmp.eq.s32.totalorder %s12, 0
      %p135 = por %p133, %p134
      %p136 = scmp.ne.s32.totalorder %s128, %s130
      %p137 = scmp.eq.s32.totalorder %s17, 7
      %p138 = por %p136, %p137
      %p139 = scmp.ne.s32.totalorder %s130, %s131
      %p140 = scmp.eq.s32.totalorder %s17, 0
      %p141 = por %p139, %p140
      %p142 = scmp.ne.s32.totalorder %s130, %s131
      %p143 = scmp.eq.s32.totalorder %s18, 7
      %p144 = por %p142, %p143
      %p146 = scmp.ne.s32.totalorder %s131, %s145
      %p147 = scmp.eq.s32.totalorder %s18, 0
      %p148 = por %p146, %p147
      %s150 = sadd.s32 %s149, 1
      %p153 = scmp.eq.s32.totalorder %s12, 7
      %p154 = scmp.ne.s32.totalorder %s149, %s151
      %p155 = scmp.eq.s32.totalorder %s12, 0
      %p156 = por %p154, %p155
      %p157 = scmp.ne.s32.totalorder %s149, %s151
      %p158 = scmp.eq.s32.totalorder %s17, 7
      %p159 = por %p157, %p158
      %p160 = scmp.ne.s32.totalorder %s151, %s152
      %p161 = scmp.eq.s32.totalorder %s17, 0
      %p162 = por %p160, %p161
      %p163 = scmp.ne.s32.totalorder %s151, %s152
      %p164 = scmp.eq.s32.totalorder %s18, 7
      %p165 = por %p163, %p164
      %p167 = scmp.ne.s32.totalorder %s152, %s166
      %p168 = scmp.eq.s32.totalorder %s18, 0
      %p169 = por %p167, %p168
      %s170 = ssub.s32 %s20, %s27
      %s171 = ssub.s32 %s19, %s31
      %s172 = sor.u32 %s170, %s171
      %p173 = scmp.eq.s32.totalorder %s172, 0
      %s175 = sadd.s32 %s174, 1
      %s176 = scalar_select %p173, %s174, %s175
      %p179 = pneg %p173
      %p180 = scmp.eq.s32.totalorder %s12, 7
      %p181 = por %p179, %p180
      %p182 = scmp.ne.s32.totalorder %s174, %s177
      %p183 = scmp.eq.s32.totalorder %s12, 0
      %p184 = por %p182, %p183
      %p185 = scmp.ne.s32.totalorder %s174, %s177
      %p186 = scmp.eq.s32.totalorder %s17, 7
      %p187 = por %p185, %p186
      %p188 = scmp.ne.s32.totalorder %s177, %s178
      %p189 = scmp.eq.s32.totalorder %s17, 0
      %p190 = por %p188, %p189
      %p191 = scmp.ne.s32.totalorder %s177, %s178
      %p192 = scmp.eq.s32.totalorder %s18, 7
      %p193 = por %p191, %p192
      %p195 = scmp.ne.s32.totalorder %s178, %s194
      %p196 = scmp.eq.s32.totalorder %s18, 0
      %p197 = por %p195, %p196
      %p198 = scmp.le.s32.totalorder 1, %s12
      %p199 = scmp.lt.s32.totalorder %s12, 9
      %p200 = pnand %p198, %p199
      %p201 = pneg %p200
      // Predicated region
      $region9: #{spiking_convmixer_forward.5} parent=5 // pred_check
        _
      $region10: #{spiking_convmixer_forward.5} parent=5 // pred_check_branch
        %203 = sbr.rel (%p200) target = $region12
      $region11: #{spiking_convmixer_forward.5} parent=5 // pred_region
        %s204 = ssub.s32 %s12, 1
        // Predicated region
        $region13: #{spiking_convmixer_forward.5} parent=11 // pred_check
          %p205 = pneg %p99
        $region14: #{spiking_convmixer_forward.5} parent=11 // pred_check_branch
          %207 = sbr.rel (%p205) target = $region16
        $region15: #{spiking_convmixer_forward.5} parent=11 // pred_region
          _
        $region16: #{spiking_convmixer_forward.5} parent=11 // pred_fallthru
          _
        // Predicated region
        $region17: #{spiking_convmixer_forward.5} parent=11 // pred_check
          %p208 = pneg %p120
        $region18: #{spiking_convmixer_forward.5} parent=11 // pred_check_branch
          %210 = sbr.rel (%p208) target = $region20
        $region19: #{spiking_convmixer_forward.5} parent=11 // pred_region
          _
        $region20: #{spiking_convmixer_forward.5} parent=11 // pred_fallthru
          _
        // Predicated region
        $region21: #{spiking_convmixer_forward.5} parent=11 // pred_check
          %p211 = pneg %p141
        $region22: #{spiking_convmixer_forward.5} parent=11 // pred_check_branch
          %213 = sbr.rel (%p211) target = $region24
        $region23: #{spiking_convmixer_forward.5} parent=11 // pred_region
          _
        $region24: #{spiking_convmixer_forward.5} parent=11 // pred_fallthru
          _
        // Predicated region
        $region25: #{spiking_convmixer_forward.5} parent=11 // pred_check
          %p214 = pneg %p162
        $region26: #{spiking_convmixer_forward.5} parent=11 // pred_check_branch
          %216 = sbr.rel (%p214) target = $region28
        $region27: #{spiking_convmixer_forward.5} parent=11 // pred_region
          _
        $region28: #{spiking_convmixer_forward.5} parent=11 // pred_fallthru
          _
      $region12: #{spiking_convmixer_forward.5} parent=5 // pred_fallthru
        _
      %p217 = scmp.lt.s32.totalorder %s12, 8
      // Predicated region
      $region29: #{spiking_convmixer_forward.5} parent=5 // pred_check
        %p218 = pneg %p217
      $region30: #{spiking_convmixer_forward.5} parent=5 // pred_check_branch
        %220 = sbr.rel (%p218) target = $region32
      $region31: #{spiking_convmixer_forward.5} parent=5 // pred_region
        // Predicated region
        $region33: #{spiking_convmixer_forward.5} parent=31 // pred_check
          %p221 = pneg %p46
        $region34: #{spiking_convmixer_forward.5} parent=31 // pred_check_branch
          %223 = sbr.rel (%p221) target = $region36
        $region35: #{spiking_convmixer_forward.5} parent=31 // pred_region
          %s224 = smul.u32 2, %s19
          %p225 = scmp.lt.s32.totalorder %s20, 3
          %s226 = scalar_select %p225, %s20, 3
          %p227 = scmp.lt.s32.totalorder %s224, 3
          %s228 = scalar_select %p227, %s224, 3
          %s229 = smul.addr %s226, 4
          %s230 = sadd.s32 %s228, %s229
          %s231 = smul.addr %s230, 4
          %s232 = scalar_lea.vmem %s0, %s231
          %s233 = smul.u32 2, %s19
        $region36: #{spiking_convmixer_forward.5} parent=31 // pred_fallthru
          _
        // Predicated region
        $region37: #{spiking_convmixer_forward.5} parent=31 // pred_check
          %p234 = pneg %p72
        $region38: #{spiking_convmixer_forward.5} parent=31 // pred_check_branch
          %236 = sbr.rel (%p234) target = $region40
        $region39: #{spiking_convmixer_forward.5} parent=31 // pred_region
          %s237 = sand.u32 %s62, 1
          %s238 = sand.u32 %s62, 1
          %s239 = smul.addr %s238, 72
          %s240 = scalar_lea.vmem [#allocation5], %s239
          %s241 = smul.u32 2, %s19
          %s242 = smul.addr %s241, 4
          %s243 = scalar_lea.vmem %s1, %s242
          // Predicated region
          $region41: #{spiking_convmixer_forward.5} parent=39 // pred_check
            _
          $region42: #{spiking_convmixer_forward.5} parent=39 // pred_check_branch
            %245 = sbr.rel (0) target = $region44
          $region43: #{spiking_convmixer_forward.5} parent=39 // pred_region
            // Predicated region
            $region45: #{spiking_convmixer_forward.5} parent=43 // pred_check
              _
            $region46: #{spiking_convmixer_forward.5} parent=43 // pred_check_branch
              %247 = sbr.rel target = $region48
            $region47: #{spiking_convmixer_forward.5} parent=43 // pred_region
              // Predicated region
              $region60: #{spiking_convmixer_forward.5} parent=47 // pred_check
                _
              $region61: #{spiking_convmixer_forward.5} parent=47 // pred_check_branch
                %296 = sbr.rel (0) target = $region63
              $region62: #{spiking_convmixer_forward.5} parent=47 // pred_region
                loop: start=0, step=1, limit=1
                $region64: #{spiking_convmixer_forward.5} parent=62 // loop_pre_header
                  _
                $region65: #{spiking_convmixer_forward.5} parent=62 // loop_header
                  %s298 = sphi 0, %s302
                  %p299 = scmp.ge.s32.totalorder %s298, 1
                  %s303 = sphi %s243, %s243
                  %s304 = sphi %s240, %s240
                $region66: #{spiking_convmixer_forward.5} parent=62 // loop_header_branch
                  %301 = sbr.rel (%p299) target = $region70
                $region67: #{spiking_convmixer_forward.5} parent=62 // loop_body
                  _
                $region68: #{spiking_convmixer_forward.5} parent=62 // loop_footer
                  %s302 = sadd.s32 1, %s298
                $region69: #{spiking_convmixer_forward.5} parent=62 // loop_footer_branch
                  %297 = sbr.rel target = $region65
                $region70: #{spiking_convmixer_forward.5} parent=62 // loop_exit
                  _
                loop: start=0, step=1, limit=1
                $region71: #{spiking_convmixer_forward.5} parent=62 // loop_pre_header
                  _
                $region72: #{spiking_convmixer_forward.5} parent=62 // loop_header
                  %s307 = sphi 0, %s311
                  %p308 = scmp.ge.s32.totalorder %s307, 1
                  %s312 = sphi %s243, %s243
                  %s313 = sphi %s240, %s240
                $region73: #{spiking_convmixer_forward.5} parent=62 // loop_header_branch
                  %310 = sbr.rel (%p308) target = $region77
                $region74: #{spiking_convmixer_forward.5} parent=62 // loop_body
                  %v314 = vld [vmem:[%s312] sm:$0xf]
                  %315 = vst [vmem:[%s313] sm:$0xf] %v314
                  %v316 = vld [vmem:[%s312 + $0x4] sm:$0xf]
                  %317 = vst [vmem:[%s313 + $0x4] sm:$0xf] %v316
                  %v318 = vld [vmem:[%s312 + $0x10] sm:$0xf]
                  %319 = vst [vmem:[%s313 + $0x8] sm:$0xf] %v318
                  %v320 = vld [vmem:[%s312 + $0x14] sm:$0xf]
                  %321 = vst [vmem:[%s313 + $0xc] sm:$0xf] %v320
                  %v322 = vld [vmem:[%s312 + $0x20] sm:$0xf]
                  %323 = vst [vmem:[%s313 + $0x10] sm:$0xf] %v322
                  %v324 = vld [vmem:[%s312 + $0x24] sm:$0xf]
                  %325 = vst [vmem:[%s313 + $0x14] sm:$0xf] %v324
                  %v326 = vld [vmem:[%s312 + $0x30] sm:$0xf]
                  %327 = vst [vmem:[%s313 + $0x18] sm:$0xf] %v326
                  %v328 = vld [vmem:[%s312 + $0x34] sm:$0xf]
                  %329 = vst [vmem:[%s313 + $0x1c] sm:$0xf] %v328
                  %v330 = vld [vmem:[%s312 + $0x40] sm:$0xf]
                  %331 = vst [vmem:[%s313 + $0x20] sm:$0xf] %v330
                  %v332 = vld [vmem:[%s312 + $0x44] sm:$0xf]
                  %333 = vst [vmem:[%s313 + $0x24] sm:$0xf] %v332
                  %v334 = vld [vmem:[%s312 + $0x50] sm:$0xf]
                  %335 = vst [vmem:[%s313 + $0x28] sm:$0xf] %v334
                  %v336 = vld [vmem:[%s312 + $0x54] sm:$0xf]
                  %337 = vst [vmem:[%s313 + $0x2c] sm:$0xf] %v336
                  %v338 = vld [vmem:[%s312 + $0x60] sm:$0xf]
                  %339 = vst [vmem:[%s313 + $0x30] sm:$0xf] %v338
                  %v340 = vld [vmem:[%s312 + $0x64] sm:$0xf]
                  %341 = vst [vmem:[%s313 + $0x34] sm:$0xf] %v340
                  %v342 = vld [vmem:[%s312 + $0x70] sm:$0xf]
                  %343 = vst [vmem:[%s313 + $0x38] sm:$0xf] %v342
                  %v344 = vld [vmem:[%s312 + $0x74] sm:$0xf]
                  %345 = vst [vmem:[%s313 + $0x3c] sm:$0xf] %v344
                  %v346 = vld [vmem:[%s312 + $0x80] sm:$0xf]
                  %347 = vst [vmem:[%s313 + $0x40] sm:$0xf] %v346
                  %v348 = vld [vmem:[%s312 + $0x84] sm:$0xf]
                  %349 = vst [vmem:[%s313 + $0x44] sm:$0xf] %v348
                $region75: #{spiking_convmixer_forward.5} parent=62 // loop_footer
                  %s311 = sadd.s32 1, %s307
                $region76: #{spiking_convmixer_forward.5} parent=62 // loop_footer_branch
                  %306 = sbr.rel target = $region72
                $region77: #{spiking_convmixer_forward.5} parent=62 // loop_exit
                  _
              $region63: #{spiking_convmixer_forward.5} parent=47 // pred_fallthru
                _
            $region48: #{spiking_convmixer_forward.5} parent=43 // pred_fallthru
              _
            // Predicated region
            $region49: #{spiking_convmixer_forward.5} parent=43 // pred_check
              _
            $region50: #{spiking_convmixer_forward.5} parent=43 // pred_check_branch
              %249 = sbr.rel (0) target = $region52
            $region51: #{spiking_convmixer_forward.5} parent=43 // pred_region
              loop: start=0, step=1, limit=1
              $region53: #{spiking_convmixer_forward.5} parent=51 // loop_pre_header
                _
              $region54: #{spiking_convmixer_forward.5} parent=51 // loop_header
                %s252 = sphi 0, %s256
                %p253 = scmp.ge.s32.totalorder %s252, 1
                %s257 = sphi %s243, %s243
                %s258 = sphi %s240, %s240
              $region55: #{spiking_convmixer_forward.5} parent=51 // loop_header_branch
                %255 = sbr.rel (%p253) target = $region59
              $region56: #{spiking_convmixer_forward.5} parent=51 // loop_body
                %v259 = vld [vmem:[%s257] sm:$0xf]
                %260 = vst [vmem:[%s258] sm:$0xf] %v259
                %v261 = vld [vmem:[%s257 + $0x4] sm:$0xf]
                %262 = vst [vmem:[%s258 + $0x4] sm:$0xf] %v261
                %v263 = vld [vmem:[%s257 + $0x10] sm:$0xf]
                %264 = vst [vmem:[%s258 + $0x8] sm:$0xf] %v263
                %v265 = vld [vmem:[%s257 + $0x14] sm:$0xf]
                %266 = vst [vmem:[%s258 + $0xc] sm:$0xf] %v265
                %v267 = vld [vmem:[%s257 + $0x20] sm:$0xf]
                %268 = vst [vmem:[%s258 + $0x10] sm:$0xf] %v267
                %v269 = vld [vmem:[%s257 + $0x24] sm:$0xf]
                %270 = vst [vmem:[%s258 + $0x14] sm:$0xf] %v269
                %v271 = vld [vmem:[%s257 + $0x30] sm:$0xf]
                %272 = vst [vmem:[%s258 + $0x18] sm:$0xf] %v271
                %v273 = vld [vmem:[%s257 + $0x34] sm:$0xf]
                %274 = vst [vmem:[%s258 + $0x1c] sm:$0xf] %v273
                %v275 = vld [vmem:[%s257 + $0x40] sm:$0xf]
                %276 = vst [vmem:[%s258 + $0x20] sm:$0xf] %v275
                %v277 = vld [vmem:[%s257 + $0x44] sm:$0xf]
                %278 = vst [vmem:[%s258 + $0x24] sm:$0xf] %v277
                %v279 = vld [vmem:[%s257 + $0x50] sm:$0xf]
                %280 = vst [vmem:[%s258 + $0x28] sm:$0xf] %v279
                %v281 = vld [vmem:[%s257 + $0x54] sm:$0xf]
                %282 = vst [vmem:[%s258 + $0x2c] sm:$0xf] %v281
                %v283 = vld [vmem:[%s257 + $0x60] sm:$0xf]
                %284 = vst [vmem:[%s258 + $0x30] sm:$0xf] %v283
                %v285 = vld [vmem:[%s257 + $0x64] sm:$0xf]
                %286 = vst [vmem:[%s258 + $0x34] sm:$0xf] %v285
                %v287 = vld [vmem:[%s257 + $0x70] sm:$0xf]
                %288 = vst [vmem:[%s258 + $0x38] sm:$0xf] %v287
                %v289 = vld [vmem:[%s257 + $0x74] sm:$0xf]
                %290 = vst [vmem:[%s258 + $0x3c] sm:$0xf] %v289
                %v291 = vld [vmem:[%s257 + $0x80] sm:$0xf]
                %292 = vst [vmem:[%s258 + $0x40] sm:$0xf] %v291
                %v293 = vld [vmem:[%s257 + $0x84] sm:$0xf]
                %294 = vst [vmem:[%s258 + $0x44] sm:$0xf] %v293
              $region57: #{spiking_convmixer_forward.5} parent=51 // loop_footer
                %s256 = sadd.s32 1, %s252
              $region58: #{spiking_convmixer_forward.5} parent=51 // loop_footer_branch
                %251 = sbr.rel target = $region54
              $region59: #{spiking_convmixer_forward.5} parent=51 // loop_exit
                _
            $region52: #{spiking_convmixer_forward.5} parent=43 // pred_fallthru
              _
          $region44: #{spiking_convmixer_forward.5} parent=39 // pred_fallthru
            _
          %350 = vnop
        $region40: #{spiking_convmixer_forward.5} parent=31 // pred_fallthru
          _
      $region32: #{spiking_convmixer_forward.5} parent=5 // pred_fallthru
        _
      %p351 = scmp.le.s32.totalorder 1, %s12
      %p352 = scmp.lt.s32.totalorder %s12, 9
      %p353 = pnand %p351, %p352
      %p354 = pneg %p353
      // Predicated region
      $region78: #{spiking_convmixer_forward.5} parent=5 // pred_check
        _
      $region79: #{spiking_convmixer_forward.5} parent=5 // pred_check_branch
        %356 = sbr.rel (%p353) target = $region81
      $region80: #{spiking_convmixer_forward.5} parent=5 // pred_region
        %s357 = ssub.s32 %s12, 1
        %s358 = sand.u32 %s65, 1
        %s359 = sand.u32 %s65, 1
        %s360 = smul.addr %s359, 72
        %s361 = scalar_lea.vmem [#allocation5], %s360
        // Predicated region
        $region82: #{spiking_convmixer_forward.5} parent=80 // pred_check
          %p362 = pneg %p78
        $region83: #{spiking_convmixer_forward.5} parent=80 // pred_check_branch
          %364 = sbr.rel (%p362) target = $region85
        $region84: #{spiking_convmixer_forward.5} parent=80 // pred_region
          _
        $region85: #{spiking_convmixer_forward.5} parent=80 // pred_fallthru
          _
        %s365 = smul.u32 2, %s21
        %p366 = scmp.lt.s32.totalorder %s22, 3
        %s367 = scalar_select %p366, %s22, 3
        %p368 = scmp.lt.s32.totalorder %s365, 3
        %s369 = scalar_select %p368, %s365, 3
        %s370 = smul.addr %s367, 4
        %s371 = sadd.s32 %s369, %s370
        %s372 = smul.addr %s371, 4
        %s373 = scalar_lea.vmem %s0, %s372
        %p374 = pneg %p52
        %p375 = pneg %p49
        %s376 = sand.u32 %s65, 1
        %s377 = sand.u32 %s65, 1
        %s378 = smul.addr %s377, 72
        %s379 = scalar_lea.vmem [#allocation5], %s378
        %p380 = pneg %p78
        %p381 = pneg %p75
        %p382 = pneg %p99
        %p383 = pneg %p96
        %p384 = pneg %p120
        %p385 = pneg %p117
        %p386 = pneg %p141
        %p387 = pneg %p138
        %p388 = pneg %p162
        %p389 = pneg %p159
        %p390 = pneg %p190
        %p391 = pneg %p187
        %s392 = smul.u32 2, %s21
        %p393 = scmp.lt.s32.totalorder %s22, 3
        %s394 = scalar_select %p393, %s22, 3
        %p395 = scmp.lt.s32.totalorder %s392, 3
        %s396 = scalar_select %p395, %s392, 3
        %s397 = smul.addr %s394, 4
        %s398 = sadd.s32 %s396, %s397
        %s399 = smul.addr %s398, 4
        %s400 = scalar_lea.vmem %s6, %s399
        %s401 = smul.u32 2, %s21
        %p402 = scmp.lt.s32.totalorder %s22, 3
        %s403 = scalar_select %p402, %s22, 3
        %p404 = scmp.lt.s32.totalorder %s401, 3
        %s405 = scalar_select %p404, %s401, 3
        %s406 = smul.addr %s403, 4
        %s407 = sadd.s32 %s405, %s406
        %s408 = smul.addr %s407, 4
        %s409 = scalar_lea.vmem %s0, %s408
        %s410 = smul.u32 2, %s21
        %s411 = smul.u32 2, %s21
        %s412 = smul.u32 2, %s21
        %p413 = scmp.lt.s32.totalorder %s22, 3
        %s414 = scalar_select %p413, %s22, 3
        %p415 = scmp.lt.s32.totalorder %s412, 3
        %s416 = scalar_select %p415, %s412, 3
        %s417 = smul.addr %s414, 4
        %s418 = sadd.s32 %s416, %s417
        %s419 = smul.addr %s418, 4
        %s420 = scalar_lea.vmem %s6, %s419
        %s421 = smul.u32 2, %s21
        %p423 = scmp.eq.s32.totalorder %s22, 0
        // Predicated region
        $region86: #{spiking_convmixer_forward.5} parent=80 // pred_check
          %p424 = pneg %p423
        $region87: #{spiking_convmixer_forward.5} parent=80 // pred_check_branch
          %426 = sbr.rel (%p424) target = $region89
        $region88: #{spiking_convmixer_forward.5} parent=80 // pred_region
          %427 = vst [vmem:[#allocation2] sm:$0xff] 0
          %428 = vst [vmem:[#allocation2 + $0x8] sm:$0xff] 0
          %429 = vst [vmem:[#allocation2 + $0x10] sm:$0xff] 0
          %430 = vst [vmem:[#allocation3] sm:$0xff] 0.0
          %431 = vst [vmem:[#allocation3 + $0x8] sm:$0xff] 0.0
          %432 = vst [vmem:[#allocation4] sm:$0xff] 0.0
          %433 = vst [vmem:[#allocation4 + $0x8] sm:$0xff] 0.0
        $region89: #{spiking_convmixer_forward.5} parent=80 // pred_fallthru
          _
        %v434 = vld [vmem:[%s409] sm:$0xf]
        %v435 = vld [vmem:[%s409 + $0x4] sm:$0xf]
        %v438 = vunpack.c.l.b16 %v434
        %v439 = vunpack.c.l.b16 %v435
        %v440 = vpack.c.b16 %v439, %v438
        %442 = vst [vmem:[#allocation2 + $0x8] sm:$0xff] %v440
        %v443 = vld [vmem:[#allocation3] sm:$0xff]
        %v444 = vld [vmem:[#allocation3 + $0x8] sm:$0xff]
        %v445 = vld [vmem:[%s3] sm:$0x1]
        %v447 = vlaneseq
        %v448 = vshrl.u32 %v447, 7
        %v449 = vsub.s32 0, %v448
        %v450 = vrot.slane %v445, %v449
        %v452 = vadd.f32 %v443, %v450
        %v453 = vadd.f32 %v444, %v450
        %v454 = vld [vmem:[#allocation2] sm:$0xe0]
        %v455 = vld [vmem:[#allocation2 + $0x8] sm:$0x3f]
        %v456 = vld [vmem:[%s2] sm:$0x1]
        %v458 = vpack.i.b16 %v456, %v456
        %v460 = vlaneseq
        %v461 = vshrl.u32 %v460, 7
        %v462 = vsub.s32 0, %v461
        %v463 = vrot.slane %v458, %v462
        %v464 = vmul.bf16 %v454, %v463
        %v465 = vmul.bf16 %v455, %v463
        %v466 = vld [vmem:[%s361] sm:$0xf]
        %v467 = vld [vmem:[%s361 + $0x4] sm:$0xf]
        %469 = vset.pattern.permute.xlu0 0
        %470 = vperm.xlu0 %469, %v466
        %v471 = vpop.permute.xlu0 %470
        %v474 = vunpack.c.l.s4 839922192
        %v475 = vunpack.c.0.s8 %v474
        %v476 = vlaneseq
        %v477 = vshrl.u32 %v476, 7
        %v478 = vsub.s32 %v475, %v477
        %v479 = vrot.slane %v471, %v478
        %481 = vset.pattern.permute.xlu0 0
        %482 = vperm.xlu0 %481, %v467
        %v483 = vpop.permute.xlu0 %482
        %v486 = vunpack.c.l.s4 839922192
        %v487 = vunpack.c.0.s8 %v486
        %v488 = vlaneseq
        %v489 = vshrl.u32 %v488, 7
        %v490 = vsub.s32 %v487, %v489
        %v491 = vrot.slane %v483, %v490
        %v494 = vunpack.c.l.b16 %v479
        %v495 = vunpack.c.l.b16 %v491
        %v496 = vpack.c.b16 %v495, %v494
        %v498 = vshrl.u32 %v496, 16
        %v500 = vrot.slane %v498, 2
        %v501 = vshll.u32 %v496, 16
        %v503 = vrot.slane %v501, 3
        %v504 = vor.u32 %v500, %v503
        %v506 = vmul.bf16 %v464, %v504
        %v507 = vmul.bf16 %v465, %v504
        %vm510 = vcmask 1043456
        %v511 = vrot.slane %v506, 4
        %v512 = vrot.slane %v507, 4
        %v513 = vsel %vm510, %v511, %v512
        %v516 = vunpack.c.l.bf16 %v513
        %v517 = vunpack.c.h.bf16 %v513
        %v518 = vunpack.c.l.bf16 %v512
        %vm522 = vcmask 1044480
        %v523 = vrot.slane %v516, 3
        %v524 = vrot.slane %v517, 3
        %v525 = vsel %vm522, %v523, %v524
        %v526 = vrot.slane %v518, 3
        %v527 = vsel %vm522, %v524, %v526
        %v530 = vadd.f32 %v452, %v525
        %v531 = vadd.f32 %v453, %v527
        %v532 = vld [vmem:[#allocation2] sm:$0xc0]
        %v533 = vld [vmem:[%s2 + $0x1] sm:$0x1]
        %v535 = vpack.i.b16 %v533, %v533
        %v537 = vlaneseq
        %v538 = vshrl.u32 %v537, 7
        %v539 = vsub.s32 0, %v538
        %v540 = vrot.slane %v535, %v539
        %v541 = vmul.bf16 %v532, %v540
        %v542 = vmul.bf16 %v455, %v540
        %s543 = scalar_lea.vmem %s361, 8 [#allocation5]
        %v544 = vld [vmem:[%s543] sm:$0xf]
        %v545 = vld [vmem:[%s543 + $0x4] sm:$0xf]
        %547 = vset.pattern.permute.xlu0 0
        %548 = vperm.xlu0 %547, %v544
        %v549 = vpop.permute.xlu0 %548
        %v552 = vunpack.c.l.s4 839922192
        %v553 = vunpack.c.0.s8 %v552
        %v554 = vlaneseq
        %v555 = vshrl.u32 %v554, 7
        %v556 = vsub.s32 %v553, %v555
        %v557 = vrot.slane %v549, %v556
        %559 = vset.pattern.permute.xlu0 0
        %560 = vperm.xlu0 %559, %v545
        %v561 = vpop.permute.xlu0 %560
        %v564 = vunpack.c.l.s4 839922192
        %v565 = vunpack.c.0.s8 %v564
        %v566 = vlaneseq
        %v567 = vshrl.u32 %v566, 7
        %v568 = vsub.s32 %v565, %v567
        %v569 = vrot.slane %v561, %v568
        %v572 = vunpack.c.l.b16 %v557
        %v573 = vunpack.c.l.b16 %v569
        %v574 = vpack.c.b16 %v573, %v572
        %v575 = vrot.slane %v574, 2
        %v577 = vmul.bf16 %v541, %v575
        %v578 = vmul.bf16 %v542, %v575
        %v581 = vrot.slane %v577, 4
        %v582 = vrot.slane %v578, 4
        %v583 = vsel %vm510, %v581, %v582
        %v586 = vunpack.c.l.bf16 %v583
        %v587 = vunpack.c.h.bf16 %v583
        %v588 = vunpack.c.l.bf16 %v582
        %vm592 = vcmask 1043456
        %v593 = vrot.slane %v586, 4
        %v594 = vrot.slane %v587, 4
        %v595 = vsel %vm592, %v593, %v594
        %v596 = vrot.slane %v588, 4
        %v597 = vsel %vm592, %v594, %v596
        %v600 = vadd.f32 %v530, %v595
        %v601 = vadd.f32 %v531, %v597
        %v602 = vld [vmem:[#allocation2 + $0x8] sm:$0x7f]
        %v603 = vld [vmem:[%s2 + $0x2] sm:$0x1]
        %v605 = vpack.i.b16 %v603, %v603
        %v607 = vlaneseq
        %v608 = vshrl.u32 %v607, 7
        %v609 = vsub.s32 0, %v608
        %v610 = vrot.slane %v605, %v609
        %v611 = vmul.bf16 %v532, %v610
        %v612 = vmul.bf16 %v602, %v610
        %s613 = scalar_lea.vmem %s361, 16 [#allocation5]
        %v614 = vld [vmem:[%s613] sm:$0xf]
        %v615 = vld [vmem:[%s613 + $0x4] sm:$0xf]
        %617 = vset.pattern.permute.xlu0 0
        %618 = vperm.xlu0 %617, %v614
        %v619 = vpop.permute.xlu0 %618
        %v622 = vunpack.c.l.s4 839922192
        %v623 = vunpack.c.0.s8 %v622
        %v624 = vlaneseq
        %v625 = vshrl.u32 %v624, 7
        %v626 = vsub.s32 %v623, %v625
        %v627 = vrot.slane %v619, %v626
        %629 = vset.pattern.permute.xlu0 0
        %630 = vperm.xlu0 %629, %v615
        %v631 = vpop.permute.xlu0 %630
        %v634 = vunpack.c.l.s4 839922192
        %v635 = vunpack.c.0.s8 %v634
        %v636 = vlaneseq
        %v637 = vshrl.u32 %v636, 7
        %v638 = vsub.s32 %v635, %v637
        %v639 = vrot.slane %v631, %v638
        %v642 = vunpack.c.l.b16 %v627
        %v643 = vunpack.c.l.b16 %v639
        %v644 = vpack.c.b16 %v643, %v642
        %v646 = vshrl.u32 %v644, 16
        %v648 = vrot.slane %v646, 1
        %v649 = vshll.u32 %v644, 16
        %v651 = vrot.slane %v649, 2
        %v652 = vor.u32 %v648, %v651
        %v654 = vmul.bf16 %v611, %v652
        %v655 = vmul.bf16 %v612, %v652
        %v658 = vrot.slane %v654, 4
        %v659 = vrot.slane %v655, 4
        %v660 = vsel %vm510, %v658, %v659
        %v663 = vunpack.c.l.bf16 %v660
        %v664 = vunpack.c.h.bf16 %v660
        %v665 = vunpack.c.l.bf16 %v659
        %vm669 = vcmask 1042432
        %v670 = vrot.slane %v663, 5
        %v671 = vrot.slane %v664, 5
        %v672 = vsel %vm669, %v670, %v671
        %v673 = vrot.slane %v665, 5
        %v674 = vsel %vm669, %v671, %v673
        %v677 = vadd.f32 %v600, %v672
        %v678 = vadd.f32 %v601, %v674
        %v679 = vld [vmem:[#allocation2] sm:$0x80]
        %v680 = vld [vmem:[#allocation2 + $0x8] sm:$0xff]
        %v681 = vld [vmem:[%s2 + $0x3] sm:$0x1]
        %v683 = vpack.i.b16 %v681, %v681
        %v685 = vlaneseq
        %v686 = vshrl.u32 %v685, 7
        %v687 = vsub.s32 0, %v686
        %v688 = vrot.slane %v683, %v687
        %v689 = vmul.bf16 %v679, %v688
        %v690 = vmul.bf16 %v680, %v688
        %s691 = scalar_lea.vmem %s361, 24 [#allocation5]
        %v692 = vld [vmem:[%s691] sm:$0xf]
        %v693 = vld [vmem:[%s691 + $0x4] sm:$0xf]
        %695 = vset.pattern.permute.xlu0 0
        %696 = vperm.xlu0 %695, %v692
        %v697 = vpop.permute.xlu0 %696
        %v700 = vunpack.c.l.s4 839922192
        %v701 = vunpack.c.0.s8 %v700
        %v702 = vlaneseq
        %v703 = vshrl.u32 %v702, 7
        %v704 = vsub.s32 %v701, %v703
        %v705 = vrot.slane %v697, %v704
        %707 = vset.pattern.permute.xlu0 0
        %708 = vperm.xlu0 %707, %v693
        %v709 = vpop.permute.xlu0 %708
        %v712 = vunpack.c.l.s4 839922192
        %v713 = vunpack.c.0.s8 %v712
        %v714 = vlaneseq
        %v715 = vshrl.u32 %v714, 7
        %v716 = vsub.s32 %v713, %v715
        %v717 = vrot.slane %v709, %v716
        %v720 = vunpack.c.l.b16 %v705
        %v721 = vunpack.c.l.b16 %v717
        %v722 = vpack.c.b16 %v721, %v720
        %v724 = vshll.u32 %v722, 16
        %v726 = vrot.slane %v724, 1
        %v727 = vshrl.u32 %v722, 16
        %v729 = vor.u32 %v727, %v726
        %v732 = vmul.bf16 %v689, %v726
        %v733 = vmul.bf16 %v690, %v729
        %v736 = vrot.slane %v732, 4
        %v737 = vrot.slane %v733, 4
        %v738 = vsel %vm510, %v736, %v737
        %v741 = vunpack.c.l.bf16 %v738
        %v742 = vunpack.c.h.bf16 %v738
        %v743 = vunpack.c.l.bf16 %v737
        %vm747 = vcmask 1040384
        %v748 = vrot.slane %v741, 7
        %v749 = vrot.slane %v742, 7
        %v750 = vsel %vm747, %v748, %v749
        %v751 = vrot.slane %v743, 7
        %v752 = vsel %vm747, %v749, %v751
        %v755 = vadd.f32 %v677, %v750
        %v756 = vadd.f32 %v678, %v752
        %v757 = vld [vmem:[%s2 + $0x4] sm:$0x1]
        %v759 = vpack.i.b16 %v757, %v757
        %v761 = vlaneseq
        %v762 = vshrl.u32 %v761, 7
        %v763 = vsub.s32 0, %v762
        %v764 = vrot.slane %v759, %v763
        %v765 = vmul.bf16 %v680, %v764
        %v766 = vunpack.c.l.bf16 %v765
        %v767 = vunpack.c.h.bf16 %v765
        %v768 = vadd.f32 %v755, %v766
        %v769 = vadd.f32 %v756, %v767
        %v770 = vld [vmem:[#allocation2 + $0x8] sm:$0xff]
        %v771 = vld [vmem:[#allocation2 + $0x10] sm:$0x1]
        %v772 = vld [vmem:[%s2 + $0x5] sm:$0x1]
        %v774 = vpack.i.b16 %v772, %v772
        %v776 = vlaneseq
        %v777 = vshrl.u32 %v776, 7
        %v778 = vsub.s32 0, %v777
        %v779 = vrot.slane %v774, %v778
        %v780 = vmul.bf16 %v770, %v779
        %v781 = vmul.bf16 %v771, %v779
        %s782 = scalar_lea.vmem %s361, 40 [#allocation5]
        %v783 = vld [vmem:[%s782] sm:$0xf]
        %v784 = vld [vmem:[%s782 + $0x4] sm:$0xf]
        %786 = vset.pattern.permute.xlu0 0
        %787 = vperm.xlu0 %786, %v783
        %v788 = vpop.permute.xlu0 %787
        %v791 = vunpack.c.l.s4 839922192
        %v792 = vunpack.c.0.s8 %v791
        %v793 = vlaneseq
        %v794 = vshrl.u32 %v793, 7
        %v795 = vsub.s32 %v792, %v794
        %v796 = vrot.slane %v788, %v795
        %798 = vset.pattern.permute.xlu0 0
        %799 = vperm.xlu0 %798, %v784
        %v800 = vpop.permute.xlu0 %799
        %v803 = vunpack.c.l.s4 839922192
        %v804 = vunpack.c.0.s8 %v803
        %v805 = vlaneseq
        %v806 = vshrl.u32 %v805, 7
        %v807 = vsub.s32 %v804, %v806
        %v808 = vrot.slane %v800, %v807
        %v811 = vunpack.c.l.b16 %v796
        %v812 = vunpack.c.l.b16 %v808
        %v813 = vpack.c.b16 %v812, %v811
        %v815 = vshrl.u32 %v813, 16
        %v817 = vrot.slane %v815, 7
        %v818 = vshll.u32 %v813, 16
        %v820 = vor.u32 %v817, %v818
        %v823 = vmul.bf16 %v780, %v820
        %v824 = vmul.bf16 %v781, %v817
        %v825 = vunpack.c.l.bf16 %v823
        %v826 = vunpack.c.h.bf16 %v823
        %v827 = vunpack.c.l.bf16 %v824
        %vm831 = vcmask 1046528
        %v832 = vrot.slane %v825, 1
        %v833 = vrot.slane %v826, 1
        %v834 = vsel %vm831, %v832, %v833
        %v835 = vrot.slane %v827, 1
        %v836 = vsel %vm831, %v833, %v835
        %v839 = vadd.f32 %v768, %v834
        %v840 = vadd.f32 %v769, %v836
        %v841 = vld [vmem:[#allocation2 + $0x8] sm:$0xfe]
        %v842 = vld [vmem:[#allocation2 + $0x10] sm:$0x3]
        %v843 = vld [vmem:[%s2 + $0x6] sm:$0x1]
        %v845 = vpack.i.b16 %v843, %v843
        %v847 = vlaneseq
        %v848 = vshrl.u32 %v847, 7
        %v849 = vsub.s32 0, %v848
        %v850 = vrot.slane %v845, %v849
        %v851 = vmul.bf16 %v841, %v850
        %v852 = vmul.bf16 %v842, %v850
        %s853 = scalar_lea.vmem %s361, 48 [#allocation5]
        %v854 = vld [vmem:[%s853] sm:$0xf]
        %v855 = vld [vmem:[%s853 + $0x4] sm:$0xf]
        %857 = vset.pattern.permute.xlu0 0
        %858 = vperm.xlu0 %857, %v854
        %v859 = vpop.permute.xlu0 %858
        %v862 = vunpack.c.l.s4 839922192
        %v863 = vunpack.c.0.s8 %v862
        %v864 = vlaneseq
        %v865 = vshrl.u32 %v864, 7
        %v866 = vsub.s32 %v863, %v865
        %v867 = vrot.slane %v859, %v866
        %869 = vset.pattern.permute.xlu0 0
        %870 = vperm.xlu0 %869, %v855
        %v871 = vpop.permute.xlu0 %870
        %v874 = vunpack.c.l.s4 839922192
        %v875 = vunpack.c.0.s8 %v874
        %v876 = vlaneseq
        %v877 = vshrl.u32 %v876, 7
        %v878 = vsub.s32 %v875, %v877
        %v879 = vrot.slane %v871, %v878
        %v882 = vunpack.c.l.b16 %v867
        %v883 = vunpack.c.l.b16 %v879
        %v884 = vpack.c.b16 %v883, %v882
        %v886 = vshrl.u32 %v884, 16
        %v888 = vrot.slane %v886, 6
        %v889 = vshll.u32 %v884, 16
        %v891 = vrot.slane %v889, 7
        %v892 = vor.u32 %v888, %v891
        %v894 = vmul.bf16 %v851, %v892
        %v895 = vmul.bf16 %v852, %v892
        %v896 = vunpack.c.l.bf16 %v894
        %v897 = vunpack.c.h.bf16 %v894
        %v898 = vunpack.c.l.bf16 %v895
        %v902 = vrot.slane %v896, 3
        %v903 = vrot.slane %v897, 3
        %v904 = vsel %vm522, %v902, %v903
        %v905 = vrot.slane %v898, 3
        %v906 = vsel %vm522, %v903, %v905
        %v909 = vadd.f32 %v839, %v904
        %v910 = vadd.f32 %v840, %v906
        %v911 = vld [vmem:[#allocation2 + $0x8] sm:$0xfc]
        %v912 = vld [vmem:[%s2 + $0x7] sm:$0x1]
        %v914 = vpack.i.b16 %v912, %v912
        %v916 = vlaneseq
        %v917 = vshrl.u32 %v916, 7
        %v918 = vsub.s32 0, %v917
        %v919 = vrot.slane %v914, %v918
        %v920 = vmul.bf16 %v911, %v919
        %v921 = vmul.bf16 %v842, %v919
        %s922 = scalar_lea.vmem %s361, 56 [#allocation5]
        %v923 = vld [vmem:[%s922] sm:$0xf]
        %v924 = vld [vmem:[%s922 + $0x4] sm:$0xf]
        %926 = vset.pattern.permute.xlu0 0
        %927 = vperm.xlu0 %926, %v923
        %v928 = vpop.permute.xlu0 %927
        %v931 = vunpack.c.l.s4 839922192
        %v932 = vunpack.c.0.s8 %v931
        %v933 = vlaneseq
        %v934 = vshrl.u32 %v933, 7
        %v935 = vsub.s32 %v932, %v934
        %v936 = vrot.slane %v928, %v935
        %938 = vset.pattern.permute.xlu0 0
        %939 = vperm.xlu0 %938, %v924
        %v940 = vpop.permute.xlu0 %939
        %v943 = vunpack.c.l.s4 839922192
        %v944 = vunpack.c.0.s8 %v943
        %v945 = vlaneseq
        %v946 = vshrl.u32 %v945, 7
        %v947 = vsub.s32 %v944, %v946
        %v948 = vrot.slane %v940, %v947
        %v951 = vunpack.c.l.b16 %v936
        %v952 = vunpack.c.l.b16 %v948
        %v953 = vpack.c.b16 %v952, %v951
        %v954 = vrot.slane %v953, 6
        %v956 = vmul.bf16 %v920, %v954
        %v957 = vmul.bf16 %v921, %v954
        %v958 = vunpack.c.l.bf16 %v956
        %v959 = vunpack.c.h.bf16 %v956
        %v960 = vunpack.c.l.bf16 %v957
        %v964 = vrot.slane %v958, 4
        %v965 = vrot.slane %v959, 4
        %v966 = vsel %vm592, %v964, %v965
        %v967 = vrot.slane %v960, 4
        %v968 = vsel %vm592, %v965, %v967
        %v971 = vadd.f32 %v909, %v966
        %v972 = vadd.f32 %v910, %v968
        %v973 = vld [vmem:[#allocation2 + $0x10] sm:$0x7]
        %v974 = vld [vmem:[%s2 + $0x8] sm:$0x1]
        %v976 = vpack.i.b16 %v974, %v974
        %v978 = vlaneseq
        %v979 = vshrl.u32 %v978, 7
        %v980 = vsub.s32 0, %v979
        %v981 = vrot.slane %v976, %v980
        %v982 = vmul.bf16 %v911, %v981
        %v983 = vmul.bf16 %v973, %v981
        %s984 = scalar_lea.vmem %s361, 64 [#allocation5]
        %v985 = vld [vmem:[%s984] sm:$0xf]
        %v986 = vld [vmem:[%s984 + $0x4] sm:$0xf]
        %988 = vset.pattern.permute.xlu0 0
        %989 = vperm.xlu0 %988, %v985
        %v990 = vpop.permute.xlu0 %989
        %v993 = vunpack.c.l.s4 839922192
        %v994 = vunpack.c.0.s8 %v993
        %v995 = vlaneseq
        %v996 = vshrl.u32 %v995, 7
        %v997 = vsub.s32 %v994, %v996
        %v998 = vrot.slane %v990, %v997
        %1000 = vset.pattern.permute.xlu0 0
        %1001 = vperm.xlu0 %1000, %v986
        %v1002 = vpop.permute.xlu0 %1001
        %v1005 = vunpack.c.l.s4 839922192
        %v1006 = vunpack.c.0.s8 %v1005
        %v1007 = vlaneseq
        %v1008 = vshrl.u32 %v1007, 7
        %v1009 = vsub.s32 %v1006, %v1008
        %v1010 = vrot.slane %v1002, %v1009
        %v1013 = vunpack.c.l.b16 %v998
        %v1014 = vunpack.c.l.b16 %v1010
        %v1015 = vpack.c.b16 %v1014, %v1013
        %v1017 = vshrl.u32 %v1015, 16
        %v1019 = vrot.slane %v1017, 5
        %v1020 = vshll.u32 %v1015, 16
        %v1022 = vrot.slane %v1020, 6
        %v1023 = vor.u32 %v1019, %v1022
        %v1025 = vmul.bf16 %v982, %v1023
        %v1026 = vmul.bf16 %v983, %v1023
        %v1027 = vunpack.c.l.bf16 %v1025
        %v1028 = vunpack.c.h.bf16 %v1025
        %v1029 = vunpack.c.l.bf16 %v1026
        %v1033 = vrot.slane %v1027, 5
        %v1034 = vrot.slane %v1028, 5
        %v1035 = vsel %vm669, %v1033, %v1034
        %v1036 = vrot.slane %v1029, 5
        %v1037 = vsel %vm669, %v1034, %v1036
        %v1040 = vadd.f32 %v971, %v1035
        %v1041 = vadd.f32 %v972, %v1037
        %vm1042 = vcmp.ge.f32.partialorder %v1040, 1.0
        %vm1043 = vcmp.ge.f32.partialorder %v1041, 1.0
        %v1044 = vsel %vm1042, 0.0, %v1040
        %v1045 = vsel %vm1043, 0.0, %v1041
        %1046 = vst [vmem:[#allocation3] sm:$0xff] %v1044
        %1047 = vst [vmem:[#allocation3 + $0x8] sm:$0xff] %v1045
        %v1048 = vsel %vm1042, 1, 0
        %v1049 = vsel %vm1043, 1, 0
        %v1050 = vcvt.s32.f32 %v1048
        %v1051 = vcvt.s32.f32 %v1049
        %v1052 = vpack.c.bf16 %v1051, %v1050
        %v1053 = vadd.bf16 %v1052, %v440
        %v1054 = vld [vmem:[%s4] sm:$0xf]
        %v1055 = vld [vmem:[%s4 + $0x4] sm:$0xf]
        %v1056 = vld [vmem:[%s4 + $0x8] sm:$0xf]
        %v1057 = vld [vmem:[%s4 + $0xc] sm:$0xf]
        %v1058 = vld [vmem:[%s4 + $0x10] sm:$0xf]
        %v1059 = vld [vmem:[%s4 + $0x14] sm:$0xf]
        %v1060 = vld [vmem:[%s4 + $0x18] sm:$0xf]
        %v1061 = vld [vmem:[%s4 + $0x1c] sm:$0xf]
        %v1062 = vld [vmem:[%s4 + $0x20] sm:$0xf]
        %v1063 = vld [vmem:[%s4 + $0x24] sm:$0xf]
        %v1064 = vld [vmem:[%s4 + $0x28] sm:$0xf]
        %v1065 = vld [vmem:[%s4 + $0x2c] sm:$0xf]
        %v1066 = vld [vmem:[%s4 + $0x30] sm:$0xf]
        %v1067 = vld [vmem:[%s4 + $0x34] sm:$0xf]
        %v1068 = vld [vmem:[%s4 + $0x38] sm:$0xf]
        %v1069 = vld [vmem:[%s4 + $0x3c] sm:$0xf]
        %v1070 = vld [vmem:[%s5] sm:$0x1]
        %v1072 = vlaneseq
        %v1073 = vshrl.u32 %v1072, 7
        %v1074 = vsub.s32 0, %v1073
        %v1075 = vrot.slane %v1070, %v1074
        %v1093 = vunpack.c.l.b16 %v1054
        %v1094 = vunpack.c.l.b16 %v1055
        %v1095 = vunpack.c.l.b16 %v1056
        %v1096 = vunpack.c.l.b16 %v1057
        %v1097 = vunpack.c.l.b16 %v1058
        %v1098 = vunpack.c.l.b16 %v1059
        %v1099 = vunpack.c.l.b16 %v1060
        %v1100 = vunpack.c.l.b16 %v1061
        %v1101 = vunpack.c.l.b16 %v1062
        %v1102 = vunpack.c.l.b16 %v1063
        %v1103 = vunpack.c.l.b16 %v1064
        %v1104 = vunpack.c.l.b16 %v1065
        %v1105 = vunpack.c.l.b16 %v1066
        %v1106 = vunpack.c.l.b16 %v1067
        %v1107 = vunpack.c.l.b16 %v1068
        %v1108 = vunpack.c.l.b16 %v1069
        %v1109 = vpack.c.b16 %v1094, %v1093
        %v1110 = vpack.c.b16 %v1096, %v1095
        %v1111 = vpack.c.b16 %v1098, %v1097
        %v1112 = vpack.c.b16 %v1100, %v1099
        %v1113 = vpack.c.b16 %v1102, %v1101
        %v1114 = vpack.c.b16 %v1104, %v1103
        %v1115 = vpack.c.b16 %v1106, %v1105
        %v1116 = vpack.c.b16 %v1108, %v1107
        %1125 = vmatprep.subr.bf16.mxu0 0
        %1126 = vmatpush1.bf16.msra.mxu0 %v1109
        %1127 = vmatprep.subr.bf16.mxu0 0
        %1128 = vmatpush1.bf16.msra.mxu0 %v1110
        %1129 = vmatprep.subr.bf16.mxu0 0
        %1130 = vmatpush1.bf16.msra.mxu0 %v1111
        %1131 = vmatprep.subr.bf16.mxu0 0
        %1132 = vmatpush1.bf16.msra.mxu0 %v1112
        %1133 = vmatprep.subr.bf16.mxu0 0
        %1134 = vmatpush1.bf16.msra.mxu0 %v1113
        %1135 = vmatprep.subr.bf16.mxu0 0
        %1136 = vmatpush1.bf16.msra.mxu0 %v1114
        %1137 = vmatprep.subr.bf16.mxu0 0
        %1138 = vmatpush1.bf16.msra.mxu0 %v1115
        %1139 = vmatprep.subr.bf16.mxu0 0
        %1140 = vmatpush1.bf16.msra.mxu0 %v1116
        %1141 = vmatprep.subr.bf16.mxu0 0
        %1142 = vmatpush1.bf16.msra.mxu0 0
        %1143 = vmatprep.subr.bf16.mxu0 0
        %1144 = vmatpush1.bf16.msra.mxu0 0
        %1145 = vmatprep.subr.bf16.mxu0 0
        %1146 = vmatpush1.bf16.msra.mxu0 0
        %1147 = vmatprep.subr.bf16.mxu0 0
        %1148 = vmatpush1.bf16.msra.mxu0 0
        %1149 = vmatprep.subr.bf16.mxu0 0
        %1150 = vmatpush1.bf16.msra.mxu0 0
        %1151 = vmatprep.subr.bf16.mxu0 0
        %1152 = vmatpush1.bf16.msra.mxu0 0
        %1153 = vmatprep.subr.bf16.mxu0 0
        %1154 = vmatpush1.bf16.msra.mxu0 0
        %1155 = vmatprep.subr.bf16.mxu0 0
        %1156 = vmatpush1.bf16.msra.mxu0 0
        %1157 = vmatprep.mubr.bf16.mxu0 0
        %1158 = vmatmul.mubr.bf16.gmra.mrb[0].mxu0 %v1053
        %v1159 = vpop.f32.mrb[0].mxu0
        %v1160 = vadd.f32 %v1075, %v1159
        %v1161 = vpop.f32.mrb[0].mxu0
        %v1162 = vpop.f32.mrb[0].mxu0
        %v1163 = vadd.f32 %v1075, %v1162
        %v1164 = vpop.f32.mrb[0].mxu0
        %1165 = vdwg.mxu0
        %v1166 = vld [vmem:[#allocation4] sm:$0xff]
        %v1167 = vld [vmem:[#allocation4 + $0x8] sm:$0xff]
        %v1168 = vadd.f32 %v1166, %v1160
        %v1169 = vadd.f32 %v1167, %v1163
        %vm1170 = vcmp.ge.f32.partialorder %v1168, 1.0
        %vm1171 = vcmp.ge.f32.partialorder %v1169, 1.0
        %v1172 = vsel %vm1170, 0.0, %v1168
        %v1173 = vsel %vm1171, 0.0, %v1169
        %1174 = vst [vmem:[#allocation4] sm:$0xff] %v1172
        %1175 = vst [vmem:[#allocation4 + $0x8] sm:$0xff] %v1173
        %v1176 = vsel %vm1170, 1, 0
        %v1177 = vsel %vm1171, 1, 0
        %v1178 = vcvt.s32.f32 %v1176
        %v1179 = vcvt.s32.f32 %v1177
        %v1180 = vpack.c.bf16 %v1179, %v1178
        %v1182 = vunpack.c.l.b16 %v1180
        %v1183 = vunpack.c.h.b16 %v1180
        %v1184 = vpack.c.b16 %v1182, %v1182
        %v1185 = vpack.c.b16 %v1183, %v1183
        %1188 = vst [vmem:[%s420] sm:$0xf] %v1184
        %1189 = vst [vmem:[%s420 + $0x4] sm:$0xf] %v1185
        %s1190 = smul.u32 2, %s21
        %p1191 = scmp.lt.s32.totalorder %s22, 3
        %s1192 = scalar_select %p1191, %s22, 3
        %p1193 = scmp.lt.s32.totalorder %s1190, 3
        %s1194 = scalar_select %p1193, %s1190, 3
        %s1195 = smul.addr %s1192, 4
        %s1196 = sadd.s32 %s1194, %s1195
        %s1197 = smul.addr %s1196, 4
        %s1198 = scalar_lea.vmem %s6, %s1197
        // Predicated region
        $region90: #{spiking_convmixer_forward.5} parent=80 // pred_check
          %p1199 = pneg %p187
        $region91: #{spiking_convmixer_forward.5} parent=80 // pred_check_branch
          %1201 = sbr.rel (%p1199) target = $region93
        $region92: #{spiking_convmixer_forward.5} parent=80 // pred_region
          %s1202 = smul.u32 2, %s21
        $region93: #{spiking_convmixer_forward.5} parent=80 // pred_fallthru
          _
      $region81: #{spiking_convmixer_forward.5} parent=5 // pred_fallthru
        _
      %p1203 = scmp.le.s32.totalorder 2, %s12
      // Predicated region
      $region94: #{spiking_convmixer_forward.5} parent=5 // pred_check
        %p1204 = pneg %p1203
      $region95: #{spiking_convmixer_forward.5} parent=5 // pred_check_branch
        %1206 = sbr.rel (%p1204) target = $region97
      $region96: #{spiking_convmixer_forward.5} parent=5 // pred_region
        %s1207 = ssub.s32 %s12, 2
        // Predicated region
        $region98: #{spiking_convmixer_forward.5} parent=96 // pred_check
          %p1208 = pneg %p193
        $region99: #{spiking_convmixer_forward.5} parent=96 // pred_check_branch
          %1210 = sbr.rel (%p1208) target = $region101
        $region100: #{spiking_convmixer_forward.5} parent=96 // pred_region
          %s1211 = smul.u32 2, %s23
          %p1212 = scmp.lt.s32.totalorder %s24, 3
          %s1213 = scalar_select %p1212, %s24, 3
          %p1214 = scmp.lt.s32.totalorder %s1211, 3
          %s1215 = scalar_select %p1214, %s1211, 3
          %s1216 = smul.addr %s1213, 4
          %s1217 = sadd.s32 %s1215, %s1216
          %s1218 = smul.addr %s1217, 4
          %s1219 = scalar_lea.vmem %s6, %s1218
        $region101: #{spiking_convmixer_forward.5} parent=96 // pred_fallthru
          _
      $region97: #{spiking_convmixer_forward.5} parent=5 // pred_fallthru
        _
    $region6: #{spiking_convmixer_forward.5} parent=1 // loop_footer
      %s16 = sadd.s32 1, %s12
    $region7: #{spiking_convmixer_forward.5} parent=1 // loop_footer_branch
      %11 = sbr.rel target = $region3
    $region8: #{spiking_convmixer_forward.5} parent=1 // loop_exit
      _

// kernel: spiking_convmixer_forward.4
$region0: #{spiking_convmixer_forward.4}
  #allocation0 [shape = 'u32[]', space=smem, size = 0x4, offset = 0x4, fixed_abs, tag = 'smem constant byte address 0x4 - core index']
  #allocation1 [shape = 'u32[144,128]{1,0:T(1,128)}', space=vmem, size = 0x12000, scoped, tag = 'internal scratch']
  %s0 = inlined_call_operand.vmem [shape: bf16[32,48], index: 0, kind: input, shape index: {}]
  %s1 = inlined_call_operand.vmem [shape: bf16[48,128], index: 1, kind: input, shape index: {}]
  %s2 = inlined_call_operand.vmem [shape: f32[1,128], index: 2, kind: input, shape index: {}]
  %s3 = inlined_call_operand.vmem [shape: bf16[4,32,128], index: 3, kind: output, shape index: {}]
  %s4 = sld [smem:[#allocation0]]
  $region82: #{spiking_convmixer_forward.4} parent=0
    _
  %s6 = ssub.s32 1, %s4
  %s7 = scalar_select 0, %s6, %s4
  $region1: #{spiking_convmixer_forward.4} parent=0
    #allocation2 [shape = 'u8[32768]{0}', space=vmem, size = 0x8000, scoped, tag = 'output window, operand 0']
    loop: start=0, step=1, limit=4
    $region2: #{spiking_convmixer_forward.4} parent=1 // loop_pre_header
      _
    $region3: #{spiking_convmixer_forward.4} parent=1 // loop_header
      %s9 = sphi 0, %s13
      %p10 = scmp.ge.s32.totalorder %s9, 4
      %s19 = sphi 0, %s21
      %s22 = sphi 0, %s19
      %s23 = sphi 0, %s22
      %s39 = sphi 0, %s23
      %s43 = sphi 0, %s43
      %s45 = sphi 0, %s43
      %s46 = sphi 0, %s45
      %s60 = sphi 0, %s46
      %s64 = sphi 0, %s64
      %s66 = sphi 0, %s64
      %s67 = sphi 0, %s66
      %s81 = sphi 0, %s67
      %s87 = sphi 0, %s89
      %s90 = sphi 0, %s87
      %s91 = sphi 0, %s90
      %s107 = sphi 0, %s91
    $region4: #{spiking_convmixer_forward.4} parent=1 // loop_header_branch
      %12 = sbr.rel (%p10) target = $region8
    $region5: #{spiking_convmixer_forward.4} parent=1 // loop_body
      %s14 = ssub.s32 %s9, 1
      %s15 = ssub.s32 %s9, 2
      %s16 = sadd.s32 %s9, 1
      %s17 = ssub.s32 %s9, %s16
      %p18 = scmp.eq.s32.totalorder %s17, 0
      %s20 = sadd.s32 %s19, 1
      %s21 = scalar_select %p18, %s19, %s20
      %p24 = pneg %p18
      %p25 = scmp.eq.s32.totalorder %s9, 1
      %p26 = por %p24, %p25
      %p27 = scmp.ne.s32.totalorder %s19, %s22
      %p28 = scmp.eq.s32.totalorder %s9, 0
      %p29 = por %p27, %p28
      %p30 = scmp.ne.s32.totalorder %s19, %s22
      %p31 = scmp.eq.s32.totalorder %s14, 1
      %p32 = por %p30, %p31
      %p33 = scmp.ne.s32.totalorder %s22, %s23
      %p34 = scmp.eq.s32.totalorder %s14, 0
      %p35 = por %p33, %p34
      %p36 = scmp.ne.s32.totalorder %s22, %s23
      %p37 = scmp.eq.s32.totalorder %s15, 1
      %p38 = por %p36, %p37
      %p40 = scmp.ne.s32.totalorder %s23, %s39
      %p41 = scmp.eq.s32.totalorder %s15, 0
      %p42 = por %p40, %p41
      %s44 = sadd.s32 %s43, 1
      %p47 = scmp.eq.s32.totalorder %s9, 1
      %p48 = scmp.ne.s32.totalorder %s43, %s45
      %p49 = scmp.eq.s32.totalorder %s9, 0
      %p50 = por %p48, %p49
      %p51 = scmp.ne.s32.totalorder %s43, %s45
      %p52 = scmp.eq.s32.totalorder %s14, 1
      %p53 = por %p51, %p52
      %p54 = scmp.ne.s32.totalorder %s45, %s46
      %p55 = scmp.eq.s32.totalorder %s14, 0
      %p56 = por %p54, %p55
      %p57 = scmp.ne.s32.totalorder %s45, %s46
      %p58 = scmp.eq.s32.totalorder %s15, 1
      %p59 = por %p57, %p58
      %p61 = scmp.ne.s32.totalorder %s46, %s60
      %p62 = scmp.eq.s32.totalorder %s15, 0
      %p63 = por %p61, %p62
      %s65 = sadd.s32 %s64, 1
      %p68 = scmp.eq.s32.totalorder %s9, 1
      %p69 = scmp.ne.s32.totalorder %s64, %s66
      %p70 = scmp.eq.s32.totalorder %s9, 0
      %p71 = por %p69, %p70
      %p72 = scmp.ne.s32.totalorder %s64, %s66
      %p73 = scmp.eq.s32.totalorder %s14, 1
      %p74 = por %p72, %p73
      %p75 = scmp.ne.s32.totalorder %s66, %s67
      %p76 = scmp.eq.s32.totalorder %s14, 0
      %p77 = por %p75, %p76
      %p78 = scmp.ne.s32.totalorder %s66, %s67
      %p79 = scmp.eq.s32.totalorder %s15, 1
      %p80 = por %p78, %p79
      %p82 = scmp.ne.s32.totalorder %s67, %s81
      %p83 = scmp.eq.s32.totalorder %s15, 0
      %p84 = por %p82, %p83
      %s85 = ssub.s32 %s9, %s16
      %p86 = scmp.eq.s32.totalorder %s85, 0
      %s88 = sadd.s32 %s87, 1
      %s89 = scalar_select %p86, %s87, %s88
      %p92 = pneg %p86
      %p93 = scmp.eq.s32.totalorder %s9, 1
      %p94 = por %p92, %p93
      %p95 = scmp.ne.s32.totalorder %s87, %s90
      %p96 = scmp.eq.s32.totalorder %s9, 0
      %p97 = por %p95, %p96
      %p98 = scmp.ne.s32.totalorder %s87, %s90
      %p99 = scmp.eq.s32.totalorder %s14, 1
      %p100 = por %p98, %p99
      %p101 = scmp.ne.s32.totalorder %s90, %s91
      %p102 = scmp.eq.s32.totalorder %s14, 0
      %p103 = por %p101, %p102
      %p104 = scmp.ne.s32.totalorder %s90, %s91
      %p105 = scmp.eq.s32.totalorder %s15, 1
      %p106 = por %p104, %p105
      %p108 = scmp.ne.s32.totalorder %s91, %s107
      %p109 = scmp.eq.s32.totalorder %s15, 0
      %p110 = por %p108, %p109
      %p111 = scmp.le.s32.totalorder 1, %s9
      %p112 = scmp.lt.s32.totalorder %s9, 3
      %p113 = pnand %p111, %p112
      %p114 = pneg %p113
      // Predicated region
      $region9: #{spiking_convmixer_forward.4} parent=5 // pred_check
        _
      $region10: #{spiking_convmixer_forward.4} parent=5 // pred_check_branch
        %116 = sbr.rel (%p113) target = $region12
      $region11: #{spiking_convmixer_forward.4} parent=5 // pred_region
        %s117 = ssub.s32 %s9, 1
        // Predicated region
        $region13: #{spiking_convmixer_forward.4} parent=11 // pred_check
          %p118 = pneg %p56
        $region14: #{spiking_convmixer_forward.4} parent=11 // pred_check_branch
          %120 = sbr.rel (%p118) target = $region16
        $region15: #{spiking_convmixer_forward.4} parent=11 // pred_region
          _
        $region16: #{spiking_convmixer_forward.4} parent=11 // pred_fallthru
          _
        // Predicated region
        $region17: #{spiking_convmixer_forward.4} parent=11 // pred_check
          %p121 = pneg %p77
        $region18: #{spiking_convmixer_forward.4} parent=11 // pred_check_branch
          %123 = sbr.rel (%p121) target = $region20
        $region19: #{spiking_convmixer_forward.4} parent=11 // pred_region
          _
        $region20: #{spiking_convmixer_forward.4} parent=11 // pred_fallthru
          _
      $region12: #{spiking_convmixer_forward.4} parent=5 // pred_fallthru
        _
      %p124 = scmp.lt.s32.totalorder %s9, 2
      // Predicated region
      $region21: #{spiking_convmixer_forward.4} parent=5 // pred_check
        %p125 = pneg %p124
      $region22: #{spiking_convmixer_forward.4} parent=5 // pred_check_branch
        %127 = sbr.rel (%p125) target = $region24
      $region23: #{spiking_convmixer_forward.4} parent=5 // pred_region
        // Predicated region
        $region25: #{spiking_convmixer_forward.4} parent=23 // pred_check
          %p128 = pneg %p29
        $region26: #{spiking_convmixer_forward.4} parent=23 // pred_check_branch
          %130 = sbr.rel (%p128) target = $region28
        $region27: #{spiking_convmixer_forward.4} parent=23 // pred_region
          %s131 = smul.u32 2, %s9
          %p132 = scmp.lt.s32.totalorder %s131, 3
          %s133 = scalar_select %p132, %s131, 3
          %s134 = smul.addr %s133, 4
          %s135 = scalar_lea.vmem %s0, %s134
          %s136 = smul.u32 2, %s9
        $region28: #{spiking_convmixer_forward.4} parent=23 // pred_fallthru
          _
      $region24: #{spiking_convmixer_forward.4} parent=5 // pred_fallthru
        _
      %p137 = scmp.le.s32.totalorder 1, %s9
      %p138 = scmp.lt.s32.totalorder %s9, 3
      %p139 = pnand %p137, %p138
      %p140 = pneg %p139
      // Predicated region
      $region29: #{spiking_convmixer_forward.4} parent=5 // pred_check
        _
      $region30: #{spiking_convmixer_forward.4} parent=5 // pred_check_branch
        %142 = sbr.rel (%p139) target = $region32
      $region31: #{spiking_convmixer_forward.4} parent=5 // pred_region
        %s143 = ssub.s32 %s9, 1
        %s144 = smul.u32 2, %s14
        %p145 = scmp.lt.s32.totalorder %s144, 3
        %s146 = scalar_select %p145, %s144, 3
        %s147 = smul.addr %s146, 4
        %s148 = scalar_lea.vmem %s0, %s147
        %p149 = pneg %p35
        %p150 = pneg %p32
        %p151 = pneg %p56
        %p152 = pneg %p53
        %p153 = pneg %p77
        %p154 = pneg %p74
        %p155 = pneg %p103
        %p156 = pneg %p100
        %s157 = sand.u32 %s90, 1
        %s158 = sand.u32 %s90, 1
        %s159 = smul.addr %s158, 32
        %s160 = scalar_lea.vmem [#allocation2], %s159
        %s161 = smul.u32 2, %s14
        %p162 = scmp.lt.s32.totalorder %s161, 3
        %s163 = scalar_select %p162, %s161, 3
        %s164 = smul.addr %s163, 4
        %s165 = scalar_lea.vmem %s0, %s164
        %s166 = smul.u32 2, %s14
        %s167 = smul.u32 2, %s14
        %v169 = vld [vmem:[%s165] sm:$0xf]
        %v170 = vld [vmem:[%s165 + $0x4] sm:$0xf]
        %v171 = vld [vmem:[%s1] sm:$0xf]
        %v172 = vld [vmem:[%s1 + $0x4] sm:$0xf]
        %v173 = vld [vmem:[%s1 + $0x8] sm:$0xf]
        %v174 = vld [vmem:[%s1 + $0xc] sm:$0xf]
        %v175 = vld [vmem:[%s1 + $0x10] sm:$0xf]
        %v176 = vld [vmem:[%s1 + $0x14] sm:$0xf]
        %v177 = vld [vmem:[%s2] sm:$0x1]
        %v179 = vlaneseq
        %v180 = vshrl.u32 %v179, 7
        %v181 = vsub.s32 0, %v180
        %v182 = vrot.slane %v177, %v181
        %v186 = vunpack.c.l.b16 %v169
        %v187 = vunpack.c.l.b16 %v170
        %v188 = vpack.c.b16 %v187, %v186
        %v195 = vunpack.c.l.b16 %v171
        %v196 = vunpack.c.l.b16 %v172
        %v197 = vunpack.c.l.b16 %v173
        %v198 = vunpack.c.l.b16 %v174
        %v199 = vunpack.c.l.b16 %v175
        %v200 = vunpack.c.l.b16 %v176
        %v201 = vpack.c.b16 %v196, %v195
        %v202 = vpack.c.b16 %v198, %v197
        %v203 = vpack.c.b16 %v200, %v199
        %vm207 = vcmask 392192
        %v209 = vsel %vm207, %v188, 0
        %211 = vmatprep.subr.bf16.mxu0 0
        %212 = vmatpush1.bf16.msra.mxu0 %v201
        %213 = vmatprep.subr.bf16.mxu0 0
        %214 = vmatpush1.bf16.msra.mxu0 %v202
        %215 = vmatprep.subr.bf16.mxu0 0
        %216 = vmatpush1.bf16.msra.mxu0 %v203
        %217 = vmatprep.subr.bf16.mxu0 0
        %218 = vmatpush1.bf16.msra.mxu0 0
        %219 = vmatprep.subr.bf16.mxu0 0
        %220 = vmatpush1.bf16.msra.mxu0 0
        %221 = vmatprep.subr.bf16.mxu0 0
        %222 = vmatpush1.bf16.msra.mxu0 0
        %223 = vmatprep.subr.bf16.mxu0 0
        %224 = vmatpush1.bf16.msra.mxu0 0
        %225 = vmatprep.subr.bf16.mxu0 0
        %226 = vmatpush1.bf16.msra.mxu0 0
        %227 = vmatprep.subr.bf16.mxu0 0
        %228 = vmatpush1.bf16.msra.mxu0 0
        %229 = vmatprep.subr.bf16.mxu0 0
        %230 = vmatpush1.bf16.msra.mxu0 0
        %231 = vmatprep.subr.bf16.mxu0 0
        %232 = vmatpush1.bf16.msra.mxu0 0
        %233 = vmatprep.subr.bf16.mxu0 0
        %234 = vmatpush1.bf16.msra.mxu0 0
        %235 = vmatprep.subr.bf16.mxu0 0
        %236 = vmatpush1.bf16.msra.mxu0 0
        %237 = vmatprep.subr.bf16.mxu0 0
        %238 = vmatpush1.bf16.msra.mxu0 0
        %239 = vmatprep.subr.bf16.mxu0 0
        %240 = vmatpush1.bf16.msra.mxu0 0
        %241 = vmatprep.subr.bf16.mxu0 0
        %242 = vmatpush1.bf16.msra.mxu0 0
        %243 = vmatprep.mubr.bf16.mxu0 0
        %244 = vmatmul.mubr.bf16.gmra.mrb[0].mxu0 %v209
        %v245 = vpop.f32.mrb[0].mxu0
        %v246 = vadd.f32 %v182, %v245
        %v247 = vpop.f32.mrb[0].mxu0
        %v248 = vpop.f32.mrb[0].mxu0
        %v249 = vadd.f32 %v182, %v248
        %v250 = vpop.f32.mrb[0].mxu0
        %251 = vdwg.mxu0
        %v252 = vadd.f32 %v246, 0.0
        %v253 = vadd.f32 %v249, 0.0
        %vm254 = vcmp.ge.f32.partialorder %v252, 1.0
        %vm255 = vcmp.ge.f32.partialorder %v253, 1.0
        %v256 = vsel %vm254, 1, 0
        %v257 = vsel %vm255, 1, 0
        %v258 = vcvt.s32.f32 %v256
        %v259 = vcvt.s32.f32 %v257
        %v260 = vpack.c.bf16 %v259, %v258
        %v262 = vunpack.c.l.b16 %v260
        %v263 = vunpack.c.h.b16 %v260
        %v264 = vpack.c.b16 %v262, %v262
        %v265 = vpack.c.b16 %v263, %v263
        %268 = vst [vmem:[%s160] sm:$0xf] %v264
        %269 = vst [vmem:[%s160 + $0x4] sm:$0xf] %v265
        %v270 = vsel %vm254, 0.0, %v252
        %v271 = vsel %vm255, 0.0, %v253
        %v272 = vadd.f32 %v270, %v246
        %v273 = vadd.f32 %v271, %v249
        %vm274 = vcmp.ge.f32.partialorder %v272, 1.0
        %vm275 = vcmp.ge.f32.partialorder %v273, 1.0
        %v276 = vsel %vm274, 1, 0
        %v277 = vsel %vm275, 1, 0
        %v278 = vcvt.s32.f32 %v276
        %v279 = vcvt.s32.f32 %v277
        %v280 = vpack.c.bf16 %v279, %v278
        %v282 = vunpack.c.l.b16 %v280
        %v283 = vunpack.c.h.b16 %v280
        %v284 = vpack.c.b16 %v282, %v282
        %v285 = vpack.c.b16 %v283, %v283
        %s288 = scalar_lea.vmem %s160, 8 [#allocation2]
        %289 = vst [vmem:[%s288] sm:$0xf] %v284
        %290 = vst [vmem:[%s288 + $0x4] sm:$0xf] %v285
        %v291 = vsel %vm274, 0.0, %v272
        %v292 = vsel %vm275, 0.0, %v273
        %v293 = vadd.f32 %v291, %v246
        %v294 = vadd.f32 %v292, %v249
        %vm295 = vcmp.ge.f32.partialorder %v293, 1.0
        %vm296 = vcmp.ge.f32.partialorder %v294, 1.0
        %v297 = vsel %vm295, 1, 0
        %v298 = vsel %vm296, 1, 0
        %v299 = vcvt.s32.f32 %v297
        %v300 = vcvt.s32.f32 %v298
        %v301 = vpack.c.bf16 %v300, %v299
        %v303 = vunpack.c.l.b16 %v301
        %v304 = vunpack.c.h.b16 %v301
        %v305 = vpack.c.b16 %v303, %v303
        %v306 = vpack.c.b16 %v304, %v304
        %s309 = scalar_lea.vmem %s160, 16 [#allocation2]
        %310 = vst [vmem:[%s309] sm:$0xf] %v305
        %311 = vst [vmem:[%s309 + $0x4] sm:$0xf] %v306
        %v312 = vsel %vm295, 0.0, %v293
        %v313 = vsel %vm296, 0.0, %v294
        %v314 = vadd.f32 %v312, %v246
        %v315 = vadd.f32 %v313, %v249
        %vm316 = vcmp.ge.f32.partialorder %v314, 1.0
        %vm317 = vcmp.ge.f32.partialorder %v315, 1.0
        %v318 = vsel %vm316, 1, 0
        %v319 = vsel %vm317, 1, 0
        %v320 = vcvt.s32.f32 %v318
        %v321 = vcvt.s32.f32 %v319
        %v322 = vpack.c.bf16 %v321, %v320
        %v324 = vunpack.c.l.b16 %v322
        %v325 = vunpack.c.h.b16 %v322
        %v326 = vpack.c.b16 %v324, %v324
        %v327 = vpack.c.b16 %v325, %v325
        %s330 = scalar_lea.vmem %s160, 24 [#allocation2]
        %331 = vst [vmem:[%s330] sm:$0xf] %v326
        %332 = vst [vmem:[%s330 + $0x4] sm:$0xf] %v327
        %s333 = sand.u32 %s90, 1
        %s334 = sand.u32 %s90, 1
        %s335 = smul.addr %s334, 32
        %s336 = scalar_lea.vmem [#allocation2], %s335
        // Predicated region
        $region33: #{spiking_convmixer_forward.4} parent=31 // pred_check
          %p337 = pneg %p100
        $region34: #{spiking_convmixer_forward.4} parent=31 // pred_check_branch
          %339 = sbr.rel (%p337) target = $region36
        $region35: #{spiking_convmixer_forward.4} parent=31 // pred_region
          %s340 = smul.u32 2, %s14
          %s341 = smul.addr %s340, 4
          %s342 = scalar_lea.vmem %s3, %s341
          // Predicated region
          $region37: #{spiking_convmixer_forward.4} parent=35 // pred_check
            _
          $region38: #{spiking_convmixer_forward.4} parent=35 // pred_check_branch
            %344 = sbr.rel (0) target = $region40
          $region39: #{spiking_convmixer_forward.4} parent=35 // pred_region
            // Predicated region
            $region41: #{spiking_convmixer_forward.4} parent=39 // pred_check
              _
            $region42: #{spiking_convmixer_forward.4} parent=39 // pred_check_branch
              %346 = sbr.rel target = $region44
            $region43: #{spiking_convmixer_forward.4} parent=39 // pred_region
              // Predicated region
              $region56: #{spiking_convmixer_forward.4} parent=43 // pred_check
                _
              $region57: #{spiking_convmixer_forward.4} parent=43 // pred_check_branch
                %375 = sbr.rel (0) target = $region59
              $region58: #{spiking_convmixer_forward.4} parent=43 // pred_region
                loop: start=0, step=1, limit=1
                $region60: #{spiking_convmixer_forward.4} parent=58 // loop_pre_header
                  _
                $region61: #{spiking_convmixer_forward.4} parent=58 // loop_header
                  %s377 = sphi 0, %s381
                  %p378 = scmp.ge.s32.totalorder %s377, 1
                  %s382 = sphi %s336, %s336
                  %s383 = sphi %s342, %s342
                $region62: #{spiking_convmixer_forward.4} parent=58 // loop_header_branch
                  %380 = sbr.rel (%p378) target = $region66
                $region63: #{spiking_convmixer_forward.4} parent=58 // loop_body
                  _
                $region64: #{spiking_convmixer_forward.4} parent=58 // loop_footer
                  %s381 = sadd.s32 1, %s377
                $region65: #{spiking_convmixer_forward.4} parent=58 // loop_footer_branch
                  %376 = sbr.rel target = $region61
                $region66: #{spiking_convmixer_forward.4} parent=58 // loop_exit
                  _
                loop: start=0, step=1, limit=1
                $region67: #{spiking_convmixer_forward.4} parent=58 // loop_pre_header
                  _
                $region68: #{spiking_convmixer_forward.4} parent=58 // loop_header
                  %s386 = sphi 0, %s390
                  %p387 = scmp.ge.s32.totalorder %s386, 1
                  %s391 = sphi %s336, %s336
                  %s392 = sphi %s342, %s342
                $region69: #{spiking_convmixer_forward.4} parent=58 // loop_header_branch
                  %389 = sbr.rel (%p387) target = $region73
                $region70: #{spiking_convmixer_forward.4} parent=58 // loop_body
                  %v393 = vld [vmem:[%s391] sm:$0xf]
                  %394 = vst [vmem:[%s392] sm:$0xf] %v393
                  %v395 = vld [vmem:[%s391 + $0x4] sm:$0xf]
                  %396 = vst [vmem:[%s392 + $0x4] sm:$0xf] %v395
                  %v397 = vld [vmem:[%s391 + $0x8] sm:$0xf]
                  %398 = vst [vmem:[%s392 + $0x10] sm:$0xf] %v397
                  %v399 = vld [vmem:[%s391 + $0xc] sm:$0xf]
                  %400 = vst [vmem:[%s392 + $0x14] sm:$0xf] %v399
                  %v401 = vld [vmem:[%s391 + $0x10] sm:$0xf]
                  %402 = vst [vmem:[%s392 + $0x20] sm:$0xf] %v401
                  %v403 = vld [vmem:[%s391 + $0x14] sm:$0xf]
                  %404 = vst [vmem:[%s392 + $0x24] sm:$0xf] %v403
                  %v405 = vld [vmem:[%s391 + $0x18] sm:$0xf]
                  %406 = vst [vmem:[%s392 + $0x30] sm:$0xf] %v405
                  %v407 = vld [vmem:[%s391 + $0x1c] sm:$0xf]
                  %408 = vst [vmem:[%s392 + $0x34] sm:$0xf] %v407
                $region71: #{spiking_convmixer_forward.4} parent=58 // loop_footer
                  %s390 = sadd.s32 1, %s386
                $region72: #{spiking_convmixer_forward.4} parent=58 // loop_footer_branch
                  %385 = sbr.rel target = $region68
                $region73: #{spiking_convmixer_forward.4} parent=58 // loop_exit
                  _
              $region59: #{spiking_convmixer_forward.4} parent=43 // pred_fallthru
                _
            $region44: #{spiking_convmixer_forward.4} parent=39 // pred_fallthru
              _
            // Predicated region
            $region45: #{spiking_convmixer_forward.4} parent=39 // pred_check
              _
            $region46: #{spiking_convmixer_forward.4} parent=39 // pred_check_branch
              %348 = sbr.rel (0) target = $region48
            $region47: #{spiking_convmixer_forward.4} parent=39 // pred_region
              loop: start=0, step=1, limit=1
              $region49: #{spiking_convmixer_forward.4} parent=47 // loop_pre_header
                _
              $region50: #{spiking_convmixer_forward.4} parent=47 // loop_header
                %s351 = sphi 0, %s355
                %p352 = scmp.ge.s32.totalorder %s351, 1
                %s356 = sphi %s336, %s336
                %s357 = sphi %s342, %s342
              $region51: #{spiking_convmixer_forward.4} parent=47 // loop_header_branch
                %354 = sbr.rel (%p352) target = $region55
              $region52: #{spiking_convmixer_forward.4} parent=47 // loop_body
                %v358 = vld [vmem:[%s356] sm:$0xf]
                %359 = vst [vmem:[%s357] sm:$0xf] %v358
                %v360 = vld [vmem:[%s356 + $0x4] sm:$0xf]
                %361 = vst [vmem:[%s357 + $0x4] sm:$0xf] %v360
                %v362 = vld [vmem:[%s356 + $0x8] sm:$0xf]
                %363 = vst [vmem:[%s357 + $0x10] sm:$0xf] %v362
                %v364 = vld [vmem:[%s356 + $0xc] sm:$0xf]
                %365 = vst [vmem:[%s357 + $0x14] sm:$0xf] %v364
                %v366 = vld [vmem:[%s356 + $0x10] sm:$0xf]
                %367 = vst [vmem:[%s357 + $0x20] sm:$0xf] %v366
                %v368 = vld [vmem:[%s356 + $0x14] sm:$0xf]
                %369 = vst [vmem:[%s357 + $0x24] sm:$0xf] %v368
                %v370 = vld [vmem:[%s356 + $0x18] sm:$0xf]
                %371 = vst [vmem:[%s357 + $0x30] sm:$0xf] %v370
                %v372 = vld [vmem:[%s356 + $0x1c] sm:$0xf]
                %373 = vst [vmem:[%s357 + $0x34] sm:$0xf] %v372
              $region53: #{spiking_convmixer_forward.4} parent=47 // loop_footer
                %s355 = sadd.s32 1, %s351
              $region54: #{spiking_convmixer_forward.4} parent=47 // loop_footer_branch
                %350 = sbr.rel target = $region50
              $region55: #{spiking_convmixer_forward.4} parent=47 // loop_exit
                _
            $region48: #{spiking_convmixer_forward.4} parent=39 // pred_fallthru
              _
          $region40: #{spiking_convmixer_forward.4} parent=35 // pred_fallthru
            _
          %409 = vnop
        $region36: #{spiking_convmixer_forward.4} parent=31 // pred_fallthru
          _
      $region32: #{spiking_convmixer_forward.4} parent=5 // pred_fallthru
        _
      %p410 = scmp.le.s32.totalorder 2, %s9
      // Predicated region
      $region74: #{spiking_convmixer_forward.4} parent=5 // pred_check
        %p411 = pneg %p410
      $region75: #{spiking_convmixer_forward.4} parent=5 // pred_check_branch
        %413 = sbr.rel (%p411) target = $region77
      $region76: #{spiking_convmixer_forward.4} parent=5 // pred_region
        %s414 = ssub.s32 %s9, 2
        // Predicated region
        $region78: #{spiking_convmixer_forward.4} parent=76 // pred_check
          %p415 = pneg %p106
        $region79: #{spiking_convmixer_forward.4} parent=76 // pred_check_branch
          %417 = sbr.rel (%p415) target = $region81
        $region80: #{spiking_convmixer_forward.4} parent=76 // pred_region
          %s418 = sand.u32 %s91, 1
          %s419 = sand.u32 %s91, 1
          %s420 = smul.addr %s419, 32
          %s421 = scalar_lea.vmem [#allocation2], %s420
        $region81: #{spiking_convmixer_forward.4} parent=76 // pred_fallthru
          _
      $region77: #{spiking_convmixer_forward.4} parent=5 // pred_fallthru
        _
    $region6: #{spiking_convmixer_forward.4} parent=1 // loop_footer
      %s13 = sadd.s32 1, %s9
    $region7: #{spiking_convmixer_forward.4} parent=1 // loop_footer_branch
      %8 = sbr.rel target = $region3
    $region8: #{spiking_convmixer_forward.4} parent=1 // loop_exit
      _

// kernel: spiking_convmixer_forward.7
$region0: #{spiking_convmixer_forward.7}
  #allocation0 [shape = 'u32[]', space=smem, size = 0x4, offset = 0x4, fixed_abs, tag = 'smem constant byte address 0x4 - core index']
  #allocation1 [shape = 'u32[144,128]{1,0:T(1,128)}', space=vmem, size = 0x12000, scoped, tag = 'internal scratch']
  #allocation2 [shape = 'f32[2,128]{1,0:T(2,128)}', space=vmem, size = 0x400, scoped, tag = 'scratch operand']
  %s0 = inlined_call_operand.vmem [shape: bf16[4,2,16,128], index: 0, kind: input, shape index: {}]
  %s1 = inlined_call_operand.vmem [shape: f32[128,128], index: 1, kind: input, shape index: {}]
  %s2 = inlined_call_operand.vmem [shape: f32[1,128], index: 2, kind: input, shape index: {}]
  %s3 = inlined_call_operand.hbm [shape: f32[2,128], index: 3, kind: output, shape index: {}]
  %s4 = sld [smem:[#allocation0]]
  $region53: #{spiking_convmixer_forward.7} parent=0
    _
  %s6 = ssub.s32 1, %s4
  %s7 = scalar_select 0, %s6, %s4
  $region1: #{spiking_convmixer_forward.7} parent=0
    #allocation3 [shape = 'u8[1024]{0}', space=vmem, size = 0x400, scoped, tag = 'output window, operand 0, single buffered']
    #allocation4 [shape = 's32[2]{0}', space=sflag, size = 0x8, scoped, tag = 'scoped memory for spiking_convmixer_forward.7']
    %8 = vsyncpa [#allocation4], 0
    loop: start=0, step=1, limit=6
    $region2: #{spiking_convmixer_forward.7} parent=1 // loop_pre_header
      _
    $region3: #{spiking_convmixer_forward.7} parent=1 // loop_header
      %s10 = sphi 0, %s14
      %p11 = scmp.ge.s32.totalorder %s10, 6
      %s17 = sphi 0, %s29
      %s18 = sphi 0, %s25
      %s19 = sphi 0, %s17
      %s20 = sphi 0, %s18
      %s21 = sphi 0, %s19
      %s22 = sphi 0, %s20
      %s34 = sphi 0, %s36
      %s37 = sphi 0, %s34
      %s38 = sphi 0, %s37
      %s54 = sphi 0, %s38
      %s58 = sphi 0, %s58
      %s60 = sphi 0, %s58
      %s61 = sphi 0, %s60
      %s75 = sphi 0, %s61
      %s79 = sphi 0, %s79
      %s81 = sphi 0, %s79
      %s82 = sphi 0, %s81
      %s96 = sphi 0, %s82
      %s102 = sphi 0, %s104
      %s105 = sphi 0, %s102
      %s106 = sphi 0, %s105
      %s122 = sphi 0, %s106
    $region4: #{spiking_convmixer_forward.7} parent=1 // loop_header_branch
      %13 = sbr.rel (%p11) target = $region8
    $region5: #{spiking_convmixer_forward.7} parent=1 // loop_body
      %s15 = ssub.s32 %s10, 1
      %s16 = ssub.s32 %s10, 2
      %s23 = sadd.s32 1, %s18
      %p24 = scmp.ge.s32.totalorder %s23, 4
      %s25 = scalar_select %p24, 0, %s23
      %s26 = sadd.s32 1, %s17
      %s27 = scalar_select %p24, %s26, %s17
      %p28 = scmp.ge.s32.totalorder %s27, 1
      %s29 = scalar_select %p28, 0, %s27
      %s30 = ssub.s32 %s18, %s25
      %s31 = ssub.s32 %s17, %s29
      %s32 = sor.u32 %s30, %s31
      %p33 = scmp.eq.s32.totalorder %s32, 0
      %s35 = sadd.s32 %s34, 1
      %s36 = scalar_select %p33, %s34, %s35
      %p39 = pneg %p33
      %p40 = scmp.eq.s32.totalorder %s10, 3
      %p41 = por %p39, %p40
      %p42 = scmp.ne.s32.totalorder %s34, %s37
      %p43 = scmp.eq.s32.totalorder %s10, 0
      %p44 = por %p42, %p43
      %p45 = scmp.ne.s32.totalorder %s34, %s37
      %p46 = scmp.eq.s32.totalorder %s15, 3
      %p47 = por %p45, %p46
      %p48 = scmp.ne.s32.totalorder %s37, %s38
      %p49 = scmp.eq.s32.totalorder %s15, 0
      %p50 = por %p48, %p49
      %p51 = scmp.ne.s32.totalorder %s37, %s38
      %p52 = scmp.eq.s32.totalorder %s16, 3
      %p53 = por %p51, %p52
      %p55 = scmp.ne.s32.totalorder %s38, %s54
      %p56 = scmp.eq.s32.totalorder %s16, 0
      %p57 = por %p55, %p56
      %s59 = sadd.s32 %s58, 1
      %p62 = scmp.eq.s32.totalorder %s10, 3
      %p63 = scmp.ne.s32.totalorder %s58, %s60
      %p64 = scmp.eq.s32.totalorder %s10, 0
      %p65 = por %p63, %p64
      %p66 = scmp.ne.s32.totalorder %s58, %s60
      %p67 = scmp.eq.s32.totalorder %s15, 3
      %p68 = por %p66, %p67
      %p69 = scmp.ne.s32.totalorder %s60, %s61
      %p70 = scmp.eq.s32.totalorder %s15, 0
      %p71 = por %p69, %p70
      %p72 = scmp.ne.s32.totalorder %s60, %s61
      %p73 = scmp.eq.s32.totalorder %s16, 3
      %p74 = por %p72, %p73
      %p76 = scmp.ne.s32.totalorder %s61, %s75
      %p77 = scmp.eq.s32.totalorder %s16, 0
      %p78 = por %p76, %p77
      %s80 = sadd.s32 %s79, 1
      %p83 = scmp.eq.s32.totalorder %s10, 3
      %p84 = scmp.ne.s32.totalorder %s79, %s81
      %p85 = scmp.eq.s32.totalorder %s10, 0
      %p86 = por %p84, %p85
      %p87 = scmp.ne.s32.totalorder %s79, %s81
      %p88 = scmp.eq.s32.totalorder %s15, 3
      %p89 = por %p87, %p88
      %p90 = scmp.ne.s32.totalorder %s81, %s82
      %p91 = scmp.eq.s32.totalorder %s15, 0
      %p92 = por %p90, %p91
      %p93 = scmp.ne.s32.totalorder %s81, %s82
      %p94 = scmp.eq.s32.totalorder %s16, 3
      %p95 = por %p93, %p94
      %p97 = scmp.ne.s32.totalorder %s82, %s96
      %p98 = scmp.eq.s32.totalorder %s16, 0
      %p99 = por %p97, %p98
      %s100 = ssub.s32 %s17, %s29
      %p101 = scmp.eq.s32.totalorder %s100, 0
      %s103 = sadd.s32 %s102, 1
      %s104 = scalar_select %p101, %s102, %s103
      %p107 = pneg %p101
      %p108 = scmp.eq.s32.totalorder %s10, 3
      %p109 = por %p107, %p108
      %p110 = scmp.ne.s32.totalorder %s102, %s105
      %p111 = scmp.eq.s32.totalorder %s10, 0
      %p112 = por %p110, %p111
      %p113 = scmp.ne.s32.totalorder %s102, %s105
      %p114 = scmp.eq.s32.totalorder %s15, 3
      %p115 = por %p113, %p114
      %p116 = scmp.ne.s32.totalorder %s105, %s106
      %p117 = scmp.eq.s32.totalorder %s15, 0
      %p118 = por %p116, %p117
      %p119 = scmp.ne.s32.totalorder %s105, %s106
      %p120 = scmp.eq.s32.totalorder %s16, 3
      %p121 = por %p119, %p120
      %p123 = scmp.ne.s32.totalorder %s106, %s122
      %p124 = scmp.eq.s32.totalorder %s16, 0
      %p125 = por %p123, %p124
      %p126 = scmp.le.s32.totalorder 1, %s10
      %p127 = scmp.lt.s32.totalorder %s10, 5
      %p128 = pnand %p126, %p127
      %p129 = pneg %p128
      // Predicated region
      $region9: #{spiking_convmixer_forward.7} parent=5 // pred_check
        _
      $region10: #{spiking_convmixer_forward.7} parent=5 // pred_check_branch
        %131 = sbr.rel (%p128) target = $region12
      $region11: #{spiking_convmixer_forward.7} parent=5 // pred_region
        %s132 = ssub.s32 %s10, 1
        // Predicated region
        $region13: #{spiking_convmixer_forward.7} parent=11 // pred_check
          %p133 = pneg %p71
        $region14: #{spiking_convmixer_forward.7} parent=11 // pred_check_branch
          %135 = sbr.rel (%p133) target = $region16
        $region15: #{spiking_convmixer_forward.7} parent=11 // pred_region
          _
        $region16: #{spiking_convmixer_forward.7} parent=11 // pred_fallthru
          _
        // Predicated region
        $region17: #{spiking_convmixer_forward.7} parent=11 // pred_check
          %p136 = pneg %p92
        $region18: #{spiking_convmixer_forward.7} parent=11 // pred_check_branch
          %138 = sbr.rel (%p136) target = $region20
        $region19: #{spiking_convmixer_forward.7} parent=11 // pred_region
          _
        $region20: #{spiking_convmixer_forward.7} parent=11 // pred_fallthru
          _
      $region12: #{spiking_convmixer_forward.7} parent=5 // pred_fallthru
        _
      %p139 = scmp.lt.s32.totalorder %s10, 4
      // Predicated region
      $region21: #{spiking_convmixer_forward.7} parent=5 // pred_check
        %p140 = pneg %p139
      $region22: #{spiking_convmixer_forward.7} parent=5 // pred_check_branch
        %142 = sbr.rel (%p140) target = $region24
      $region23: #{spiking_convmixer_forward.7} parent=5 // pred_region
        // Predicated region
        $region25: #{spiking_convmixer_forward.7} parent=23 // pred_check
          %p143 = pneg %p44
        $region26: #{spiking_convmixer_forward.7} parent=23 // pred_check_branch
          %145 = sbr.rel (%p143) target = $region28
        $region27: #{spiking_convmixer_forward.7} parent=23 // pred_region
          %s146 = smul.u32 2, %s17
          %p147 = scmp.lt.s32.totalorder %s18, 3
          %s148 = scalar_select %p147, %s18, 3
          %p149 = scmp.lt.s32.totalorder %s146, 1
          %s150 = scalar_select %p149, %s146, 1
          %s151 = smul.addr %s150, 2
          %s152 = smul.addr %s148, 4
          %s153 = sadd.s32 %s151, %s152
          %s154 = smul.addr %s153, 4
          %s155 = scalar_lea.vmem %s0, %s154
          %s156 = smul.u32 2, %s17
        $region28: #{spiking_convmixer_forward.7} parent=23 // pred_fallthru
          _
      $region24: #{spiking_convmixer_forward.7} parent=5 // pred_fallthru
        _
      %p157 = scmp.le.s32.totalorder 1, %s10
      %p158 = scmp.lt.s32.totalorder %s10, 5
      %p159 = pnand %p157, %p158
      %p160 = pneg %p159
      // Predicated region
      $region29: #{spiking_convmixer_forward.7} parent=5 // pred_check
        _
      $region30: #{spiking_convmixer_forward.7} parent=5 // pred_check_branch
        %162 = sbr.rel (%p159) target = $region32
      $region31: #{spiking_convmixer_forward.7} parent=5 // pred_region
        %s163 = ssub.s32 %s10, 1
        %s164 = smul.u32 2, %s19
        %p165 = scmp.lt.s32.totalorder %s20, 3
        %s166 = scalar_select %p165, %s20, 3
        %p167 = scmp.lt.s32.totalorder %s164, 1
        %s168 = scalar_select %p167, %s164, 1
        %s169 = smul.addr %s168, 2
        %s170 = smul.addr %s166, 4
        %s171 = sadd.s32 %s169, %s170
        %s172 = smul.addr %s171, 4
        %s173 = scalar_lea.vmem %s0, %s172
        %p174 = pneg %p50
        %p175 = pneg %p47
        %p176 = pneg %p71
        %p177 = pneg %p68
        %p178 = pneg %p92
        %p179 = pneg %p89
        %p180 = pneg %p118
        %p181 = pneg %p115
        %s182 = smul.u32 2, %s19
        %p183 = scmp.lt.s32.totalorder %s20, 3
        %s184 = scalar_select %p183, %s20, 3
        %p185 = scmp.lt.s32.totalorder %s182, 1
        %s186 = scalar_select %p185, %s182, 1
        %s187 = smul.addr %s186, 2
        %s188 = smul.addr %s184, 4
        %s189 = sadd.s32 %s187, %s188
        %s190 = smul.addr %s189, 4
        %s191 = scalar_lea.vmem %s0, %s190
        %s192 = smul.u32 2, %s19
        %p193 = scmp.eq.s32.totalorder %s20, 0
        // Predicated region
        $region33: #{spiking_convmixer_forward.7} parent=31 // pred_check
          %p194 = pneg %p193
        $region34: #{spiking_convmixer_forward.7} parent=31 // pred_check_branch
          %196 = sbr.rel (%p194) target = $region36
        $region35: #{spiking_convmixer_forward.7} parent=31 // pred_region
          %197 = vst [vmem:[#allocation2] sm:$0x3] 0.0
        $region36: #{spiking_convmixer_forward.7} parent=31 // pred_fallthru
          _
        %v198 = vld [vmem:[#allocation2] sm:$0x3]
        %v199 = vld [vmem:[%s191] sm:$0xf]
        %v200 = vld [vmem:[%s191 + $0x4] sm:$0xf]
        %v201 = vld [vmem:[%s191 + $0x8] sm:$0xf]
        %v202 = vld [vmem:[%s191 + $0xc] sm:$0xf]
        %v203 = vunpack.c.l.bf16 %v199
        %v204 = vunpack.c.l.bf16 %v200
        %v205 = vunpack.c.l.bf16 %v201
        %v206 = vunpack.c.l.bf16 %v202
        %v207 = vadd.f32 %v203, %v204
        %v208 = vrot.slane %v207, 4
        %v209 = vadd.f32 %v207, %v208
        %v210 = vrot.slane %v209, 2
        %v211 = vadd.f32 %v209, %v210
        %v212 = vrot.slane %v211, 1
        %v213 = vadd.f32 %v211, %v212
        %v214 = vadd.f32 %v205, %v206
        %v215 = vrot.slane %v214, 4
        %v216 = vadd.f32 %v214, %v215
        %v217 = vrot.slane %v216, 2
        %v218 = vadd.f32 %v216, %v217
        %v219 = vrot.slane %v218, 1
        %v220 = vadd.f32 %v218, %v219
        %vm223 = vcmask 1041409
        %v224 = vsel %vm223, %v220, %v213
        %v226 = vadd.f32 %v198, %v224
        %227 = vst [vmem:[#allocation2] sm:$0x3] %v226
        %p228 = scmp.eq.s32.totalorder %s20, 3
        // Predicated region
        $region37: #{spiking_convmixer_forward.7} parent=31 // pred_check
          %p229 = pneg %p228
        $region38: #{spiking_convmixer_forward.7} parent=31 // pred_check_branch
          %231 = sbr.rel (%p229) target = $region40
        $region39: #{spiking_convmixer_forward.7} parent=31 // pred_region
          %v232 = vld [vmem:[#allocation2] sm:$0x3]
          %v233 = vmul.f32 %v232, 0.015625
          %v234 = vld [vmem:[%s1] sm:$0xff]
          %v235 = vld [vmem:[%s1 + $0x8] sm:$0xff]
          %v236 = vld [vmem:[%s1 + $0x10] sm:$0xff]
          %v237 = vld [vmem:[%s1 + $0x18] sm:$0xff]
          %v238 = vld [vmem:[%s1 + $0x20] sm:$0xff]
          %v239 = vld [vmem:[%s1 + $0x28] sm:$0xff]
          %v240 = vld [vmem:[%s1 + $0x30] sm:$0xff]
          %v241 = vld [vmem:[%s1 + $0x38] sm:$0xff]
          %v242 = vld [vmem:[%s1 + $0x40] sm:$0xff]
          %v243 = vld [vmem:[%s1 + $0x48] sm:$0xff]
          %v244 = vld [vmem:[%s1 + $0x50] sm:$0xff]
          %v245 = vld [vmem:[%s1 + $0x58] sm:$0xff]
          %v246 = vld [vmem:[%s1 + $0x60] sm:$0xff]
          %v247 = vld [vmem:[%s1 + $0x68] sm:$0xff]
          %v248 = vld [vmem:[%s1 + $0x70] sm:$0xff]
          %v249 = vld [vmem:[%s1 + $0x78] sm:$0xff]
          %v250 = vld [vmem:[%s2] sm:$0x1]
          %v252 = vlaneseq
          %v253 = vshrl.u32 %v252, 7
          %v254 = vsub.s32 0, %v253
          %v255 = vrot.slane %v250, %v254
          %257 = vmatprep.subr.mxu0 0.0
          %258 = vmatpush1.msra.mxu0 %v234
          %259 = vmatprep.subr.mxu0 0.0
          %260 = vmatpush1.msra.mxu0 %v235
          %261 = vmatprep.subr.mxu0 0.0
          %262 = vmatpush1.msra.mxu0 %v236
          %263 = vmatprep.subr.mxu0 0.0
          %264 = vmatpush1.msra.mxu0 %v237
          %265 = vmatprep.subr.mxu0 0.0
          %266 = vmatpush1.msra.mxu0 %v238
          %267 = vmatprep.subr.mxu0 0.0
          %268 = vmatpush1.msra.mxu0 %v239
          %269 = vmatprep.subr.mxu0 0.0
          %270 = vmatpush1.msra.mxu0 %v240
          %271 = vmatprep.subr.mxu0 0.0
          %272 = vmatpush1.msra.mxu0 %v241
          %273 = vmatprep.subr.mxu0 0.0
          %274 = vmatpush1.msra.mxu0 %v242
          %275 = vmatprep.subr.mxu0 0.0
          %276 = vmatpush1.msra.mxu0 %v243
          %277 = vmatprep.subr.mxu0 0.0
          %278 = vmatpush1.msra.mxu0 %v244
          %279 = vmatprep.subr.mxu0 0.0
          %280 = vmatpush1.msra.mxu0 %v245
          %281 = vmatprep.subr.mxu0 0.0
          %282 = vmatpush1.msra.mxu0 %v246
          %283 = vmatprep.subr.mxu0 0.0
          %284 = vmatpush1.msra.mxu0 %v247
          %285 = vmatprep.subr.mxu0 0.0
          %286 = vmatpush1.msra.mxu0 %v248
          %287 = vmatprep.subr.mxu0 0.0
          %288 = vmatpush1.msra.mxu0 %v249
          %289 = vmatprep.subr.mxu0 0.0
          %290 = vmatpush1.msra.mxu0 0.0
          %291 = vmatprep.subr.mxu0 0.0
          %292 = vmatpush1.msra.mxu0 0.0
          %293 = vmatprep.subr.mxu0 0.0
          %294 = vmatpush1.msra.mxu0 0.0
          %295 = vmatprep.subr.mxu0 0.0
          %296 = vmatpush1.msra.mxu0 0.0
          %297 = vmatprep.subr.mxu0 0.0
          %298 = vmatpush1.msra.mxu0 0.0
          %299 = vmatprep.subr.mxu0 0.0
          %300 = vmatpush1.msra.mxu0 0.0
          %301 = vmatprep.subr.mxu0 0.0
          %302 = vmatpush1.msra.mxu0 0.0
          %303 = vmatprep.subr.mxu0 0.0
          %304 = vmatpush1.msra.mxu0 0.0
          %305 = vmatprep.subr.mxu0 0.0
          %306 = vmatpush1.msra.mxu0 0.0
          %307 = vmatprep.subr.mxu0 0.0
          %308 = vmatpush1.msra.mxu0 0.0
          %309 = vmatprep.subr.mxu0 0.0
          %310 = vmatpush1.msra.mxu0 0.0
          %311 = vmatprep.subr.mxu0 0.0
          %312 = vmatpush1.msra.mxu0 0.0
          %313 = vmatprep.subr.mxu0 0.0
          %314 = vmatpush1.msra.mxu0 0.0
          %315 = vmatprep.subr.mxu0 0.0
          %316 = vmatpush1.msra.mxu0 0.0
          %317 = vmatprep.subr.mxu0 0.0
          %318 = vmatpush1.msra.mxu0 0.0
          %319 = vmatprep.subr.mxu0 0.0
          %320 = vmatpush1.msra.mxu0 0.0
          %321 = vmatprep.mubr.f32.mxu0 0.0
          %322 = vmatmul.mubr.f32.gmra.mrb[0].mxu0 %v233
          %v323 = vpop.f32.mrb[0].mxu0
          %v324 = vadd.f32 %v255, %v323
          %v325 = vpop.f32.mrb[0].mxu0
          %326 = vdwg.mxu0
          %327 = vst [vmem:[#allocation3] sm:$0x3] %v324
        $region40: #{spiking_convmixer_forward.7} parent=31 // pred_fallthru
          _
        // Predicated region
        $region41: #{spiking_convmixer_forward.7} parent=31 // pred_check
          %p328 = pneg %p115
        $region42: #{spiking_convmixer_forward.7} parent=31 // pred_check_branch
          %330 = sbr.rel (%p328) target = $region44
        $region43: #{spiking_convmixer_forward.7} parent=31 // pred_region
          %s332 = ssub.s32 32, 32
          %333 = vsyncadd [#allocation4], %s332
          %s334 = smul.addr %s19, 32
          %s335 = scalar_lea.hbm %s3, %s334
          %s337 = sshll.u32 [#allocation3], 4
          %s338 = int_to_ptr.vmem [resolvable:$true] %s337
          %340 = dma.vmem_to_hbm [thread:$0]  %s338, 32, %s335, [#allocation4]
        $region44: #{spiking_convmixer_forward.7} parent=31 // pred_fallthru
          _
        // Predicated region
        $region45: #{spiking_convmixer_forward.7} parent=31 // pred_check
          %p341 = pneg %p115
        $region46: #{spiking_convmixer_forward.7} parent=31 // pred_check_branch
          %343 = sbr.rel (%p341) target = $region48
        $region47: #{spiking_convmixer_forward.7} parent=31 // pred_region
          %344 = dma.done [#allocation4], 32
        $region48: #{spiking_convmixer_forward.7} parent=31 // pred_fallthru
          _
      $region32: #{spiking_convmixer_forward.7} parent=5 // pred_fallthru
        _
      %p345 = scmp.le.s32.totalorder 2, %s10
      // Predicated region
      $region49: #{spiking_convmixer_forward.7} parent=5 // pred_check
        %p346 = pneg %p345
      $region50: #{spiking_convmixer_forward.7} parent=5 // pred_check_branch
        %348 = sbr.rel (%p346) target = $region52
      $region51: #{spiking_convmixer_forward.7} parent=5 // pred_region
        %s349 = ssub.s32 %s10, 2
      $region52: #{spiking_convmixer_forward.7} parent=5 // pred_fallthru
        _
    $region6: #{spiking_convmixer_forward.7} parent=1 // loop_footer
      %s14 = sadd.s32 1, %s10
    $region7: #{spiking_convmixer_forward.7} parent=1 // loop_footer_branch
      %9 = sbr.rel target = $region3
    $region8: #{spiking_convmixer_forward.7} parent=1 // loop_exit
      _
    %350 = vsyncpa [#allocation4], 1
    %s351 = scalar_lea.sflag [#allocation4], 1
    %352 = vsyncpa %s351, 1

// kernel: spiking_convmixer_forward.5
$region0: #{spiking_convmixer_forward.5}
  #allocation0 [shape = 'u32[]', space=smem, size = 0x4, offset = 0x4, fixed_abs, tag = 'smem constant byte address 0x4 - core index']
  #allocation1 [shape = 'u32[144,128]{1,0:T(1,128)}', space=vmem, size = 0x12000, scoped, tag = 'internal scratch']
  #allocation2 [shape = 'f32[48,128]{1,0:T(8,128)}', space=vmem, size = 0x6000, scoped, tag = 'scratch operand']
  #allocation3 [shape = 'f32[16,128]{1,0:T(8,128)}', space=vmem, size = 0x2000, scoped, tag = 'scratch operand']
  #allocation4 [shape = 'f32[16,128]{1,0:T(8,128)}', space=vmem, size = 0x2000, scoped, tag = 'scratch operand']
  %s0 = inlined_call_operand.vmem [shape: bf16[4,32,128], index: 0, kind: input, shape index: {}]
  %s1 = inlined_call_operand.vmem [shape: bf16[9,32,1], index: 1, kind: input, shape index: {}]
  %s2 = inlined_call_operand.vmem [shape: bf16[1,1152], index: 2, kind: input, shape index: {}]
  %s3 = inlined_call_operand.vmem [shape: f32[1,128], index: 3, kind: input, shape index: {}]
  %s4 = inlined_call_operand.vmem [shape: bf16[128,128], index: 4, kind: input, shape index: {}]
  %s5 = inlined_call_operand.vmem [shape: f32[1,128], index: 5, kind: input, shape index: {}]
  %s6 = inlined_call_operand.vmem [shape: bf16[4,32,128], index: 6, kind: output, shape index: {}]
  %s7 = sld [smem:[#allocation0]]
  $region102: #{spiking_convmixer_forward.5} parent=0
    _
  %s9 = ssub.s32 1, %s7
  %s10 = scalar_select 0, %s9, %s7
  $region1: #{spiking_convmixer_forward.5} parent=0
    #allocation5 [shape = 'u8[73728]{0}', space=vmem, size = 0x12000, scoped, tag = 'input window, operand 1']
    loop: start=0, step=1, limit=10
    $region2: #{spiking_convmixer_forward.5} parent=1 // loop_pre_header
      _
    $region3: #{spiking_convmixer_forward.5} parent=1 // loop_header
      %s12 = sphi 0, %s16
      %p13 = scmp.ge.s32.totalorder %s12, 10
      %s19 = sphi 0, %s31
      %s20 = sphi 0, %s27
      %s21 = sphi 0, %s19
      %s22 = sphi 0, %s20
      %s23 = sphi 0, %s21
      %s24 = sphi 0, %s22
      %s36 = sphi 0, %s38
      %s39 = sphi 0, %s36
      %s40 = sphi 0, %s39
      %s56 = sphi 0, %s40
      %s62 = sphi 0, %s64
      %s65 = sphi 0, %s62
      %s66 = sphi 0, %s65
      %s82 = sphi 0, %s66
      %s86 = sphi 0, %s86
      %s88 = sphi 0, %s86
      %s89 = sphi 0, %s88
      %s103 = sphi 0, %s89
      %s107 = sphi 0, %s107
      %s109 = sphi 0, %s107
      %s110 = sphi 0, %s109
      %s124 = sphi 0, %s110
      %s128 = sphi 0, %s128
      %s130 = sphi 0, %s128
      %s131 = sphi 0, %s130
      %s145 = sphi 0, %s131
      %s149 = sphi 0, %s149
      %s151 = sphi 0, %s149
      %s152 = sphi 0, %s151
      %s166 = sphi 0, %s152
      %s174 = sphi 0, %s176
      %s177 = sphi 0, %s174
      %s178 = sphi 0, %s177
      %s194 = sphi 0, %s178
    $region4: #{spiking_convmixer_forward.5} parent=1 // loop_header_branch
      %15 = sbr.rel (%p13) target = $region8
    $region5: #{spiking_convmixer_forward.5} parent=1 // loop_body
      %s17 = ssub.s32 %s12, 1
      %s18 = ssub.s32 %s12, 2
      %s25 = sadd.s32 1, %s20
      %p26 = scmp.ge.s32.totalorder %s25, 4
      %s27 = scalar_select %p26, 0, %s25
      %s28 = sadd.s32 1, %s19
      %s29 = scalar_select %p26, %s28, %s19
      %p30 = scmp.ge.s32.totalorder %s29, 2
      %s31 = scalar_select %p30, 0, %s29
      %s32 = ssub.s32 %s20, %s27
      %s33 = ssub.s32 %s19, %s31
      %s34 = sor.u32 %s32, %s33
      %p35 = scmp.eq.s32.totalorder %s34, 0
      %s37 = sadd.s32 %s36, 1
      %s38 = scalar_select %p35, %s36, %s37
      %p41 = pneg %p35
      %p42 = scmp.eq.s32.totalorder %s12, 7
      %p43 = por %p41, %p42
      %p44 = scmp.ne.s32.totalorder %s36, %s39
      %p45 = scmp.eq.s32.totalorder %s12, 0
      %p46 = por %p44, %p45
      %p47 = scmp.ne.s32.totalorder %s36, %s39
      %p48 = scmp.eq.s32.totalorder %s17, 7
      %p49 = por %p47, %p48
      %p50 = scmp.ne.s32.totalorder %s39, %s40
      %p51 = scmp.eq.s32.totalorder %s17, 0
      %p52 = por %p50, %p51
      %p53 = scmp.ne.s32.totalorder %s39, %s40
      %p54 = scmp.eq.s32.totalorder %s18, 7
      %p55 = por %p53, %p54
      %p57 = scmp.ne.s32.totalorder %s40, %s56
      %p58 = scmp.eq.s32.totalorder %s18, 0
      %p59 = por %p57, %p58
      %s60 = ssub.s32 %s19, %s31
      %p61 = scmp.eq.s32.totalorder %s60, 0
      %s63 = sadd.s32 %s62, 1
      %s64 = scalar_select %p61, %s62, %s63
      %p67 = pneg %p61
      %p68 = scmp.eq.s32.totalorder %s12, 7
      %p69 = por %p67, %p68
      %p70 = scmp.ne.s32.totalorder %s62, %s65
      %p71 = scmp.eq.s32.totalorder %s12, 0
      %p72 = por %p70, %p71
      %p73 = scmp.ne.s32.totalorder %s62, %s65
      %p74 = scmp.eq.s32.totalorder %s17, 7
      %p75 = por %p73, %p74
      %p76 = scmp.ne.s32.totalorder %s65, %s66
      %p77 = scmp.eq.s32.totalorder %s17, 0
      %p78 = por %p76, %p77
      %p79 = scmp.ne.s32.totalorder %s65, %s66
      %p80 = scmp.eq.s32.totalorder %s18, 7
      %p81 = por %p79, %p80
      %p83 = scmp.ne.s32.totalorder %s66, %s82
      %p84 = scmp.eq.s32.totalorder %s18, 0
      %p85 = por %p83, %p84
      %s87 = sadd.s32 %s86, 1
      %p90 = scmp.eq.s32.totalorder %s12, 7
      %p91 = scmp.ne.s32.totalorder %s86, %s88
      %p92 = scmp.eq.s32.totalorder %s12, 0
      %p93 = por %p91, %p92
      %p94 = scmp.ne.s32.totalorder %s86, %s88
      %p95 = scmp.eq.s32.totalorder %s17, 7
      %p96 = por %p94, %p95
      %p97 = scmp.ne.s32.totalorder %s88, %s89
      %p98 = scmp.eq.s32.totalorder %s17, 0
      %p99 = por %p97, %p98
      %p100 = scmp.ne.s32.totalorder %s88, %s89
      %p101 = scmp.eq.s32.totalorder %s18, 7
      %p102 = por %p100, %p101
      %p104 = scmp.ne.s32.totalorder %s89, %s103
      %p105 = scmp.eq.s32.totalorder %s18, 0
      %p106 = por %p104, %p105
      %s108 = sadd.s32 %s107, 1
      %p111 = scmp.eq.s32.totalorder %s12, 7
      %p112 = scmp.ne.s32.totalorder %s107, %s109
      %p113 = scmp.eq.s32.totalorder %s12, 0
      %p114 = por %p112, %p113
      %p115 = scmp.ne.s32.totalorder %s107, %s109
      %p116 = scmp.eq.s32.totalorder %s17, 7
      %p117 = por %p115, %p116
      %p118 = scmp.ne.s32.totalorder %s109, %s110
      %p119 = scmp.eq.s32.totalorder %s17, 0
      %p120 = por %p118, %p119
      %p121 = scmp.ne.s32.totalorder %s109, %s110
      %p122 = scmp.eq.s32.totalorder %s18, 7
      %p123 = por %p121, %p122
      %p125 = scmp.ne.s32.totalorder %s110, %s124
      %p126 = scmp.eq.s32.totalorder %s18, 0
      %p127 = por %p125, %p126
      %s129 = sadd.s32 %s128, 1
      %p132 = scmp.eq.s32.totalorder %s12, 7
      %p133 = scmp.ne.s32.totalorder %s128, %s130
      %p134 = scmp.eq.s32.totalorder %s12, 0
      %p135 = por %p133, %p134
      %p136 = scmp.ne.s32.totalorder %s128, %s130
      %p137 = scmp.eq.s32.totalorder %s17, 7
      %p138 = por %p136, %p137
      %p139 = scmp.ne.s32.totalorder %s130, %s131
      %p140 = scmp.eq.s32.totalorder %s17, 0
      %p141 = por %p139, %p140
      %p142 = scmp.ne.s32.totalorder %s130, %s131
      %p143 = scmp.eq.s32.totalorder %s18, 7
      %p144 = por %p142, %p143
      %p146 = scmp.ne.s32.totalorder %s131, %s145
      %p147 = scmp.eq.s32.totalorder %s18, 0
      %p148 = por %p146, %p147
      %s150 = sadd.s32 %s149, 1
      %p153 = scmp.eq.s32.totalorder %s12, 7
      %p154 = scmp.ne.s32.totalorder %s149, %s151
      %p155 = scmp.eq.s32.totalorder %s12, 0
      %p156 = por %p154, %p155
      %p157 = scmp.ne.s32.totalorder %s149, %s151
      %p158 = scmp.eq.s32.totalorder %s17, 7
      %p159 = por %p157, %p158
      %p160 = scmp.ne.s32.totalorder %s151, %s152
      %p161 = scmp.eq.s32.totalorder %s17, 0
      %p162 = por %p160, %p161
      %p163 = scmp.ne.s32.totalorder %s151, %s152
      %p164 = scmp.eq.s32.totalorder %s18, 7
      %p165 = por %p163, %p164
      %p167 = scmp.ne.s32.totalorder %s152, %s166
      %p168 = scmp.eq.s32.totalorder %s18, 0
      %p169 = por %p167, %p168
      %s170 = ssub.s32 %s20, %s27
      %s171 = ssub.s32 %s19, %s31
      %s172 = sor.u32 %s170, %s171
      %p173 = scmp.eq.s32.totalorder %s172, 0
      %s175 = sadd.s32 %s174, 1
      %s176 = scalar_select %p173, %s174, %s175
      %p179 = pneg %p173
      %p180 = scmp.eq.s32.totalorder %s12, 7
      %p181 = por %p179, %p180
      %p182 = scmp.ne.s32.totalorder %s174, %s177
      %p183 = scmp.eq.s32.totalorder %s12, 0
      %p184 = por %p182, %p183
      %p185 = scmp.ne.s32.totalorder %s174, %s177
      %p186 = scmp.eq.s32.totalorder %s17, 7
      %p187 = por %p185, %p186
      %p188 = scmp.ne.s32.totalorder %s177, %s178
      %p189 = scmp.eq.s32.totalorder %s17, 0
      %p190 = por %p188, %p189
      %p191 = scmp.ne.s32.totalorder %s177, %s178
      %p192 = scmp.eq.s32.totalorder %s18, 7
      %p193 = por %p191, %p192
      %p195 = scmp.ne.s32.totalorder %s178, %s194
      %p196 = scmp.eq.s32.totalorder %s18, 0
      %p197 = por %p195, %p196
      %p198 = scmp.le.s32.totalorder 1, %s12
      %p199 = scmp.lt.s32.totalorder %s12, 9
      %p200 = pnand %p198, %p199
      %p201 = pneg %p200
      // Predicated region
      $region9: #{spiking_convmixer_forward.5} parent=5 // pred_check
        _
      $region10: #{spiking_convmixer_forward.5} parent=5 // pred_check_branch
        %203 = sbr.rel (%p200) target = $region12
      $region11: #{spiking_convmixer_forward.5} parent=5 // pred_region
        %s204 = ssub.s32 %s12, 1
        // Predicated region
        $region13: #{spiking_convmixer_forward.5} parent=11 // pred_check
          %p205 = pneg %p99
        $region14: #{spiking_convmixer_forward.5} parent=11 // pred_check_branch
          %207 = sbr.rel (%p205) target = $region16
        $region15: #{spiking_convmixer_forward.5} parent=11 // pred_region
          _
        $region16: #{spiking_convmixer_forward.5} parent=11 // pred_fallthru
          _
        // Predicated region
        $region17: #{spiking_convmixer_forward.5} parent=11 // pred_check
          %p208 = pneg %p120
        $region18: #{spiking_convmixer_forward.5} parent=11 // pred_check_branch
          %210 = sbr.rel (%p208) target = $region20
        $region19: #{spiking_convmixer_forward.5} parent=11 // pred_region
          _
        $region20: #{spiking_convmixer_forward.5} parent=11 // pred_fallthru
          _
        // Predicated region
        $region21: #{spiking_convmixer_forward.5} parent=11 // pred_check
          %p211 = pneg %p141
        $region22: #{spiking_convmixer_forward.5} parent=11 // pred_check_branch
          %213 = sbr.rel (%p211) target = $region24
        $region23: #{spiking_convmixer_forward.5} parent=11 // pred_region
          _
        $region24: #{spiking_convmixer_forward.5} parent=11 // pred_fallthru
          _
        // Predicated region
        $region25: #{spiking_convmixer_forward.5} parent=11 // pred_check
          %p214 = pneg %p162
        $region26: #{spiking_convmixer_forward.5} parent=11 // pred_check_branch
          %216 = sbr.rel (%p214) target = $region28
        $region27: #{spiking_convmixer_forward.5} parent=11 // pred_region
          _
        $region28: #{spiking_convmixer_forward.5} parent=11 // pred_fallthru
          _
      $region12: #{spiking_convmixer_forward.5} parent=5 // pred_fallthru
        _
      %p217 = scmp.lt.s32.totalorder %s12, 8
      // Predicated region
      $region29: #{spiking_convmixer_forward.5} parent=5 // pred_check
        %p218 = pneg %p217
      $region30: #{spiking_convmixer_forward.5} parent=5 // pred_check_branch
        %220 = sbr.rel (%p218) target = $region32
      $region31: #{spiking_convmixer_forward.5} parent=5 // pred_region
        // Predicated region
        $region33: #{spiking_convmixer_forward.5} parent=31 // pred_check
          %p221 = pneg %p46
        $region34: #{spiking_convmixer_forward.5} parent=31 // pred_check_branch
          %223 = sbr.rel (%p221) target = $region36
        $region35: #{spiking_convmixer_forward.5} parent=31 // pred_region
          %s224 = smul.u32 2, %s19
          %p225 = scmp.lt.s32.totalorder %s20, 3
          %s226 = scalar_select %p225, %s20, 3
          %p227 = scmp.lt.s32.totalorder %s224, 3
          %s228 = scalar_select %p227, %s224, 3
          %s229 = smul.addr %s226, 4
          %s230 = sadd.s32 %s228, %s229
          %s231 = smul.addr %s230, 4
          %s232 = scalar_lea.vmem %s0, %s231
          %s233 = smul.u32 2, %s19
        $region36: #{spiking_convmixer_forward.5} parent=31 // pred_fallthru
          _
        // Predicated region
        $region37: #{spiking_convmixer_forward.5} parent=31 // pred_check
          %p234 = pneg %p72
        $region38: #{spiking_convmixer_forward.5} parent=31 // pred_check_branch
          %236 = sbr.rel (%p234) target = $region40
        $region39: #{spiking_convmixer_forward.5} parent=31 // pred_region
          %s237 = sand.u32 %s62, 1
          %s238 = sand.u32 %s62, 1
          %s239 = smul.addr %s238, 72
          %s240 = scalar_lea.vmem [#allocation5], %s239
          %s241 = smul.u32 2, %s19
          %s242 = smul.addr %s241, 4
          %s243 = scalar_lea.vmem %s1, %s242
          // Predicated region
          $region41: #{spiking_convmixer_forward.5} parent=39 // pred_check
            _
          $region42: #{spiking_convmixer_forward.5} parent=39 // pred_check_branch
            %245 = sbr.rel (0) target = $region44
          $region43: #{spiking_convmixer_forward.5} parent=39 // pred_region
            // Predicated region
            $region45: #{spiking_convmixer_forward.5} parent=43 // pred_check
              _
            $region46: #{spiking_convmixer_forward.5} parent=43 // pred_check_branch
              %247 = sbr.rel target = $region48
            $region47: #{spiking_convmixer_forward.5} parent=43 // pred_region
              // Predicated region
              $region60: #{spiking_convmixer_forward.5} parent=47 // pred_check
                _
              $region61: #{spiking_convmixer_forward.5} parent=47 // pred_check_branch
                %296 = sbr.rel (0) target = $region63
              $region62: #{spiking_convmixer_forward.5} parent=47 // pred_region
                loop: start=0, step=1, limit=1
                $region64: #{spiking_convmixer_forward.5} parent=62 // loop_pre_header
                  _
                $region65: #{spiking_convmixer_forward.5} parent=62 // loop_header
                  %s298 = sphi 0, %s302
                  %p299 = scmp.ge.s32.totalorder %s298, 1
                  %s303 = sphi %s243, %s243
                  %s304 = sphi %s240, %s240
                $region66: #{spiking_convmixer_forward.5} parent=62 // loop_header_branch
                  %301 = sbr.rel (%p299) target = $region70
                $region67: #{spiking_convmixer_forward.5} parent=62 // loop_body
                  _
                $region68: #{spiking_convmixer_forward.5} parent=62 // loop_footer
                  %s302 = sadd.s32 1, %s298
                $region69: #{spiking_convmixer_forward.5} parent=62 // loop_footer_branch
                  %297 = sbr.rel target = $region65
                $region70: #{spiking_convmixer_forward.5} parent=62 // loop_exit
                  _
                loop: start=0, step=1, limit=1
                $region71: #{spiking_convmixer_forward.5} parent=62 // loop_pre_header
                  _
                $region72: #{spiking_convmixer_forward.5} parent=62 // loop_header
                  %s307 = sphi 0, %s311
                  %p308 = scmp.ge.s32.totalorder %s307, 1
                  %s312 = sphi %s243, %s243
                  %s313 = sphi %s240, %s240
                $region73: #{spiking_convmixer_forward.5} parent=62 // loop_header_branch
                  %310 = sbr.rel (%p308) target = $region77
                $region74: #{spiking_convmixer_forward.5} parent=62 // loop_body
                  %v314 = vld [vmem:[%s312] sm:$0xf]
                  %315 = vst [vmem:[%s313] sm:$0xf] %v314
                  %v316 = vld [vmem:[%s312 + $0x4] sm:$0xf]
                  %317 = vst [vmem:[%s313 + $0x4] sm:$0xf] %v316
                  %v318 = vld [vmem:[%s312 + $0x10] sm:$0xf]
                  %319 = vst [vmem:[%s313 + $0x8] sm:$0xf] %v318
                  %v320 = vld [vmem:[%s312 + $0x14] sm:$0xf]
                  %321 = vst [vmem:[%s313 + $0xc] sm:$0xf] %v320
                  %v322 = vld [vmem:[%s312 + $0x20] sm:$0xf]
                  %323 = vst [vmem:[%s313 + $0x10] sm:$0xf] %v322
                  %v324 = vld [vmem:[%s312 + $0x24] sm:$0xf]
                  %325 = vst [vmem:[%s313 + $0x14] sm:$0xf] %v324
                  %v326 = vld [vmem:[%s312 + $0x30] sm:$0xf]
                  %327 = vst [vmem:[%s313 + $0x18] sm:$0xf] %v326
                  %v328 = vld [vmem:[%s312 + $0x34] sm:$0xf]
                  %329 = vst [vmem:[%s313 + $0x1c] sm:$0xf] %v328
                  %v330 = vld [vmem:[%s312 + $0x40] sm:$0xf]
                  %331 = vst [vmem:[%s313 + $0x20] sm:$0xf] %v330
                  %v332 = vld [vmem:[%s312 + $0x44] sm:$0xf]
                  %333 = vst [vmem:[%s313 + $0x24] sm:$0xf] %v332
                  %v334 = vld [vmem:[%s312 + $0x50] sm:$0xf]
                  %335 = vst [vmem:[%s313 + $0x28] sm:$0xf] %v334
                  %v336 = vld [vmem:[%s312 + $0x54] sm:$0xf]
                  %337 = vst [vmem:[%s313 + $0x2c] sm:$0xf] %v336
                  %v338 = vld [vmem:[%s312 + $0x60] sm:$0xf]
                  %339 = vst [vmem:[%s313 + $0x30] sm:$0xf] %v338
                  %v340 = vld [vmem:[%s312 + $0x64] sm:$0xf]
                  %341 = vst [vmem:[%s313 + $0x34] sm:$0xf] %v340
                  %v342 = vld [vmem:[%s312 + $0x70] sm:$0xf]
                  %343 = vst [vmem:[%s313 + $0x38] sm:$0xf] %v342
                  %v344 = vld [vmem:[%s312 + $0x74] sm:$0xf]
                  %345 = vst [vmem:[%s313 + $0x3c] sm:$0xf] %v344
                  %v346 = vld [vmem:[%s312 + $0x80] sm:$0xf]
                  %347 = vst [vmem:[%s313 + $0x40] sm:$0xf] %v346
                  %v348 = vld [vmem:[%s312 + $0x84] sm:$0xf]
                  %349 = vst [vmem:[%s313 + $0x44] sm:$0xf] %v348
                $region75: #{spiking_convmixer_forward.5} parent=62 // loop_footer
                  %s311 = sadd.s32 1, %s307
                $region76: #{spiking_convmixer_forward.5} parent=62 // loop_footer_branch
                  %306 = sbr.rel target = $region72
                $region77: #{spiking_convmixer_forward.5} parent=62 // loop_exit
                  _
              $region63: #{spiking_convmixer_forward.5} parent=47 // pred_fallthru
                _
            $region48: #{spiking_convmixer_forward.5} parent=43 // pred_fallthru
              _
            // Predicated region
            $region49: #{spiking_convmixer_forward.5} parent=43 // pred_check
              _
            $region50: #{spiking_convmixer_forward.5} parent=43 // pred_check_branch
              %249 = sbr.rel (0) target = $region52
            $region51: #{spiking_convmixer_forward.5} parent=43 // pred_region
              loop: start=0, step=1, limit=1
              $region53: #{spiking_convmixer_forward.5} parent=51 // loop_pre_header
                _
              $region54: #{spiking_convmixer_forward.5} parent=51 // loop_header
                %s252 = sphi 0, %s256
                %p253 = scmp.ge.s32.totalorder %s252, 1
                %s257 = sphi %s243, %s243
                %s258 = sphi %s240, %s240
              $region55: #{spiking_convmixer_forward.5} parent=51 // loop_header_branch
                %255 = sbr.rel (%p253) target = $region59
              $region56: #{spiking_convmixer_forward.5} parent=51 // loop_body
                %v259 = vld [vmem:[%s257] sm:$0xf]
                %260 = vst [vmem:[%s258] sm:$0xf] %v259
                %v261 = vld [vmem:[%s257 + $0x4] sm:$0xf]
                %262 = vst [vmem:[%s258 + $0x4] sm:$0xf] %v261
                %v263 = vld [vmem:[%s257 + $0x10] sm:$0xf]
                %264 = vst [vmem:[%s258 + $0x8] sm:$0xf] %v263
                %v265 = vld [vmem:[%s257 + $0x14] sm:$0xf]
                %266 = vst [vmem:[%s258 + $0xc] sm:$0xf] %v265
                %v267 = vld [vmem:[%s257 + $0x20] sm:$0xf]
                %268 = vst [vmem:[%s258 + $0x10] sm:$0xf] %v267
                %v269 = vld [vmem:[%s257 + $0x24] sm:$0xf]
                %270 = vst [vmem:[%s258 + $0x14] sm:$0xf] %v269
                %v271 = vld [vmem:[%s257 + $0x30] sm:$0xf]
                %272 = vst [vmem:[%s258 + $0x18] sm:$0xf] %v271
                %v273 = vld [vmem:[%s257 + $0x34] sm:$0xf]
                %274 = vst [vmem:[%s258 + $0x1c] sm:$0xf] %v273
                %v275 = vld [vmem:[%s257 + $0x40] sm:$0xf]
                %276 = vst [vmem:[%s258 + $0x20] sm:$0xf] %v275
                %v277 = vld [vmem:[%s257 + $0x44] sm:$0xf]
                %278 = vst [vmem:[%s258 + $0x24] sm:$0xf] %v277
                %v279 = vld [vmem:[%s257 + $0x50] sm:$0xf]
                %280 = vst [vmem:[%s258 + $0x28] sm:$0xf] %v279
                %v281 = vld [vmem:[%s257 + $0x54] sm:$0xf]
                %282 = vst [vmem:[%s258 + $0x2c] sm:$0xf] %v281
                %v283 = vld [vmem:[%s257 + $0x60] sm:$0xf]
                %284 = vst [vmem:[%s258 + $0x30] sm:$0xf] %v283
                %v285 = vld [vmem:[%s257 + $0x64] sm:$0xf]
                %286 = vst [vmem:[%s258 + $0x34] sm:$0xf] %v285
                %v287 = vld [vmem:[%s257 + $0x70] sm:$0xf]
                %288 = vst [vmem:[%s258 + $0x38] sm:$0xf] %v287
                %v289 = vld [vmem:[%s257 + $0x74] sm:$0xf]
                %290 = vst [vmem:[%s258 + $0x3c] sm:$0xf] %v289
                %v291 = vld [vmem:[%s257 + $0x80] sm:$0xf]
                %292 = vst [vmem:[%s258 + $0x40] sm:$0xf] %v291
                %v293 = vld [vmem:[%s257 + $0x84] sm:$0xf]
                %294 = vst [vmem:[%s258 + $0x44] sm:$0xf] %v293
              $region57: #{spiking_convmixer_forward.5} parent=51 // loop_footer
                %s256 = sadd.s32 1, %s252
              $region58: #{spiking_convmixer_forward.5} parent=51 // loop_footer_branch
                %251 = sbr.rel target = $region54
              $region59: #{spiking_convmixer_forward.5} parent=51 // loop_exit
                _
            $region52: #{spiking_convmixer_forward.5} parent=43 // pred_fallthru
              _
          $region44: #{spiking_convmixer_forward.5} parent=39 // pred_fallthru
            _
          %350 = vnop
        $region40: #{spiking_convmixer_forward.5} parent=31 // pred_fallthru
          _
      $region32: #{spiking_convmixer_forward.5} parent=5 // pred_fallthru
        _
      %p351 = scmp.le.s32.totalorder 1, %s12
      %p352 = scmp.lt.s32.totalorder %s12, 9
      %p353 = pnand %p351, %p352
      %p354 = pneg %p353
      // Predicated region
      $region78: #{spiking_convmixer_forward.5} parent=5 // pred_check
        _
      $region79: #{spiking_convmixer_forward.5} parent=5 // pred_check_branch
        %356 = sbr.rel (%p353) target = $region81
      $region80: #{spiking_convmixer_forward.5} parent=5 // pred_region
        %s357 = ssub.s32 %s12, 1
        %s358 = sand.u32 %s65, 1
        %s359 = sand.u32 %s65, 1
        %s360 = smul.addr %s359, 72
        %s361 = scalar_lea.vmem [#allocation5], %s360
        // Predicated region
        $region82: #{spiking_convmixer_forward.5} parent=80 // pred_check
          %p362 = pneg %p78
        $region83: #{spiking_convmixer_forward.5} parent=80 // pred_check_branch
          %364 = sbr.rel (%p362) target = $region85
        $region84: #{spiking_convmixer_forward.5} parent=80 // pred_region
          _
        $region85: #{spiking_convmixer_forward.5} parent=80 // pred_fallthru
          _
        %s365 = smul.u32 2, %s21
        %p366 = scmp.lt.s32.totalorder %s22, 3
        %s367 = scalar_select %p366, %s22, 3
        %p368 = scmp.lt.s32.totalorder %s365, 3
        %s369 = scalar_select %p368, %s365, 3
        %s370 = smul.addr %s367, 4
        %s371 = sadd.s32 %s369, %s370
        %s372 = smul.addr %s371, 4
        %s373 = scalar_lea.vmem %s0, %s372
        %p374 = pneg %p52
        %p375 = pneg %p49
        %s376 = sand.u32 %s65, 1
        %s377 = sand.u32 %s65, 1
        %s378 = smul.addr %s377, 72
        %s379 = scalar_lea.vmem [#allocation5], %s378
        %p380 = pneg %p78
        %p381 = pneg %p75
        %p382 = pneg %p99
        %p383 = pneg %p96
        %p384 = pneg %p120
        %p385 = pneg %p117
        %p386 = pneg %p141
        %p387 = pneg %p138
        %p388 = pneg %p162
        %p389 = pneg %p159
        %p390 = pneg %p190
        %p391 = pneg %p187
        %s392 = smul.u32 2, %s21
        %p393 = scmp.lt.s32.totalorder %s22, 3
        %s394 = scalar_select %p393, %s22, 3
        %p395 = scmp.lt.s32.totalorder %s392, 3
        %s396 = scalar_select %p395, %s392, 3
        %s397 = smul.addr %s394, 4
        %s398 = sadd.s32 %s396, %s397
        %s399 = smul.addr %s398, 4
        %s400 = scalar_lea.vmem %s6, %s399
        %s401 = smul.u32 2, %s21
        %p402 = scmp.lt.s32.totalorder %s22, 3
        %s403 = scalar_select %p402, %s22, 3
        %p404 = scmp.lt.s32.totalorder %s401, 3
        %s405 = scalar_select %p404, %s401, 3
        %s406 = smul.addr %s403, 4
        %s407 = sadd.s32 %s405, %s406
        %s408 = smul.addr %s407, 4
        %s409 = scalar_lea.vmem %s0, %s408
        %s410 = smul.u32 2, %s21
        %s411 = smul.u32 2, %s21
        %s412 = smul.u32 2, %s21
        %p413 = scmp.lt.s32.totalorder %s22, 3
        %s414 = scalar_select %p413, %s22, 3
        %p415 = scmp.lt.s32.totalorder %s412, 3
        %s416 = scalar_select %p415, %s412, 3
        %s417 = smul.addr %s414, 4
        %s418 = sadd.s32 %s416, %s417
        %s419 = smul.addr %s418, 4
        %s420 = scalar_lea.vmem %s6, %s419
        %s421 = smul.u32 2, %s21
        %p423 = scmp.eq.s32.totalorder %s22, 0
        // Predicated region
        $region86: #{spiking_convmixer_forward.5} parent=80 // pred_check
          %p424 = pneg %p423
        $region87: #{spiking_convmixer_forward.5} parent=80 // pred_check_branch
          %426 = sbr.rel (%p424) target = $region89
        $region88: #{spiking_convmixer_forward.5} parent=80 // pred_region
          %427 = vst [vmem:[#allocation2] sm:$0xff] 0.0
          %428 = vst [vmem:[#allocation2 + $0x8] sm:$0xff] 0.0
          %429 = vst [vmem:[#allocation2 + $0x10] sm:$0xff] 0.0
          %430 = vst [vmem:[#allocation2 + $0x18] sm:$0xff] 0.0
          %431 = vst [vmem:[#allocation2 + $0x20] sm:$0xff] 0.0
          %432 = vst [vmem:[#allocation2 + $0x28] sm:$0xff] 0.0
          %433 = vst [vmem:[#allocation3] sm:$0xff] 0.0
          %434 = vst [vmem:[#allocation3 + $0x8] sm:$0xff] 0.0
          %435 = vst [vmem:[#allocation4] sm:$0xff] 0.0
          %436 = vst [vmem:[#allocation4 + $0x8] sm:$0xff] 0.0
        $region89: #{spiking_convmixer_forward.5} parent=80 // pred_fallthru
          _
        %v437 = vld [vmem:[%s409] sm:$0xf]
        %v438 = vld [vmem:[%s409 + $0x4] sm:$0xf]
        %v439 = vunpack.c.l.bf16 %v437
        %v440 = vunpack.c.l.bf16 %v438
        %441 = vst [vmem:[#allocation2 + $0x10] sm:$0xff] %v439
        %442 = vst [vmem:[#allocation2 + $0x18] sm:$0xff] %v440
        %v443 = vld [vmem:[#allocation3] sm:$0xff]
        %v444 = vld [vmem:[#allocation3 + $0x8] sm:$0xff]
        %v445 = vld [vmem:[%s3] sm:$0x1]
        %v447 = vlaneseq
        %v448 = vshrl.u32 %v447, 7
        %v449 = vsub.s32 0, %v448
        %v450 = vrot.slane %v445, %v449
        %v452 = vadd.f32 %v443, %v450
        %v453 = vadd.f32 %v444, %v450
        %v454 = vld [vmem:[#allocation2 + $0xb] sm:$0xff]
        %v455 = vld [vmem:[#allocation2 + $0x13] sm:$0xff]
        %v456 = vld [vmem:[%s2] sm:$0x1]
        %v457 = vunpack.c.l.bf16 %v456
        %v458 = vlaneseq
        %v459 = vshrl.u32 %v458, 7
        %v460 = vsub.s32 0, %v459
        %v461 = vrot.slane %v457, %v460
        %v462 = vmul.f32 %v454, %v461
        %v463 = vmul.f32 %v455, %v461
        %v464 = vld [vmem:[%s361] sm:$0xf]
        %v465 = vld [vmem:[%s361 + $0x4] sm:$0xf]
        %v466 = vunpack.c.l.bf16 %v464
        %v467 = vunpack.c.l.bf16 %v465
        %469 = vset.pattern.permute.xlu0 0
        %470 = vperm.xlu0 %469, %v466
        %v471 = vpop.permute.xlu0 %470
        %474 = vset.pattern.permute.xlu0 0
        %475 = vperm.xlu0 %474, %v467
        %v476 = vpop.permute.xlu0 %475
        %v478 = vmul.f32 %v462, %v471
        %v479 = vmul.f32 %v463, %v476
        %v480 = vadd.f32 %v452, %v478
        %v481 = vadd.f32 %v453, %v479
        %v482 = vld [vmem:[#allocation2 + $0xc] sm:$0xff]
        %v483 = vld [vmem:[#allocation2 + $0x14] sm:$0xff]
        %v484 = vld [vmem:[%s2 + $0x1] sm:$0x1]
        %v485 = vunpack.c.l.bf16 %v484
        %v486 = vlaneseq
        %v487 = vshrl.u32 %v486, 7
        %v488 = vsub.s32 0, %v487
        %v489 = vrot.slane %v485, %v488
        %v490 = vmul.f32 %v482, %v489
        %v491 = vmul.f32 %v483, %v489
        %s492 = scalar_lea.vmem %s361, 8 [#allocation5]
        %v493 = vld [vmem:[%s492] sm:$0xf]
        %v494 = vld [vmem:[%s492 + $0x4] sm:$0xf]
        %v495 = vunpack.c.l.bf16 %v493
        %v496 = vunpack.c.l.bf16 %v494
        %498 = vset.pattern.permute.xlu0 0
        %499 = vperm.xlu0 %498, %v495
        %v500 = vpop.permute.xlu0 %499
        %503 = vset.pattern.permute.xlu0 0
        %504 = vperm.xlu0 %503, %v496
        %v505 = vpop.permute.xlu0 %504
        %v507 = vmul.f32 %v490, %v500
        %v508 = vmul.f32 %v491, %v505
        %v509 = vadd.f32 %v480, %v507
        %v510 = vadd.f32 %v481, %v508
        %v511 = vld [vmem:[#allocation2 + $0xd] sm:$0xff]
        %v512 = vld [vmem:[#allocation2 + $0x15] sm:$0xff]
        %v513 = vld [vmem:[%s2 + $0x2] sm:$0x1]
        %v514 = vunpack.c.l.bf16 %v513
        %v515 = vlaneseq
        %v516 = vshrl.u32 %v515, 7
        %v517 = vsub.s32 0, %v516
        %v518 = vrot.slane %v514, %v517
        %v519 = vmul.f32 %v511, %v518
        %v520 = vmul.f32 %v512, %v518
        %s521 = scalar_lea.vmem %s361, 16 [#allocation5]
        %v522 = vld [vmem:[%s521] sm:$0xf]
        %v523 = vld [vmem:[%s521 + $0x4] sm:$0xf]
        %v524 = vunpack.c.l.bf16 %v522
        %v525 = vunpack.c.l.bf16 %v523
        %527 = vset.pattern.permute.xlu0 0
        %528 = vperm.xlu0 %527, %v524
        %v529 = vpop.permute.xlu0 %528
        %532 = vset.pattern.permute.xlu0 0
        %533 = vperm.xlu0 %532, %v525
        %v534 = vpop.permute.xlu0 %533
        %v536 = vmul.f32 %v519, %v529
        %v537 = vmul.f32 %v520, %v534
        %v538 = vadd.f32 %v509, %v536
        %v539 = vadd.f32 %v510, %v537
        %v540 = vld [vmem:[#allocation2 + $0xf] sm:$0xff]
        %v541 = vld [vmem:[#allocation2 + $0x17] sm:$0xff]
        %v542 = vld [vmem:[%s2 + $0x3] sm:$0x1]
        %v543 = vunpack.c.l.bf16 %v542
        %v544 = vlaneseq
        %v545 = vshrl.u32 %v544, 7
        %v546 = vsub.s32 0, %v545
        %v547 = vrot.slane %v543, %v546
        %v548 = vmul.f32 %v540, %v547
        %v549 = vmul.f32 %v541, %v547
        %s550 = scalar_lea.vmem %s361, 24 [#allocation5]
        %v551 = vld [vmem:[%s550] sm:$0xf]
        %v552 = vld [vmem:[%s550 + $0x4] sm:$0xf]
        %v553 = vunpack.c.l.bf16 %v551
        %v554 = vunpack.c.l.bf16 %v552
        %556 = vset.pattern.permute.xlu0 0
        %557 = vperm.xlu0 %556, %v553
        %v558 = vpop.permute.xlu0 %557
        %561 = vset.pattern.permute.xlu0 0
        %562 = vperm.xlu0 %561, %v554
        %v563 = vpop.permute.xlu0 %562
        %v565 = vmul.f32 %v548, %v558
        %v566 = vmul.f32 %v549, %v563
        %v567 = vadd.f32 %v538, %v565
        %v568 = vadd.f32 %v539, %v566
        %v569 = vld [vmem:[#allocation2 + $0x10] sm:$0xff]
        %v570 = vld [vmem:[#allocation2 + $0x18] sm:$0xff]
        %v571 = vld [vmem:[%s2 + $0x4] sm:$0x1]
        %v572 = vunpack.c.l.bf16 %v571
        %v573 = vlaneseq
        %v574 = vshrl.u32 %v573, 7
        %v575 = vsub.s32 0, %v574
        %v576 = vrot.slane %v572, %v575
        %v577 = vmul.f32 %v569, %v576
        %v578 = vmul.f32 %v570, %v576
        %v579 = vadd.f32 %v567, %v577
        %v580 = vadd.f32 %v568, %v578
        %v581 = vld [vmem:[#allocation2 + $0x11] sm:$0xff]
        %v582 = vld [vmem:[#allocation2 + $0x19] sm:$0xff]
        %v583 = vld [vmem:[%s2 + $0x5] sm:$0x1]
        %v584 = vunpack.c.l.bf16 %v583
        %v585 = vlaneseq
        %v586 = vshrl.u32 %v585, 7
        %v587 = vsub.s32 0, %v586
        %v588 = vrot.slane %v584, %v587
        %v589 = vmul.f32 %v581, %v588
        %v590 = vmul.f32 %v582, %v588
        %s591 = scalar_lea.vmem %s361, 40 [#allocation5]
        %v592 = vld [vmem:[%s591] sm:$0xf]
        %v593 = vld [vmem:[%s591 + $0x4] sm:$0xf]
        %v594 = vunpack.c.l.bf16 %v592
        %v595 = vunpack.c.l.bf16 %v593
        %597 = vset.pattern.permute.xlu0 0
        %598 = vperm.xlu0 %597, %v594
        %v599 = vpop.permute.xlu0 %598
        %602 = vset.pattern.permute.xlu0 0
        %603 = vperm.xlu0 %602, %v595
        %v604 = vpop.permute.xlu0 %603
        %v606 = vmul.f32 %v589, %v599
        %v607 = vmul.f32 %v590, %v604
        %v608 = vadd.f32 %v579, %v606
        %v609 = vadd.f32 %v580, %v607
        %v610 = vld [vmem:[#allocation2 + $0x13] sm:$0xff]
        %v611 = vld [vmem:[#allocation2 + $0x1b] sm:$0xff]
        %v612 = vld [vmem:[%s2 + $0x6] sm:$0x1]
        %v613 = vunpack.c.l.bf16 %v612
        %v614 = vlaneseq
        %v615 = vshrl.u32 %v614, 7
        %v616 = vsub.s32 0, %v615
        %v617 = vrot.slane %v613, %v616
        %v618 = vmul.f32 %v610, %v617
        %v619 = vmul.f32 %v611, %v617
        %s620 = scalar_lea.vmem %s361, 48 [#allocation5]
        %v621 = vld [vmem:[%s620] sm:$0xf]
        %v622 = vld [vmem:[%s620 + $0x4] sm:$0xf]
        %v623 = vunpack.c.l.bf16 %v621
        %v624 = vunpack.c.l.bf16 %v622
        %626 = vset.pattern.permute.xlu0 0
        %627 = vperm.xlu0 %626, %v623
        %v628 = vpop.permute.xlu0 %627
        %631 = vset.pattern.permute.xlu0 0
        %632 = vperm.xlu0 %631, %v624
        %v633 = vpop.permute.xlu0 %632
        %v635 = vmul.f32 %v618, %v628
        %v636 = vmul.f32 %v619, %v633
        %v637 = vadd.f32 %v608, %v635
        %v638 = vadd.f32 %v609, %v636
        %v639 = vld [vmem:[#allocation2 + $0x14] sm:$0xff]
        %v640 = vld [vmem:[#allocation2 + $0x1c] sm:$0xff]
        %v641 = vld [vmem:[%s2 + $0x7] sm:$0x1]
        %v642 = vunpack.c.l.bf16 %v641
        %v643 = vlaneseq
        %v644 = vshrl.u32 %v643, 7
        %v645 = vsub.s32 0, %v644
        %v646 = vrot.slane %v642, %v645
        %v647 = vmul.f32 %v639, %v646
        %v648 = vmul.f32 %v640, %v646
        %s649 = scalar_lea.vmem %s361, 56 [#allocation5]
        %v650 = vld [vmem:[%s649] sm:$0xf]
        %v651 = vld [vmem:[%s649 + $0x4] sm:$0xf]
        %v652 = vunpack.c.l.bf16 %v650
        %v653 = vunpack.c.l.bf16 %v651
        %655 = vset.pattern.permute.xlu0 0
        %656 = vperm.xlu0 %655, %v652
        %v657 = vpop.permute.xlu0 %656
        %660 = vset.pattern.permute.xlu0 0
        %661 = vperm.xlu0 %660, %v653
        %v662 = vpop.permute.xlu0 %661
        %v664 = vmul.f32 %v647, %v657
        %v665 = vmul.f32 %v648, %v662
        %v666 = vadd.f32 %v637, %v664
        %v667 = vadd.f32 %v638, %v665
        %v668 = vld [vmem:[#allocation2 + $0x15] sm:$0xff]
        %v669 = vld [vmem:[#allocation2 + $0x1d] sm:$0xff]
        %v670 = vld [vmem:[%s2 + $0x8] sm:$0x1]
        %v671 = vunpack.c.l.bf16 %v670
        %v672 = vlaneseq
        %v673 = vshrl.u32 %v672, 7
        %v674 = vsub.s32 0, %v673
        %v675 = vrot.slane %v671, %v674
        %v676 = vmul.f32 %v668, %v675
        %v677 = vmul.f32 %v669, %v675
        %s678 = scalar_lea.vmem %s361, 64 [#allocation5]
        %v679 = vld [vmem:[%s678] sm:$0xf]
        %v680 = vld [vmem:[%s678 + $0x4] sm:$0xf]
        %v681 = vunpack.c.l.bf16 %v679
        %v682 = vunpack.c.l.bf16 %v680
        %684 = vset.pattern.permute.xlu0 0
        %685 = vperm.xlu0 %684, %v681
        %v686 = vpop.permute.xlu0 %685
        %689 = vset.pattern.permute.xlu0 0
        %690 = vperm.xlu0 %689, %v682
        %v691 = vpop.permute.xlu0 %690
        %v693 = vmul.f32 %v676, %v686
        %v694 = vmul.f32 %v677, %v691
        %v695 = vadd.f32 %v666, %v693
        %v696 = vadd.f32 %v667, %v694
        %vm697 = vcmp.ge.f32.partialorder %v695, 1.0
        %vm698 = vcmp.ge.f32.partialorder %v696, 1.0
        %v699 = vsel %vm697, 0.0, %v695
        %v700 = vsel %vm698, 0.0, %v696
        %701 = vst [vmem:[#allocation3] sm:$0xff] %v699
        %702 = vst [vmem:[#allocation3 + $0x8] sm:$0xff] %v700
        %v703 = vsel %vm697, 1, 0
        %v704 = vsel %vm698, 1, 0
        %v705 = vcvt.s32.f32 %v703
        %v706 = vcvt.s32.f32 %v704
        %v707 = vpack.c.bf16 %v706, %v705
        %v710 = vunpack.c.l.b16 %v437
        %v711 = vunpack.c.l.b16 %v438
        %v712 = vpack.c.b16 %v711, %v710
        %v714 = vadd.bf16 %v707, %v712
        %v715 = vld [vmem:[%s4] sm:$0xf]
        %v716 = vld [vmem:[%s4 + $0x4] sm:$0xf]
        %v717 = vld [vmem:[%s4 + $0x8] sm:$0xf]
        %v718 = vld [vmem:[%s4 + $0xc] sm:$0xf]
        %v719 = vld [vmem:[%s4 + $0x10] sm:$0xf]
        %v720 = vld [vmem:[%s4 + $0x14] sm:$0xf]
        %v721 = vld [vmem:[%s4 + $0x18] sm:$0xf]
        %v722 = vld [vmem:[%s4 + $0x1c] sm:$0xf]
        %v723 = vld [vmem:[%s4 + $0x20] sm:$0xf]
        %v724 = vld [vmem:[%s4 + $0x24] sm:$0xf]
        %v725 = vld [vmem:[%s4 + $0x28] sm:$0xf]
        %v726 = vld [vmem:[%s4 + $0x2c] sm:$0xf]
        %v727 = vld [vmem:[%s4 + $0x30] sm:$0xf]
        %v728 = vld [vmem:[%s4 + $0x34] sm:$0xf]
        %v729 = vld [vmem:[%s4 + $0x38] sm:$0xf]
        %v730 = vld [vmem:[%s4 + $0x3c] sm:$0xf]
        %v731 = vld [vmem:[%s5] sm:$0x1]
        %v733 = vlaneseq
        %v734 = vshrl.u32 %v733, 7
        %v735 = vsub.s32 0, %v734
        %v736 = vrot.slane %v731, %v735
        %v754 = vunpack.c.l.b16 %v715
        %v755 = vunpack.c.l.b16 %v716
        %v756 = vunpack.c.l.b16 %v717
        %v757 = vunpack.c.l.b16 %v718
        %v758 = vunpack.c.l.b16 %v719
        %v759 = vunpack.c.l.b16 %v720
        %v760 = vunpack.c.l.b16 %v721
        %v761 = vunpack.c.l.b16 %v722
        %v762 = vunpack.c.l.b16 %v723
        %v763 = vunpack.c.l.b16 %v724
        %v764 = vunpack.c.l.b16 %v725
        %v765 = vunpack.c.l.b16 %v726
        %v766 = vunpack.c.l.b16 %v727
        %v767 = vunpack.c.l.b16 %v728
        %v768 = vunpack.c.l.b16 %v729
        %v769 = vunpack.c.l.b16 %v730
        %v770 = vpack.c.b16 %v755, %v754
        %v771 = vpack.c.b16 %v757, %v756
        %v772 = vpack.c.b16 %v759, %v758
        %v773 = vpack.c.b16 %v761, %v760
        %v774 = vpack.c.b16 %v763, %v762
        %v775 = vpack.c.b16 %v765, %v764
        %v776 = vpack.c.b16 %v767, %v766
        %v777 = vpack.c.b16 %v769, %v768
        %786 = vmatprep.subr.bf16.mxu0 0
        %787 = vmatpush1.bf16.msra.mxu0 %v770
        %788 = vmatprep.subr.bf16.mxu0 0
        %789 = vmatpush1.bf16.msra.mxu0 %v771
        %790 = vmatprep.subr.bf16.mxu0 0
        %791 = vmatpush1.bf16.msra.mxu0 %v772
        %792 = vmatprep.subr.bf16.mxu0 0
        %793 = vmatpush1.bf16.msra.mxu0 %v773
        %794 = vmatprep.subr.bf16.mxu0 0
        %795 = vmatpush1.bf16.msra.mxu0 %v774
        %796 = vmatprep.subr.bf16.mxu0 0
        %797 = vmatpush1.bf16.msra.mxu0 %v775
        %798 = vmatprep.subr.bf16.mxu0 0
        %799 = vmatpush1.bf16.msra.mxu0 %v776
        %800 = vmatprep.subr.bf16.mxu0 0
        %801 = vmatpush1.bf16.msra.mxu0 %v777
        %802 = vmatprep.subr.bf16.mxu0 0
        %803 = vmatpush1.bf16.msra.mxu0 0
        %804 = vmatprep.subr.bf16.mxu0 0
        %805 = vmatpush1.bf16.msra.mxu0 0
        %806 = vmatprep.subr.bf16.mxu0 0
        %807 = vmatpush1.bf16.msra.mxu0 0
        %808 = vmatprep.subr.bf16.mxu0 0
        %809 = vmatpush1.bf16.msra.mxu0 0
        %810 = vmatprep.subr.bf16.mxu0 0
        %811 = vmatpush1.bf16.msra.mxu0 0
        %812 = vmatprep.subr.bf16.mxu0 0
        %813 = vmatpush1.bf16.msra.mxu0 0
        %814 = vmatprep.subr.bf16.mxu0 0
        %815 = vmatpush1.bf16.msra.mxu0 0
        %816 = vmatprep.subr.bf16.mxu0 0
        %817 = vmatpush1.bf16.msra.mxu0 0
        %818 = vmatprep.mubr.bf16.mxu0 0
        %819 = vmatmul.mubr.bf16.gmra.mrb[0].mxu0 %v714
        %v820 = vpop.f32.mrb[0].mxu0
        %v821 = vadd.f32 %v736, %v820
        %v822 = vpop.f32.mrb[0].mxu0
        %v823 = vpop.f32.mrb[0].mxu0
        %v824 = vadd.f32 %v736, %v823
        %v825 = vpop.f32.mrb[0].mxu0
        %826 = vdwg.mxu0
        %v827 = vld [vmem:[#allocation4] sm:$0xff]
        %v828 = vld [vmem:[#allocation4 + $0x8] sm:$0xff]
        %v829 = vadd.f32 %v827, %v821
        %v830 = vadd.f32 %v828, %v824
        %vm831 = vcmp.ge.f32.partialorder %v829, 1.0
        %vm832 = vcmp.ge.f32.partialorder %v830, 1.0
        %v833 = vsel %vm831, 0.0, %v829
        %v834 = vsel %vm832, 0.0, %v830
        %835 = vst [vmem:[#allocation4] sm:$0xff] %v833
        %836 = vst [vmem:[#allocation4 + $0x8] sm:$0xff] %v834
        %v837 = vsel %vm831, 1, 0
        %v838 = vsel %vm832, 1, 0
        %v839 = vcvt.s32.f32 %v837
        %v840 = vcvt.s32.f32 %v838
        %v841 = vpack.c.bf16 %v840, %v839
        %v843 = vunpack.c.l.b16 %v841
        %v844 = vunpack.c.h.b16 %v841
        %v845 = vpack.c.b16 %v843, %v843
        %v846 = vpack.c.b16 %v844, %v844
        %849 = vst [vmem:[%s420] sm:$0xf] %v845
        %850 = vst [vmem:[%s420 + $0x4] sm:$0xf] %v846
        %s851 = smul.u32 2, %s21
        %p852 = scmp.lt.s32.totalorder %s22, 3
        %s853 = scalar_select %p852, %s22, 3
        %p854 = scmp.lt.s32.totalorder %s851, 3
        %s855 = scalar_select %p854, %s851, 3
        %s856 = smul.addr %s853, 4
        %s857 = sadd.s32 %s855, %s856
        %s858 = smul.addr %s857, 4
        %s859 = scalar_lea.vmem %s6, %s858
        // Predicated region
        $region90: #{spiking_convmixer_forward.5} parent=80 // pred_check
          %p860 = pneg %p187
        $region91: #{spiking_convmixer_forward.5} parent=80 // pred_check_branch
          %862 = sbr.rel (%p860) target = $region93
        $region92: #{spiking_convmixer_forward.5} parent=80 // pred_region
          %s863 = smul.u32 2, %s21
        $region93: #{spiking_convmixer_forward.5} parent=80 // pred_fallthru
          _
      $region81: #{spiking_convmixer_forward.5} parent=5 // pred_fallthru
        _
      %p864 = scmp.le.s32.totalorder 2, %s12
      // Predicated region
      $region94: #{spiking_convmixer_forward.5} parent=5 // pred_check
        %p865 = pneg %p864
      $region95: #{spiking_convmixer_forward.5} parent=5 // pred_check_branch
        %867 = sbr.rel (%p865) target = $region97
      $region96: #{spiking_convmixer_forward.5} parent=5 // pred_region
        %s868 = ssub.s32 %s12, 2
        // Predicated region
        $region98: #{spiking_convmixer_forward.5} parent=96 // pred_check
          %p869 = pneg %p193
        $region99: #{spiking_convmixer_forward.5} parent=96 // pred_check_branch
          %871 = sbr.rel (%p869) target = $region101
        $region100: #{spiking_convmixer_forward.5} parent=96 // pred_region
          %s872 = smul.u32 2, %s23
          %p873 = scmp.lt.s32.totalorder %s24, 3
          %s874 = scalar_select %p873, %s24, 3
          %p875 = scmp.lt.s32.totalorder %s872, 3
          %s876 = scalar_select %p875, %s872, 3
          %s877 = smul.addr %s874, 4
          %s878 = sadd.s32 %s876, %s877
          %s879 = smul.addr %s878, 4
          %s880 = scalar_lea.vmem %s6, %s879
        $region101: #{spiking_convmixer_forward.5} parent=96 // pred_fallthru
          _
      $region97: #{spiking_convmixer_forward.5} parent=5 // pred_fallthru
        _
    $region6: #{spiking_convmixer_forward.5} parent=1 // loop_footer
      %s16 = sadd.s32 1, %s12
    $region7: #{spiking_convmixer_forward.5} parent=1 // loop_footer_branch
      %11 = sbr.rel target = $region3
    $region8: #{spiking_convmixer_forward.5} parent=1 // loop_exit
      _

</llo_original>
